<compile_context>
chip_gen: v5e
topology: v5e:2x2
jax: 0.10.0
libtpu: 0.0.40
codegen_flags: <defaults>
</compile_context>

<pallas_src>
import functools

import jax
import jax.numpy as jnp
from jax.experimental import pallas as pl
from jax.experimental.pallas import tpu as pltpu


def _round_up(x, m):
    return (x + m - 1) // m * m


def _pick_tile(num_nodes):
    """512 tiles per mem-bound pipeline sweet spot; fall back so the row grid
    keeps >= 2 blocks on small graphs (v7x megacore sharding)."""
    for t in (512, 256, 128):
        if _round_up(num_nodes, t) // t >= 2:
            return t
    return 128


def _vmem_cap_bytes():
    try:
        kind = jax.devices()[0].device_kind.lower()
    except Exception:
        kind = ""
    return (64 << 20) if "v7" in kind else (128 << 20)


def _vmem_limit_bytes(n_pad, f_in, f_out, p_dim, tm, tk):
    """Explicit VMEM budget: Â tile (double-buffered) + resident X/W/Wp +
    output tile + f32 accumulator, with headroom, capped under physical VMEM."""
    need = (
        2 * tm * tk * 2                      # Â block, bf16, 2 buffers
        + 2 * n_pad * f_in * 2               # resident X, bf16 (assume 2 bufs)
        + 2 * f_in * f_out * 2               # resident W, bf16
        + 2 * f_out * 4                      # bias, f32
        + 2 * f_out * p_dim * 2              # resident projection W, bf16
        + 2 * tm * max(f_out, p_dim) * 4     # output block, 2 buffers
        + tm * f_out * 4                     # f32 accumulator scratch
    )
    need = int(need * 1.25) + (4 << 20)      # compiler scratch headroom
    cap = _vmem_cap_bytes() - (8 << 20)
    # TODO(synk): if `need` ever exceeds `cap` (very large graphs), fall back
    # to a streamed (tk, f_in) X BlockSpec instead of the resident operand.
    return max(32 << 20, min(need, cap))


# ----------------------------------------------------------------------------
# Pallas kernels (fused GCN layer:  H = relu(Â @ (X @ W) + b))
# ----------------------------------------------------------------------------
def gcn_layer_kernel(a_ref, x_ref, w_ref, b_ref, o_ref, acc_ref):
    """Per grid step (i, k):
         xw   = X[k*tk : (k+1)*tk, :] @ W          (resident X, resident W)
         acc += Â[i, k] @ xw
       last k:  o[i] = relu(acc + b)
    """
    k = pl.program_id(1)
    tk = a_ref.shape[1]

    @pl.when(k == 0)
    def _():
        acc_ref[...] = jnp.zeros_like(acc_ref)

    start = pl.multiple_of(k * tk, tk)
    xw = jnp.dot(
        x_ref[pl.ds(start, tk), :], w_ref[...],
        preferred_element_type=jnp.float32,
    ).astype(a_ref.dtype)
    acc_ref[...] += jnp.dot(a_ref[...], xw, preferred_element_type=jnp.float32)

    @pl.when(k == pl.num_programs(1) - 1)
    def _():
        o_ref[...] = jnp.maximum(acc_ref[...] + b_ref[...], 0.0).astype(o_ref.dtype)


def gcn_last_layer_kernel(a_ref, x_ref, w_ref, b_ref, wp_ref, o_ref, acc_ref):
    """Last GCN layer with the bias-free projection head (+ReLU, per
    Projection_Head.forward) and F.normalize(dim=1) fused in the epilogue."""
    k = pl.program_id(1)
    tk = a_ref.shape[1]

    @pl.when(k == 0)
    def _():
        acc_ref[...] = jnp.zeros_like(acc_ref)

    start = pl.multiple_of(k * tk, tk)
    xw = jnp.dot(
        x_ref[pl.ds(start, tk), :], w_ref[...],
        preferred_element_type=jnp.float32,
    ).astype(a_ref.dtype)
    acc_ref[...] += jnp.dot(a_ref[...], xw, preferred_element_type=jnp.float32)

    @pl.when(k == pl.num_programs(1) - 1)
    def _():
        h = jnp.maximum(acc_ref[...] + b_ref[...], 0.0)
        # Projection_Head(type='Linear'): nn.Linear(hid, proj, dropout=0)
        # binds 0 to the positional `bias` arg -> bias-free linear, then ReLU.
        p = jnp.maximum(
            jnp.dot(h.astype(wp_ref.dtype), wp_ref[...],
                    preferred_element_type=jnp.float32),
            0.0,
        )
        # F.normalize(dim=1, eps=1e-12):  x / max(||x||, 1e-12)
        sumsq = jnp.sum(p * p, axis=1, keepdims=True)
        inv = jax.lax.rsqrt(jnp.maximum(sumsq, 1e-24))
        o_ref[...] = (p * inv).astype(o_ref.dtype)


# ----------------------------------------------------------------------------
# pallas_call wrappers
# ----------------------------------------------------------------------------
def gcn_layer(a_hat, x, w, b, tm, tk, vmem_limit):
    n_pad = a_hat.shape[0]
    f_in = x.shape[1]
    f_out = w.shape[1]
    return pl.pallas_call(
        gcn_layer_kernel,
        out_shape=jax.ShapeDtypeStruct((n_pad, f_out), jnp.bfloat16),
        grid=(n_pad // tm, n_pad // tk),
        in_specs=[
            pl.BlockSpec((tm, tk), lambda i, k: (i, k)),        # Â streamed
            pl.BlockSpec((n_pad, f_in), lambda i, k: (0, 0)),   # X resident
            pl.BlockSpec((f_in, f_out), lambda i, k: (0, 0)),   # W resident
            pl.BlockSpec((1, f_out), lambda i, k: (0, 0)),      # bias
        ],
        out_specs=pl.BlockSpec((tm, f_out), lambda i, k: (i, 0)),
        scratch_shapes=[pltpu.VMEM((tm, f_out), jnp.float32)],
        compiler_params=pltpu.CompilerParams(
            dimension_semantics=("parallel", "arbitrary"),
            vmem_limit_bytes=vmem_limit,
        ),
    )(a_hat, x, w, b)


def gcn_last_layer(a_hat, x, w, b, w_proj, tm, tk, vmem_limit):
    n_pad = a_hat.shape[0]
    f_in = x.shape[1]
    f_out = w.shape[1]
    p_dim = w_proj.shape[1]
    return pl.pallas_call(
        gcn_last_layer_kernel,
        out_shape=jax.ShapeDtypeStruct((n_pad, p_dim), jnp.float32),
        grid=(n_pad // tm, n_pad // tk),
        in_specs=[
            pl.BlockSpec((tm, tk), lambda i, k: (i, k)),        # Â streamed
            pl.BlockSpec((n_pad, f_in), lambda i, k: (0, 0)),   # X resident
            pl.BlockSpec((f_in, f_out), lambda i, k: (0, 0)),   # W resident
            pl.BlockSpec((1, f_out), lambda i, k: (0, 0)),      # bias
            pl.BlockSpec((f_out, p_dim), lambda i, k: (0, 0)),  # proj W resident
        ],
        out_specs=pl.BlockSpec((tm, p_dim), lambda i, k: (i, 0)),
        scratch_shapes=[pltpu.VMEM((tm, f_out), jnp.float32)],
        compiler_params=pltpu.CompilerParams(
            dimension_semantics=("parallel", "arbitrary"),
            vmem_limit_bytes=vmem_limit,
        ),
    )(a_hat, x, w, b, w_proj)


# ----------------------------------------------------------------------------
# JAX glue: symmetric-normalized adjacency with self-loops (PyG gcn_norm),
# zero-padded to (n_pad, n_pad) and cast to bf16 for the MXU.
# Built ONCE outside the jitted forward (graph is static across layers/steps).
# ----------------------------------------------------------------------------
def build_norm_adj(edge_index, num_nodes, n_pad):
    src, dst = edge_index[0], edge_index[1]
    loop = jnp.arange(num_nodes, dtype=src.dtype)
    src = jnp.concatenate([src, loop])
    dst = jnp.concatenate([dst, loop])
    deg = jnp.zeros((num_nodes,), jnp.float32).at[dst].add(1.0)
    dinv = jnp.where(deg > 0, jax.lax.rsqrt(deg), 0.0)
    vals = dinv[dst] * dinv[src]
    a_hat = jnp.zeros((n_pad, n_pad), jnp.float32).at[dst, src].add(vals)
    return a_hat.astype(jnp.bfloat16)


# ----------------------------------------------------------------------------
# Parameters (lane-padded, bf16 weights / f32 biases)
# ----------------------------------------------------------------------------
class SupCGParams:
    def __init__(self, key, in_dim, hid_dim, proj_hid_dim, proj_dim, num_layers):
        del proj_hid_dim  # type='Linear' head does not use it
        dims = [in_dim] + [2 * hid_dim] * (num_layers - 1) + [hid_dim]
        pdims = [_round_up(d, 128) for d in dims]
        proj_pad = _round_up(proj_dim, 128)
        keys = jax.random.split(key, num_layers + 1)
        self.conv_w = []
        self.conv_b = []
        for i in range(num_layers):
            fan_in, fan_out = dims[i], dims[i + 1]
            scale = jnp.sqrt(6.0 / (fan_in + fan_out))
            w = jax.random.uniform(
                keys[i], (fan_in, fan_out), jnp.float32, -scale, scale
            )
            w = jnp.pad(w, ((0, pdims[i] - fan_in), (0, pdims[i + 1] - fan_out)))
            self.conv_w.append(w.astype(jnp.bfloat16))
            self.conv_b.append(jnp.zeros((1, pdims[i + 1]), jnp.float32))
        # Projection_Head type='Linear': nn.Linear(hid_dim, proj_dim, dropout=0)
        # -> third positional arg is `bias`, so the head is bias-free.
        scale = jnp.sqrt(6.0 / (hid_dim + proj_dim))
        wp = jax.random.uniform(
            keys[-1], (hid_dim, proj_dim), jnp.float32, -scale, scale
        )
        wp = jnp.pad(wp, ((0, pdims[-1] - hid_dim), (0, proj_pad - proj_dim)))
        self.proj_w = wp.astype(jnp.bfloat16)


# ----------------------------------------------------------------------------
# SupCG forward (single-view path: only edge_index1 provided, GCN2=False)
# Dropout is identity (dropout=0 / eval mode).
# ----------------------------------------------------------------------------
@functools.partial(jax.jit, static_argnums=(3, 4, 5))
def supcg_forward(x, a_hat, params_flat, num_layers, proj_dim, tile):
    conv_w = params_flat[:num_layers]
    conv_b = params_flat[num_layers: 2 * num_layers]
    proj_w = params_flat[-1]

    num_nodes, in_dim = x.shape
    n_pad = a_hat.shape[0]
    in_pad = conv_w[0].shape[0]
    tm = tk = tile

    f_in_max = max(w.shape[0] for w in conv_w)
    f_out_max = max(w.shape[1] for w in conv_w)
    vmem_limit = _vmem_limit_bytes(
        n_pad, f_in_max, f_out_max, proj_w.shape[1], tm, tk
    )

    h = jnp.pad(x, ((0, n_pad - num_nodes), (0, in_pad - in_dim))).astype(jnp.bfloat16)

    out = None
    for li in range(num_layers):
        if li < num_layers - 1:
            h = gcn_layer(a_hat, h, conv_w[li], conv_b[li], tm, tk, vmem_limit)
        else:
            out = gcn_last_layer(
                a_hat, h, conv_w[li], conv_b[li], proj_w, tm, tk, vmem_limit
            )
    return out[:num_nodes, :proj_dim]


# ----------------------------------------------------------------------------
if __name__ == "__main__":
    # small shapes consistent with the module
    N = 300          # nodes (padded to a tile multiple internally)
    IN_DIM = 16
    HID_DIM = 8      # encoder hidden (intermediate layers use 2*hid = 16)
    PROJ_HID = 16    # unused for type='Linear'
    PROJ_DIM = 8
    NUM_LAYERS = 3
    N_EXTRA = 64     # extra chord edges

    key = jax.random.PRNGKey(0)
    kx, kp, ke = jax.random.split(key, 3)

    x = jax.random.normal(kx, (N, IN_DIM), jnp.float32)

    # deterministic graph: ring + a few random chords (directed edge list [2, E])
    ring_src = jnp.arange(N, dtype=jnp.int32)
    ring_dst = (ring_src + 1) % N
    extra_src = jax.random.randint(ke, (N_EXTRA,), 0, N, jnp.int32)
    extra_dst = (extra_src + 17) % N
    edge_index = jnp.stack(
        [jnp.concatenate([ring_src, extra_src]),
         jnp.concatenate([ring_dst, extra_dst])]
    )

    params = SupCGParams(kp, IN_DIM, HID_DIM, PROJ_HID, PROJ_DIM, NUM_LAYERS)
    params_flat = tuple(params.conv_w) + tuple(params.conv_b) + (params.proj_w,)

    tile = _pick_tile(N)
    n_pad = _round_up(N, tile)

    # Â is static across layers and training steps: build & cache it once,
    # outside the jitted per-call forward.
    a_hat = jax.block_until_ready(build_norm_adj(edge_index, N, n_pad))

    out = supcg_forward(x, a_hat, params_flat, NUM_LAYERS, PROJ_DIM, tile)
    out = jax.block_until_ready(out)

    assert out.shape == (N, PROJ_DIM)
    # rows with nonzero activation must be unit-norm
    norms = jnp.linalg.norm(out, axis=1)
    assert bool(jnp.all((norms < 1e-5) | (jnp.abs(norms - 1.0) < 1e-3)))

    print("KERNEL_OK")
</pallas_src>

<mosaic_0001>
module attributes {stable_mosaic.version = 11 : i64} {
  func.func @gcn_layer_kernel(%arg0: i32, %arg1: i32, %arg2: memref<256x256xbf16, #tpu.memory_space<vmem>>, %arg3: memref<512x128xbf16, #tpu.memory_space<vmem>>, %arg4: memref<128x128xbf16, #tpu.memory_space<vmem>>, %arg5: memref<1x128xf32, #tpu.memory_space<vmem>>, %arg6: memref<256x128xbf16, #tpu.memory_space<vmem>>, %arg7: memref<256x128xf32, #tpu.memory_space<vmem>>) attributes {dimension_semantics = [#tpu.dimension_semantics<parallel>, #tpu.dimension_semantics<arbitrary>], iteration_bounds = array<i64: 2, 2>, scalar_prefetch = 0 : i64, scratch_operands = 1 : i64, tpu.core_type = #tpu.core_type<tc>, window_params = [{transform_indices = @transform_0, window_bounds = array<i64: 256, 256>}, {pipeline_mode = #tpu.pipeline_mode<synchronous>, transform_indices = @transform_1, window_bounds = array<i64: 512, 128>}, {pipeline_mode = #tpu.pipeline_mode<synchronous>, transform_indices = @transform_2, window_bounds = array<i64: 128, 128>}, {pipeline_mode = #tpu.pipeline_mode<synchronous>, transform_indices = @transform_3, window_bounds = array<i64: 1, 128>}, {transform_indices = @transform_4, window_bounds = array<i64: 256, 128>}]} {
    %c0_i32 = arith.constant 0 : i32
    %0 = arith.cmpi eq, %arg1, %c0_i32 : i32
    %1 = arith.extui %0 : i1 to i32
    %c0_i32_0 = arith.constant 0 : i32
    %2 = arith.cmpi ne, %1, %c0_i32_0 : i32
    scf.if %2 {
      %cst_11 = arith.constant 0.000000e+00 : f32
      %18 = vector.broadcast %cst_11 : f32 to vector<256x128xf32>
      %c0_12 = arith.constant 0 : index
      %c0_13 = arith.constant 0 : index
      %19 = vector.load %arg7[%c0_12, %c0_13] : memref<256x128xf32, #tpu.memory_space<vmem>>, vector<256x128xf32>
      tpu.vector_store %arg7[%c0_12, %c0_13], %18 {strides = array<i32>} : memref<256x128xf32, #tpu.memory_space<vmem>>, vector<256x128xf32>,
    } else {
    }
    %c256_i32 = arith.constant 256 : i32
    %3 = arith.muli %arg1, %c256_i32 : i32
    %4 = tpu.assume_multiple %3, 256 : i32
    %5 = arith.index_cast %4 : i32 to index
    %c0 = arith.constant 0 : index
    %6 = vector.load %arg3[%5, %c0] : memref<512x128xbf16, #tpu.memory_space<vmem>>, vector<256x128xbf16>
    %c0_1 = arith.constant 0 : index
    %c0_2 = arith.constant 0 : index
    %7 = vector.load %arg4[%c0_1, %c0_2] : memref<128x128xbf16, #tpu.memory_space<vmem>>, vector<128x128xbf16>
    %cst = arith.constant dense<0.000000e+00> : vector<256x128xf32>
    %8 = tpu.matmul %6, %7, %cst {dimension_numbers = #tpu.dot_dimension_numbers<[1], [0], [0], [1], [0, 0, 1, 1], [], []>} : vector<256x128xbf16>, vector<128x128xbf16>, vector<256x128xf32> -> vector<256x128xf32>
    %9 = arith.truncf %8 : vector<256x128xf32> to vector<256x128xbf16>
    %c0_3 = arith.constant 0 : index
    %c0_4 = arith.constant 0 : index
    %10 = vector.load %arg7[%c0_3, %c0_4] : memref<256x128xf32, #tpu.memory_space<vmem>>, vector<256x128xf32>
    %c0_5 = arith.constant 0 : index
    %c0_6 = arith.constant 0 : index
    %11 = vector.load %arg2[%c0_5, %c0_6] : memref<256x256xbf16, #tpu.memory_space<vmem>>, vector<256x256xbf16>
    %cst_7 = arith.constant dense<0.000000e+00> : vector<256x128xf32>
    %12 = tpu.matmul %11, %9, %cst_7 {dimension_numbers = #tpu.dot_dimension_numbers<[1], [0], [0], [1], [0, 0, 1, 1], [], []>} : vector<256x256xbf16>, vector<256x128xbf16>, vector<256x128xf32> -> vector<256x128xf32>
    %13 = arith.addf %10, %12 : vector<256x128xf32>
    %c0_8 = arith.constant 0 : index
    %c0_9 = arith.constant 0 : index
    %14 = vector.load %arg7[%c0_8, %c0_9] : memref<256x128xf32, #tpu.memory_space<vmem>>, vector<256x128xf32>
    tpu.vector_store %arg7[%c0_8, %c0_9], %13 {strides = array<i32>} : memref<256x128xf32, #tpu.memory_space<vmem>>, vector<256x128xf32>,
    %c1_i32 = arith.constant 1 : i32
    %15 = arith.cmpi eq, %arg1, %c1_i32 : i32
    %16 = arith.extui %15 : i1 to i32
    %c0_i32_10 = arith.constant 0 : i32
    %17 = arith.cmpi ne, %16, %c0_i32_10 : i32
    scf.if %17 {
      %c0_11 = arith.constant 0 : index
      %c0_12 = arith.constant 0 : index
      %18 = vector.load %arg7[%c0_11, %c0_12] : memref<256x128xf32, #tpu.memory_space<vmem>>, vector<256x128xf32>
      %c0_13 = arith.constant 0 : index
      %c0_14 = arith.constant 0 : index
      %19 = vector.load %arg5[%c0_13, %c0_14] : memref<1x128xf32, #tpu.memory_space<vmem>>, vector<1x128xf32>
      %20 = vector.broadcast %19 : vector<1x128xf32> to vector<256x128xf32>
      %21 = arith.addf %18, %20 : vector<256x128xf32>
      %cst_15 = arith.constant 0.000000e+00 : f32
      %22 = vector.broadcast %cst_15 : f32 to vector<256x128xf32>
      %23 = arith.maximumf %21, %22 : vector<256x128xf32>
      %24 = arith.truncf %23 : vector<256x128xf32> to vector<256x128xbf16>
      %c0_16 = arith.constant 0 : index
      %c0_17 = arith.constant 0 : index
      %25 = vector.load %arg6[%c0_16, %c0_17] : memref<256x128xbf16, #tpu.memory_space<vmem>>, vector<256x128xbf16>
      tpu.vector_store %arg6[%c0_16, %c0_17], %24 {strides = array<i32>} : memref<256x128xbf16, #tpu.memory_space<vmem>>, vector<256x128xbf16>,
    } else {
    }
    return
  }
  func.func @transform_0(%arg0: i32, %arg1: i32) -> (i32, i32) {
    %c0_i32 = arith.constant 0 : i32
    return %arg0, %arg1 : i32, i32
  }
  func.func @transform_1(%arg0: i32, %arg1: i32) -> (i32, i32) {
    %c0_i32 = arith.constant 0 : i32
    %c0_i32_0 = arith.constant 0 : i32
    %c0_i32_1 = arith.constant 0 : i32
    return %c0_i32, %c0_i32_0 : i32, i32
  }
  func.func @transform_2(%arg0: i32, %arg1: i32) -> (i32, i32) {
    %c0_i32 = arith.constant 0 : i32
    %c0_i32_0 = arith.constant 0 : i32
    %c0_i32_1 = arith.constant 0 : i32
    return %c0_i32, %c0_i32_0 : i32, i32
  }
  func.func @transform_3(%arg0: i32, %arg1: i32) -> (i32, i32) {
    %c0_i32 = arith.constant 0 : i32
    %c0_i32_0 = arith.constant 0 : i32
    %c0_i32_1 = arith.constant 0 : i32
    return %c0_i32, %c0_i32_0 : i32, i32
  }
  func.func @transform_4(%arg0: i32, %arg1: i32) -> (i32, i32) {
    %c0_i32 = arith.constant 0 : i32
    %c0_i32_0 = arith.constant 0 : i32
    return %arg0, %c0_i32 : i32, i32
  }
}

module attributes {stable_mosaic.version = 11 : i64} {
  func.func @gcn_last_layer_kernel(%arg0: i32, %arg1: i32, %arg2: memref<256x256xbf16, #tpu.memory_space<vmem>>, %arg3: memref<512x128xbf16, #tpu.memory_space<vmem>>, %arg4: memref<128x128xbf16, #tpu.memory_space<vmem>>, %arg5: memref<1x128xf32, #tpu.memory_space<vmem>>, %arg6: memref<128x128xbf16, #tpu.memory_space<vmem>>, %arg7: memref<256x128xf32, #tpu.memory_space<vmem>>, %arg8: memref<256x128xf32, #tpu.memory_space<vmem>>) attributes {dimension_semantics = [#tpu.dimension_semantics<parallel>, #tpu.dimension_semantics<arbitrary>], iteration_bounds = array<i64: 2, 2>, scalar_prefetch = 0 : i64, scratch_operands = 1 : i64, tpu.core_type = #tpu.core_type<tc>, window_params = [{transform_indices = @transform_0, window_bounds = array<i64: 256, 256>}, {pipeline_mode = #tpu.pipeline_mode<synchronous>, transform_indices = @transform_1, window_bounds = array<i64: 512, 128>}, {pipeline_mode = #tpu.pipeline_mode<synchronous>, transform_indices = @transform_2, window_bounds = array<i64: 128, 128>}, {pipeline_mode = #tpu.pipeline_mode<synchronous>, transform_indices = @transform_3, window_bounds = array<i64: 1, 128>}, {pipeline_mode = #tpu.pipeline_mode<synchronous>, transform_indices = @transform_4, window_bounds = array<i64: 128, 128>}, {transform_indices = @transform_5, window_bounds = array<i64: 256, 128>}]} {
    %c0_i32 = arith.constant 0 : i32
    %0 = arith.cmpi eq, %arg1, %c0_i32 : i32
    %1 = arith.extui %0 : i1 to i32
    %c0_i32_0 = arith.constant 0 : i32
    %2 = arith.cmpi ne, %1, %c0_i32_0 : i32
    scf.if %2 {
      %cst_11 = arith.constant 0.000000e+00 : f32
      %18 = vector.broadcast %cst_11 : f32 to vector<256x128xf32>
      %c0_12 = arith.constant 0 : index
      %c0_13 = arith.constant 0 : index
      %19 = vector.load %arg8[%c0_12, %c0_13] : memref<256x128xf32, #tpu.memory_space<vmem>>, vector<256x128xf32>
      tpu.vector_store %arg8[%c0_12, %c0_13], %18 {strides = array<i32>} : memref<256x128xf32, #tpu.memory_space<vmem>>, vector<256x128xf32>,
    } else {
    }
    %c256_i32 = arith.constant 256 : i32
    %3 = arith.muli %arg1, %c256_i32 : i32
    %4 = tpu.assume_multiple %3, 256 : i32
    %5 = arith.index_cast %4 : i32 to index
    %c0 = arith.constant 0 : index
    %6 = vector.load %arg3[%5, %c0] : memref<512x128xbf16, #tpu.memory_space<vmem>>, vector<256x128xbf16>
    %c0_1 = arith.constant 0 : index
    %c0_2 = arith.constant 0 : index
    %7 = vector.load %arg4[%c0_1, %c0_2] : memref<128x128xbf16, #tpu.memory_space<vmem>>, vector<128x128xbf16>
    %cst = arith.constant dense<0.000000e+00> : vector<256x128xf32>
    %8 = tpu.matmul %6, %7, %cst {dimension_numbers = #tpu.dot_dimension_numbers<[1], [0], [0], [1], [0, 0, 1, 1], [], []>} : vector<256x128xbf16>, vector<128x128xbf16>, vector<256x128xf32> -> vector<256x128xf32>
    %9 = arith.truncf %8 : vector<256x128xf32> to vector<256x128xbf16>
    %c0_3 = arith.constant 0 : index
    %c0_4 = arith.constant 0 : index
    %10 = vector.load %arg8[%c0_3, %c0_4] : memref<256x128xf32, #tpu.memory_space<vmem>>, vector<256x128xf32>
    %c0_5 = arith.constant 0 : index
    %c0_6 = arith.constant 0 : index
    %11 = vector.load %arg2[%c0_5, %c0_6] : memref<256x256xbf16, #tpu.memory_space<vmem>>, vector<256x256xbf16>
    %cst_7 = arith.constant dense<0.000000e+00> : vector<256x128xf32>
    %12 = tpu.matmul %11, %9, %cst_7 {dimension_numbers = #tpu.dot_dimension_numbers<[1], [0], [0], [1], [0, 0, 1, 1], [], []>} : vector<256x256xbf16>, vector<256x128xbf16>, vector<256x128xf32> -> vector<256x128xf32>
    %13 = arith.addf %10, %12 : vector<256x128xf32>
    %c0_8 = arith.constant 0 : index
    %c0_9 = arith.constant 0 : index
    %14 = vector.load %arg8[%c0_8, %c0_9] : memref<256x128xf32, #tpu.memory_space<vmem>>, vector<256x128xf32>
    tpu.vector_store %arg8[%c0_8, %c0_9], %13 {strides = array<i32>} : memref<256x128xf32, #tpu.memory_space<vmem>>, vector<256x128xf32>,
    %c1_i32 = arith.constant 1 : i32
    %15 = arith.cmpi eq, %arg1, %c1_i32 : i32
    %16 = arith.extui %15 : i1 to i32
    %c0_i32_10 = arith.constant 0 : i32
    %17 = arith.cmpi ne, %16, %c0_i32_10 : i32
    scf.if %17 {
      %c0_11 = arith.constant 0 : index
      %c0_12 = arith.constant 0 : index
      %18 = vector.load %arg8[%c0_11, %c0_12] : memref<256x128xf32, #tpu.memory_space<vmem>>, vector<256x128xf32>
      %c0_13 = arith.constant 0 : index
      %c0_14 = arith.constant 0 : index
      %19 = vector.load %arg5[%c0_13, %c0_14] : memref<1x128xf32, #tpu.memory_space<vmem>>, vector<1x128xf32>
      %20 = vector.broadcast %19 : vector<1x128xf32> to vector<256x128xf32>
      %21 = arith.addf %18, %20 : vector<256x128xf32>
      %cst_15 = arith.constant 0.000000e+00 : f32
      %22 = vector.broadcast %cst_15 : f32 to vector<256x128xf32>
      %23 = arith.maximumf %21, %22 : vector<256x128xf32>
      %24 = arith.truncf %23 : vector<256x128xf32> to vector<256x128xbf16>
      %c0_16 = arith.constant 0 : index
      %c0_17 = arith.constant 0 : index
      %25 = vector.load %arg6[%c0_16, %c0_17] : memref<128x128xbf16, #tpu.memory_space<vmem>>, vector<128x128xbf16>
      %cst_18 = arith.constant dense<0.000000e+00> : vector<256x128xf32>
      %26 = tpu.matmul %24, %25, %cst_18 {dimension_numbers = #tpu.dot_dimension_numbers<[1], [0], [0], [1], [0, 0, 1, 1], [], []>} : vector<256x128xbf16>, vector<128x128xbf16>, vector<256x128xf32> -> vector<256x128xf32>
      %cst_19 = arith.constant 0.000000e+00 : f32
      %27 = vector.broadcast %cst_19 : f32 to vector<256x128xf32>
      %28 = arith.maximumf %26, %27 : vector<256x128xf32>
      %29 = arith.mulf %28, %28 : vector<256x128xf32>
      %cst_20 = arith.constant dense<0.000000e+00> : vector<256xf32>
      %30 = vector.multi_reduction <add>, %29, %cst_20 [1] : vector<256x128xf32> to vector<256xf32>
      %31 = vector.shape_cast %30 : vector<256xf32> to vector<256x1xf32>
      %cst_21 = arith.constant 1.000000e-24 : f32
      %32 = vector.broadcast %cst_21 : f32 to vector<256x1xf32>
      %33 = arith.maximumf %31, %32 : vector<256x1xf32>
      %34 = math.rsqrt %33 : vector<256x1xf32>
      %35 = vector.broadcast %34 : vector<256x1xf32> to vector<256x128xf32>
      %36 = arith.mulf %28, %35 : vector<256x128xf32>
      %c0_22 = arith.constant 0 : index
      %c0_23 = arith.constant 0 : index
      %37 = vector.load %arg7[%c0_22, %c0_23] : memref<256x128xf32, #tpu.memory_space<vmem>>, vector<256x128xf32>
      tpu.vector_store %arg7[%c0_22, %c0_23], %36 {strides = array<i32>} : memref<256x128xf32, #tpu.memory_space<vmem>>, vector<256x128xf32>,
    } else {
    }
    return
  }
  func.func @transform_0(%arg0: i32, %arg1: i32) -> (i32, i32) {
    %c0_i32 = arith.constant 0 : i32
    return %arg0, %arg1 : i32, i32
  }
  func.func @transform_1(%arg0: i32, %arg1: i32) -> (i32, i32) {
    %c0_i32 = arith.constant 0 : i32
    %c0_i32_0 = arith.constant 0 : i32
    %c0_i32_1 = arith.constant 0 : i32
    return %c0_i32, %c0_i32_0 : i32, i32
  }
  func.func @transform_2(%arg0: i32, %arg1: i32) -> (i32, i32) {
    %c0_i32 = arith.constant 0 : i32
    %c0_i32_0 = arith.constant 0 : i32
    %c0_i32_1 = arith.constant 0 : i32
    return %c0_i32, %c0_i32_0 : i32, i32
  }
  func.func @transform_3(%arg0: i32, %arg1: i32) -> (i32, i32) {
    %c0_i32 = arith.constant 0 : i32
    %c0_i32_0 = arith.constant 0 : i32
    %c0_i32_1 = arith.constant 0 : i32
    return %c0_i32, %c0_i32_0 : i32, i32
  }
  func.func @transform_4(%arg0: i32, %arg1: i32) -> (i32, i32) {
    %c0_i32 = arith.constant 0 : i32
    %c0_i32_0 = arith.constant 0 : i32
    %c0_i32_1 = arith.constant 0 : i32
    return %c0_i32, %c0_i32_0 : i32, i32
  }
  func.func @transform_5(%arg0: i32, %arg1: i32) -> (i32, i32) {
    %c0_i32 = arith.constant 0 : i32
    %c0_i32_0 = arith.constant 0 : i32
    return %arg0, %c0_i32 : i32, i32
  }
}

</mosaic_0001>

<llo_original>
// kernel: supcg_forward.3
$region0: #{supcg_forward.3}
  #allocation0 [shape = 'u32[]', space=smem, size = 0x4, offset = 0x4, fixed_abs, tag = 'smem constant byte address 0x4 - core index']
  #allocation1 [shape = 'u32[72,128]{1,0:T(1,128)}', space=vmem, size = 0x9000, scoped, tag = 'internal scratch']
  #allocation2 [shape = 'f32[256,128]{1,0:T(8,128)}', space=vmem, size = 0x20000, scoped, tag = 'scratch operand']
  %s0 = inlined_call_operand.hbm [shape: bf16[512,512], index: 0, kind: input, shape index: {}]
  %s1 = inlined_call_operand.vmem [shape: bf16[512,128], index: 1, kind: input, shape index: {}]
  %s2 = inlined_call_operand.vmem [shape: bf16[128,128], index: 2, kind: input, shape index: {}]
  %s3 = inlined_call_operand.vmem [shape: f32[1,128], index: 3, kind: input, shape index: {}]
  %s4 = inlined_call_operand.vmem [shape: bf16[512,128], index: 4, kind: output, shape index: {}]
  %s5 = sld [smem:[#allocation0]]
  $region61: #{supcg_forward.3} parent=0
    _
  %s7 = ssub.s32 1, %s5
  %s8 = scalar_select 0, %s7, %s5
  $region1: #{supcg_forward.3} parent=0
    #allocation3 [shape = 'u8[262144]{0}', space=vmem, size = 0x40000, scoped, tag = 'input window, operand 0']
    #allocation4 [shape = 's32[2]{0}', space=sflag, size = 0x8, scoped, tag = 'scoped memory for supcg_forward.3']
    %9 = vsyncpa [#allocation4], 0
    %s10 = scalar_lea.sflag [#allocation4], 1
    %11 = vsyncpa %s10, 0
    loop: start=0, step=1, limit=6
    $region2: #{supcg_forward.3} parent=1 // loop_pre_header
      _
    $region3: #{supcg_forward.3} parent=1 // loop_header
      %s13 = sphi 0, %s17
      %p14 = scmp.ge.s32.totalorder %s13, 6
      %s20 = sphi 0, %s32
      %s21 = sphi 0, %s28
      %s22 = sphi 0, %s20
      %s23 = sphi 0, %s21
      %s24 = sphi 0, %s22
      %s25 = sphi 0, %s23
      %s37 = sphi 0, %s39
      %s40 = sphi 0, %s37
      %s41 = sphi 0, %s40
      %s57 = sphi 0, %s41
      %s61 = sphi 0, %s61
      %s63 = sphi 0, %s61
      %s64 = sphi 0, %s63
      %s78 = sphi 0, %s64
      %s82 = sphi 0, %s82
      %s84 = sphi 0, %s82
      %s85 = sphi 0, %s84
      %s99 = sphi 0, %s85
      %s103 = sphi 0, %s103
      %s105 = sphi 0, %s103
      %s106 = sphi 0, %s105
      %s120 = sphi 0, %s106
      %s126 = sphi 0, %s128
      %s129 = sphi 0, %s126
      %s130 = sphi 0, %s129
      %s146 = sphi 0, %s130
    $region4: #{supcg_forward.3} parent=1 // loop_header_branch
      %16 = sbr.rel (%p14) target = $region8
    $region5: #{supcg_forward.3} parent=1 // loop_body
      %s18 = ssub.s32 %s13, 1
      %s19 = ssub.s32 %s13, 2
      %s26 = sadd.s32 1, %s21
      %p27 = scmp.ge.s32.totalorder %s26, 2
      %s28 = scalar_select %p27, 0, %s26
      %s29 = sadd.s32 1, %s20
      %s30 = scalar_select %p27, %s29, %s20
      %p31 = scmp.ge.s32.totalorder %s30, 2
      %s32 = scalar_select %p31, 0, %s30
      %s33 = ssub.s32 %s20, %s32
      %s34 = ssub.s32 %s21, %s28
      %s35 = sor.u32 %s33, %s34
      %p36 = scmp.eq.s32.totalorder %s35, 0
      %s38 = sadd.s32 %s37, 1
      %s39 = scalar_select %p36, %s37, %s38
      %p42 = pneg %p36
      %p43 = scmp.eq.s32.totalorder %s13, 3
      %p44 = por %p42, %p43
      %p45 = scmp.ne.s32.totalorder %s37, %s40
      %p46 = scmp.eq.s32.totalorder %s13, 0
      %p47 = por %p45, %p46
      %p48 = scmp.ne.s32.totalorder %s37, %s40
      %p49 = scmp.eq.s32.totalorder %s18, 3
      %p50 = por %p48, %p49
      %p51 = scmp.ne.s32.totalorder %s40, %s41
      %p52 = scmp.eq.s32.totalorder %s18, 0
      %p53 = por %p51, %p52
      %p54 = scmp.ne.s32.totalorder %s40, %s41
      %p55 = scmp.eq.s32.totalorder %s19, 3
      %p56 = por %p54, %p55
      %p58 = scmp.ne.s32.totalorder %s41, %s57
      %p59 = scmp.eq.s32.totalorder %s19, 0
      %p60 = por %p58, %p59
      %s62 = sadd.s32 %s61, 1
      %p65 = scmp.eq.s32.totalorder %s13, 3
      %p66 = scmp.ne.s32.totalorder %s61, %s63
      %p67 = scmp.eq.s32.totalorder %s13, 0
      %p68 = por %p66, %p67
      %p69 = scmp.ne.s32.totalorder %s61, %s63
      %p70 = scmp.eq.s32.totalorder %s18, 3
      %p71 = por %p69, %p70
      %p72 = scmp.ne.s32.totalorder %s63, %s64
      %p73 = scmp.eq.s32.totalorder %s18, 0
      %p74 = por %p72, %p73
      %p75 = scmp.ne.s32.totalorder %s63, %s64
      %p76 = scmp.eq.s32.totalorder %s19, 3
      %p77 = por %p75, %p76
      %p79 = scmp.ne.s32.totalorder %s64, %s78
      %p80 = scmp.eq.s32.totalorder %s19, 0
      %p81 = por %p79, %p80
      %s83 = sadd.s32 %s82, 1
      %p86 = scmp.eq.s32.totalorder %s13, 3
      %p87 = scmp.ne.s32.totalorder %s82, %s84
      %p88 = scmp.eq.s32.totalorder %s13, 0
      %p89 = por %p87, %p88
      %p90 = scmp.ne.s32.totalorder %s82, %s84
      %p91 = scmp.eq.s32.totalorder %s18, 3
      %p92 = por %p90, %p91
      %p93 = scmp.ne.s32.totalorder %s84, %s85
      %p94 = scmp.eq.s32.totalorder %s18, 0
      %p95 = por %p93, %p94
      %p96 = scmp.ne.s32.totalorder %s84, %s85
      %p97 = scmp.eq.s32.totalorder %s19, 3
      %p98 = por %p96, %p97
      %p100 = scmp.ne.s32.totalorder %s85, %s99
      %p101 = scmp.eq.s32.totalorder %s19, 0
      %p102 = por %p100, %p101
      %s104 = sadd.s32 %s103, 1
      %p107 = scmp.eq.s32.totalorder %s13, 3
      %p108 = scmp.ne.s32.totalorder %s103, %s105
      %p109 = scmp.eq.s32.totalorder %s13, 0
      %p110 = por %p108, %p109
      %p111 = scmp.ne.s32.totalorder %s103, %s105
      %p112 = scmp.eq.s32.totalorder %s18, 3
      %p113 = por %p111, %p112
      %p114 = scmp.ne.s32.totalorder %s105, %s106
      %p115 = scmp.eq.s32.totalorder %s18, 0
      %p116 = por %p114, %p115
      %p117 = scmp.ne.s32.totalorder %s105, %s106
      %p118 = scmp.eq.s32.totalorder %s19, 3
      %p119 = por %p117, %p118
      %p121 = scmp.ne.s32.totalorder %s106, %s120
      %p122 = scmp.eq.s32.totalorder %s19, 0
      %p123 = por %p121, %p122
      %s124 = ssub.s32 %s20, %s32
      %p125 = scmp.eq.s32.totalorder %s124, 0
      %s127 = sadd.s32 %s126, 1
      %s128 = scalar_select %p125, %s126, %s127
      %p131 = pneg %p125
      %p132 = scmp.eq.s32.totalorder %s13, 3
      %p133 = por %p131, %p132
      %p134 = scmp.ne.s32.totalorder %s126, %s129
      %p135 = scmp.eq.s32.totalorder %s13, 0
      %p136 = por %p134, %p135
      %p137 = scmp.ne.s32.totalorder %s126, %s129
      %p138 = scmp.eq.s32.totalorder %s18, 3
      %p139 = por %p137, %p138
      %p140 = scmp.ne.s32.totalorder %s129, %s130
      %p141 = scmp.eq.s32.totalorder %s18, 0
      %p142 = por %p140, %p141
      %p143 = scmp.ne.s32.totalorder %s129, %s130
      %p144 = scmp.eq.s32.totalorder %s19, 3
      %p145 = por %p143, %p144
      %p147 = scmp.ne.s32.totalorder %s130, %s146
      %p148 = scmp.eq.s32.totalorder %s19, 0
      %p149 = por %p147, %p148
      %p150 = scmp.le.s32.totalorder 1, %s13
      %p151 = scmp.lt.s32.totalorder %s13, 5
      %p152 = pnand %p150, %p151
      %p153 = pneg %p152
      // Predicated region
      $region9: #{supcg_forward.3} parent=5 // pred_check
        _
      $region10: #{supcg_forward.3} parent=5 // pred_check_branch
        %155 = sbr.rel (%p152) target = $region12
      $region11: #{supcg_forward.3} parent=5 // pred_region
        %s156 = ssub.s32 %s13, 1
        // Predicated region
        $region13: #{supcg_forward.3} parent=11 // pred_check
          %p157 = pneg %p74
        $region14: #{supcg_forward.3} parent=11 // pred_check_branch
          %159 = sbr.rel (%p157) target = $region16
        $region15: #{supcg_forward.3} parent=11 // pred_region
          _
        $region16: #{supcg_forward.3} parent=11 // pred_fallthru
          _
        // Predicated region
        $region17: #{supcg_forward.3} parent=11 // pred_check
          %p160 = pneg %p95
        $region18: #{supcg_forward.3} parent=11 // pred_check_branch
          %162 = sbr.rel (%p160) target = $region20
        $region19: #{supcg_forward.3} parent=11 // pred_region
          _
        $region20: #{supcg_forward.3} parent=11 // pred_fallthru
          _
        // Predicated region
        $region21: #{supcg_forward.3} parent=11 // pred_check
          %p163 = pneg %p116
        $region22: #{supcg_forward.3} parent=11 // pred_check_branch
          %165 = sbr.rel (%p163) target = $region24
        $region23: #{supcg_forward.3} parent=11 // pred_region
          _
        $region24: #{supcg_forward.3} parent=11 // pred_fallthru
          _
      $region12: #{supcg_forward.3} parent=5 // pred_fallthru
        _
      %p166 = scmp.lt.s32.totalorder %s13, 4
      // Predicated region
      $region25: #{supcg_forward.3} parent=5 // pred_check
        %p167 = pneg %p166
      $region26: #{supcg_forward.3} parent=5 // pred_check_branch
        %169 = sbr.rel (%p167) target = $region28
      $region27: #{supcg_forward.3} parent=5 // pred_region
        // Predicated region
        $region29: #{supcg_forward.3} parent=27 // pred_check
          %p170 = pneg %p47
        $region30: #{supcg_forward.3} parent=27 // pred_check_branch
          %172 = sbr.rel (%p170) target = $region32
        $region31: #{supcg_forward.3} parent=27 // pred_region
          %s173 = sand.u32 %s37, 1
          %s174 = scalar_lea.sflag [#allocation4], %s173
          %s175 = sand.u32 %s37, 1
          %s176 = smul.addr %s175, 256
          %s177 = scalar_lea.vmem [#allocation3], %s176
          %s178 = smul.u32 32, %s20
          %s179 = smul.u32 2, %s21
          %181 = vsyncadd %s174, 0
          %s182 = smul.addr %s178, 4
          %s183 = sadd.s32 %s179, %s182
          %s184 = smul.addr %s183, 4
          %s185 = scalar_lea.hbm %s0, %s184
          %s186 = sshll.u32 %s185, 4
          %s187 = int_to_ptr.hbm [resolvable:$true] %s186
          %s188 = sshll.u32 %s177, 4
          %s189 = int_to_ptr.vmem [resolvable:$true] %s188
          %194 = dma.hbm_to_vmem [thread:$0]  %s187, 4096, %s189, %s174, 256, 128, 8
        $region32: #{supcg_forward.3} parent=27 // pred_fallthru
          _
      $region28: #{supcg_forward.3} parent=5 // pred_fallthru
        _
      %p195 = scmp.le.s32.totalorder 1, %s13
      %p196 = scmp.lt.s32.totalorder %s13, 5
      %p197 = pnand %p195, %p196
      %p198 = pneg %p197
      // Predicated region
      $region33: #{supcg_forward.3} parent=5 // pred_check
        _
      $region34: #{supcg_forward.3} parent=5 // pred_check_branch
        %200 = sbr.rel (%p197) target = $region36
      $region35: #{supcg_forward.3} parent=5 // pred_region
        %s201 = ssub.s32 %s13, 1
        %s202 = sand.u32 %s40, 1
        %s203 = scalar_lea.sflag [#allocation4], %s202
        %s204 = sand.u32 %s40, 1
        %s205 = smul.addr %s204, 256
        %s206 = scalar_lea.vmem [#allocation3], %s205
        // Predicated region
        $region37: #{supcg_forward.3} parent=35 // pred_check
          %p207 = pneg %p53
        $region38: #{supcg_forward.3} parent=35 // pred_check_branch
          %209 = sbr.rel (%p207) target = $region40
        $region39: #{supcg_forward.3} parent=35 // pred_region
          %211 = dma.done %s203, 4096
        $region40: #{supcg_forward.3} parent=35 // pred_fallthru
          _
        %s212 = sand.u32 %s40, 1
        %s213 = scalar_lea.sflag [#allocation4], %s212
        %s214 = sand.u32 %s40, 1
        %s215 = smul.addr %s214, 256
        %s216 = scalar_lea.vmem [#allocation3], %s215
        %p217 = pneg %p53
        %p218 = pneg %p50
        %p219 = pneg %p74
        %p220 = pneg %p71
        %p221 = pneg %p95
        %p222 = pneg %p92
        %p223 = pneg %p116
        %p224 = pneg %p113
        %p225 = pneg %p142
        %p226 = pneg %p139
        %s227 = smul.u32 32, %s22
        %p228 = scmp.lt.s32.totalorder %s227, 63
        %s229 = scalar_select %p228, %s227, 63
        %s230 = smul.addr %s229, 4
        %s231 = scalar_lea.vmem %s4, %s230
        %s232 = smul.u32 32, %s22
        %s233 = smul.u32 2, %s23
        %s234 = smul.u32 32, %s22
        %p235 = scmp.lt.s32.totalorder %s234, 63
        %s236 = scalar_select %p235, %s234, 63
        %s237 = smul.addr %s236, 4
        %s238 = scalar_lea.vmem %s4, %s237
        %s239 = smul.u32 32, %s22
        %p240 = scmp.eq.s32.totalorder %s23, 0
        // Predicated region
        $region41: #{supcg_forward.3} parent=35 // pred_check
          %p241 = pneg %p240
        $region42: #{supcg_forward.3} parent=35 // pred_check_branch
          %243 = sbr.rel (%p241) target = $region44
        $region43: #{supcg_forward.3} parent=35 // pred_region
          %244 = vst [vmem:[#allocation2] sm:$0xff] 0.0
          %245 = vst [vmem:[#allocation2 + $0x8] sm:$0xff] 0.0
          %246 = vst [vmem:[#allocation2 + $0x10] sm:$0xff] 0.0
          %247 = vst [vmem:[#allocation2 + $0x18] sm:$0xff] 0.0
          %248 = vst [vmem:[#allocation2 + $0x20] sm:$0xff] 0.0
          %249 = vst [vmem:[#allocation2 + $0x28] sm:$0xff] 0.0
          %250 = vst [vmem:[#allocation2 + $0x30] sm:$0xff] 0.0
          %251 = vst [vmem:[#allocation2 + $0x38] sm:$0xff] 0.0
          %252 = vst [vmem:[#allocation2 + $0x40] sm:$0xff] 0.0
          %253 = vst [vmem:[#allocation2 + $0x48] sm:$0xff] 0.0
          %254 = vst [vmem:[#allocation2 + $0x50] sm:$0xff] 0.0
          %255 = vst [vmem:[#allocation2 + $0x58] sm:$0xff] 0.0
          %256 = vst [vmem:[#allocation2 + $0x60] sm:$0xff] 0.0
          %257 = vst [vmem:[#allocation2 + $0x68] sm:$0xff] 0.0
          %258 = vst [vmem:[#allocation2 + $0x70] sm:$0xff] 0.0
          %259 = vst [vmem:[#allocation2 + $0x78] sm:$0xff] 0.0
          %260 = vst [vmem:[#allocation2 + $0x80] sm:$0xff] 0.0
          %261 = vst [vmem:[#allocation2 + $0x88] sm:$0xff] 0.0
          %262 = vst [vmem:[#allocation2 + $0x90] sm:$0xff] 0.0
          %263 = vst [vmem:[#allocation2 + $0x98] sm:$0xff] 0.0
          %264 = vst [vmem:[#allocation2 + $0xa0] sm:$0xff] 0.0
          %265 = vst [vmem:[#allocation2 + $0xa8] sm:$0xff] 0.0
          %266 = vst [vmem:[#allocation2 + $0xb0] sm:$0xff] 0.0
          %267 = vst [vmem:[#allocation2 + $0xb8] sm:$0xff] 0.0
          %268 = vst [vmem:[#allocation2 + $0xc0] sm:$0xff] 0.0
          %269 = vst [vmem:[#allocation2 + $0xc8] sm:$0xff] 0.0
          %270 = vst [vmem:[#allocation2 + $0xd0] sm:$0xff] 0.0
          %271 = vst [vmem:[#allocation2 + $0xd8] sm:$0xff] 0.0
          %272 = vst [vmem:[#allocation2 + $0xe0] sm:$0xff] 0.0
          %273 = vst [vmem:[#allocation2 + $0xe8] sm:$0xff] 0.0
          %274 = vst [vmem:[#allocation2 + $0xf0] sm:$0xff] 0.0
          %275 = vst [vmem:[#allocation2 + $0xf8] sm:$0xff] 0.0
        $region44: #{supcg_forward.3} parent=35 // pred_fallthru
          _
        %s276 = smul.u32 %s23, 256
        %s277 = sshra.s32 %s276, 3
        %s278 = sand.u32 %s276, 7
        %s279 = smul.addr %s277, 4
        %s280 = scalar_lea.vmem %s1, %s279
        %v281 = vld [vmem:[%s280] sm:$0xf]
        %v282 = vld [vmem:[%s280 + $0x4] sm:$0xf]
        %v283 = vld [vmem:[%s280 + $0x8] sm:$0xf]
        %v284 = vld [vmem:[%s280 + $0xc] sm:$0xf]
        %v285 = vld [vmem:[%s280 + $0x10] sm:$0xf]
        %v286 = vld [vmem:[%s280 + $0x14] sm:$0xf]
        %v287 = vld [vmem:[%s280 + $0x18] sm:$0xf]
        %v288 = vld [vmem:[%s280 + $0x1c] sm:$0xf]
        %v289 = vld [vmem:[%s280 + $0x20] sm:$0xf]
        %v290 = vld [vmem:[%s280 + $0x24] sm:$0xf]
        %v291 = vld [vmem:[%s280 + $0x28] sm:$0xf]
        %v292 = vld [vmem:[%s280 + $0x2c] sm:$0xf]
        %v293 = vld [vmem:[%s280 + $0x30] sm:$0xf]
        %v294 = vld [vmem:[%s280 + $0x34] sm:$0xf]
        %v295 = vld [vmem:[%s280 + $0x38] sm:$0xf]
        %v296 = vld [vmem:[%s280 + $0x3c] sm:$0xf]
        %v297 = vld [vmem:[%s280 + $0x40] sm:$0xf]
        %v298 = vld [vmem:[%s280 + $0x44] sm:$0xf]
        %v299 = vld [vmem:[%s280 + $0x48] sm:$0xf]
        %v300 = vld [vmem:[%s280 + $0x4c] sm:$0xf]
        %v301 = vld [vmem:[%s280 + $0x50] sm:$0xf]
        %v302 = vld [vmem:[%s280 + $0x54] sm:$0xf]
        %v303 = vld [vmem:[%s280 + $0x58] sm:$0xf]
        %v304 = vld [vmem:[%s280 + $0x5c] sm:$0xf]
        %v305 = vld [vmem:[%s280 + $0x60] sm:$0xf]
        %v306 = vld [vmem:[%s280 + $0x64] sm:$0xf]
        %v307 = vld [vmem:[%s280 + $0x68] sm:$0xf]
        %v308 = vld [vmem:[%s280 + $0x6c] sm:$0xf]
        %v309 = vld [vmem:[%s280 + $0x70] sm:$0xf]
        %v310 = vld [vmem:[%s280 + $0x74] sm:$0xf]
        %v311 = vld [vmem:[%s280 + $0x78] sm:$0xf]
        %v312 = vld [vmem:[%s280 + $0x7c] sm:$0xf]
        %v313 = vld [vmem:[%s2] sm:$0xf]
        %v314 = vld [vmem:[%s2 + $0x4] sm:$0xf]
        %v315 = vld [vmem:[%s2 + $0x8] sm:$0xf]
        %v316 = vld [vmem:[%s2 + $0xc] sm:$0xf]
        %v317 = vld [vmem:[%s2 + $0x10] sm:$0xf]
        %v318 = vld [vmem:[%s2 + $0x14] sm:$0xf]
        %v319 = vld [vmem:[%s2 + $0x18] sm:$0xf]
        %v320 = vld [vmem:[%s2 + $0x1c] sm:$0xf]
        %v321 = vld [vmem:[%s2 + $0x20] sm:$0xf]
        %v322 = vld [vmem:[%s2 + $0x24] sm:$0xf]
        %v323 = vld [vmem:[%s2 + $0x28] sm:$0xf]
        %v324 = vld [vmem:[%s2 + $0x2c] sm:$0xf]
        %v325 = vld [vmem:[%s2 + $0x30] sm:$0xf]
        %v326 = vld [vmem:[%s2 + $0x34] sm:$0xf]
        %v327 = vld [vmem:[%s2 + $0x38] sm:$0xf]
        %v328 = vld [vmem:[%s2 + $0x3c] sm:$0xf]
        %v361 = vunpack.c.l.b16 %v281
        %v362 = vunpack.c.l.b16 %v282
        %v363 = vunpack.c.l.b16 %v283
        %v364 = vunpack.c.l.b16 %v284
        %v365 = vunpack.c.l.b16 %v285
        %v366 = vunpack.c.l.b16 %v286
        %v367 = vunpack.c.l.b16 %v287
        %v368 = vunpack.c.l.b16 %v288
        %v369 = vunpack.c.l.b16 %v289
        %v370 = vunpack.c.l.b16 %v290
        %v371 = vunpack.c.l.b16 %v291
        %v372 = vunpack.c.l.b16 %v292
        %v373 = vunpack.c.l.b16 %v293
        %v374 = vunpack.c.l.b16 %v294
        %v375 = vunpack.c.l.b16 %v295
        %v376 = vunpack.c.l.b16 %v296
        %v377 = vunpack.c.l.b16 %v297
        %v378 = vunpack.c.l.b16 %v298
        %v379 = vunpack.c.l.b16 %v299
        %v380 = vunpack.c.l.b16 %v300
        %v381 = vunpack.c.l.b16 %v301
        %v382 = vunpack.c.l.b16 %v302
        %v383 = vunpack.c.l.b16 %v303
        %v384 = vunpack.c.l.b16 %v304
        %v385 = vunpack.c.l.b16 %v305
        %v386 = vunpack.c.l.b16 %v306
        %v387 = vunpack.c.l.b16 %v307
        %v388 = vunpack.c.l.b16 %v308
        %v389 = vunpack.c.l.b16 %v309
        %v390 = vunpack.c.l.b16 %v310
        %v391 = vunpack.c.l.b16 %v311
        %v392 = vunpack.c.l.b16 %v312
        %v393 = vpack.c.b16 %v362, %v361
        %v394 = vpack.c.b16 %v364, %v363
        %v395 = vpack.c.b16 %v366, %v365
        %v396 = vpack.c.b16 %v368, %v367
        %v397 = vpack.c.b16 %v370, %v369
        %v398 = vpack.c.b16 %v372, %v371
        %v399 = vpack.c.b16 %v374, %v373
        %v400 = vpack.c.b16 %v376, %v375
        %v401 = vpack.c.b16 %v378, %v377
        %v402 = vpack.c.b16 %v380, %v379
        %v403 = vpack.c.b16 %v382, %v381
        %v404 = vpack.c.b16 %v384, %v383
        %v405 = vpack.c.b16 %v386, %v385
        %v406 = vpack.c.b16 %v388, %v387
        %v407 = vpack.c.b16 %v390, %v389
        %v408 = vpack.c.b16 %v392, %v391
        %v441 = vunpack.c.l.b16 %v313
        %v442 = vunpack.c.l.b16 %v314
        %v443 = vunpack.c.l.b16 %v315
        %v444 = vunpack.c.l.b16 %v316
        %v445 = vunpack.c.l.b16 %v317
        %v446 = vunpack.c.l.b16 %v318
        %v447 = vunpack.c.l.b16 %v319
        %v448 = vunpack.c.l.b16 %v320
        %v449 = vunpack.c.l.b16 %v321
        %v450 = vunpack.c.l.b16 %v322
        %v451 = vunpack.c.l.b16 %v323
        %v452 = vunpack.c.l.b16 %v324
        %v453 = vunpack.c.l.b16 %v325
        %v454 = vunpack.c.l.b16 %v326
        %v455 = vunpack.c.l.b16 %v327
        %v456 = vunpack.c.l.b16 %v328
        %v457 = vpack.c.b16 %v442, %v441
        %v458 = vpack.c.b16 %v444, %v443
        %v459 = vpack.c.b16 %v446, %v445
        %v460 = vpack.c.b16 %v448, %v447
        %v461 = vpack.c.b16 %v450, %v449
        %v462 = vpack.c.b16 %v452, %v451
        %v463 = vpack.c.b16 %v454, %v453
        %v464 = vpack.c.b16 %v456, %v455
        %473 = vmatpush.bf16.msra.mxu0 %v464
        %474 = vmatpush.bf16.msra.mxu0 %v463
        %475 = vmatpush.bf16.msra.mxu0 %v462
        %476 = vmatpush.bf16.msra.mxu0 %v461
        %477 = vmatpush.bf16.msra.mxu0 %v460
        %478 = vmatpush.bf16.msra.mxu0 %v459
        %479 = vmatpush.bf16.msra.mxu0 %v458
        %480 = vmatpush.bf16.msra.mxu0 %v457
        %481 = vmatmul.bf16.gmra.mxu0 %v393
        %v482 = vpop.f32.mrf.mxu0
        %v483 = vadd.f32 0.0, %v482
        %v484 = vpop.f32.mrf.mxu0
        %v485 = vadd.f32 0.0, %v484
        %486 = vmatmul.bf16.gmra.mxu0 %v394
        %v487 = vpop.f32.mrf.mxu0
        %v488 = vadd.f32 0.0, %v487
        %v489 = vpop.f32.mrf.mxu0
        %v490 = vadd.f32 0.0, %v489
        %491 = vmatmul.bf16.gmra.mxu0 %v395
        %v492 = vpop.f32.mrf.mxu0
        %v493 = vadd.f32 0.0, %v492
        %v494 = vpop.f32.mrf.mxu0
        %v495 = vadd.f32 0.0, %v494
        %496 = vmatmul.bf16.gmra.mxu0 %v396
        %v497 = vpop.f32.mrf.mxu0
        %v498 = vadd.f32 0.0, %v497
        %v499 = vpop.f32.mrf.mxu0
        %v500 = vadd.f32 0.0, %v499
        %501 = vmatmul.bf16.gmra.mxu0 %v397
        %v502 = vpop.f32.mrf.mxu0
        %v503 = vadd.f32 0.0, %v502
        %v504 = vpop.f32.mrf.mxu0
        %v505 = vadd.f32 0.0, %v504
        %506 = vmatmul.bf16.gmra.mxu0 %v398
        %v507 = vpop.f32.mrf.mxu0
        %v508 = vadd.f32 0.0, %v507
        %v509 = vpop.f32.mrf.mxu0
        %v510 = vadd.f32 0.0, %v509
        %511 = vmatmul.bf16.gmra.mxu0 %v399
        %v512 = vpop.f32.mrf.mxu0
        %v513 = vadd.f32 0.0, %v512
        %v514 = vpop.f32.mrf.mxu0
        %v515 = vadd.f32 0.0, %v514
        %516 = vmatmul.bf16.gmra.mxu0 %v400
        %v517 = vpop.f32.mrf.mxu0
        %v518 = vadd.f32 0.0, %v517
        %v519 = vpop.f32.mrf.mxu0
        %v520 = vadd.f32 0.0, %v519
        %521 = vmatmul.bf16.gmra.mxu0 %v401
        %v522 = vpop.f32.mrf.mxu0
        %v523 = vadd.f32 0.0, %v522
        %v524 = vpop.f32.mrf.mxu0
        %v525 = vadd.f32 0.0, %v524
        %526 = vmatmul.bf16.gmra.mxu0 %v402
        %v527 = vpop.f32.mrf.mxu0
        %v528 = vadd.f32 0.0, %v527
        %v529 = vpop.f32.mrf.mxu0
        %v530 = vadd.f32 0.0, %v529
        %531 = vmatmul.bf16.gmra.mxu0 %v403
        %v532 = vpop.f32.mrf.mxu0
        %v533 = vadd.f32 0.0, %v532
        %v534 = vpop.f32.mrf.mxu0
        %v535 = vadd.f32 0.0, %v534
        %536 = vmatmul.bf16.gmra.mxu0 %v404
        %v537 = vpop.f32.mrf.mxu0
        %v538 = vadd.f32 0.0, %v537
        %v539 = vpop.f32.mrf.mxu0
        %v540 = vadd.f32 0.0, %v539
        %541 = vmatmul.bf16.gmra.mxu0 %v405
        %v542 = vpop.f32.mrf.mxu0
        %v543 = vadd.f32 0.0, %v542
        %v544 = vpop.f32.mrf.mxu0
        %v545 = vadd.f32 0.0, %v544
        %546 = vmatmul.bf16.gmra.mxu0 %v406
        %v547 = vpop.f32.mrf.mxu0
        %v548 = vadd.f32 0.0, %v547
        %v549 = vpop.f32.mrf.mxu0
        %v550 = vadd.f32 0.0, %v549
        %551 = vmatmul.bf16.gmra.mxu0 %v407
        %v552 = vpop.f32.mrf.mxu0
        %v553 = vadd.f32 0.0, %v552
        %v554 = vpop.f32.mrf.mxu0
        %v555 = vadd.f32 0.0, %v554
        %556 = vmatmul.bf16.gmra.mxu0 %v408
        %v557 = vpop.f32.mrf.mxu0
        %v558 = vadd.f32 0.0, %v557
        %v559 = vpop.f32.mrf.mxu0
        %v560 = vadd.f32 0.0, %v559
        %561 = vdwg.mxu0
        %v562 = vpack.c.bf16 %v485, %v483
        %v563 = vpack.c.bf16 %v490, %v488
        %v564 = vpack.c.bf16 %v495, %v493
        %v565 = vpack.c.bf16 %v500, %v498
        %v566 = vpack.c.bf16 %v505, %v503
        %v567 = vpack.c.bf16 %v510, %v508
        %v568 = vpack.c.bf16 %v515, %v513
        %v569 = vpack.c.bf16 %v520, %v518
        %v570 = vpack.c.bf16 %v525, %v523
        %v571 = vpack.c.bf16 %v530, %v528
        %v572 = vpack.c.bf16 %v535, %v533
        %v573 = vpack.c.bf16 %v540, %v538
        %v574 = vpack.c.bf16 %v545, %v543
        %v575 = vpack.c.bf16 %v550, %v548
        %v576 = vpack.c.bf16 %v555, %v553
        %v577 = vpack.c.bf16 %v560, %v558
        %v578 = vld [vmem:[#allocation2] sm:$0xff]
        %v579 = vld [vmem:[#allocation2 + $0x8] sm:$0xff]
        %v580 = vld [vmem:[#allocation2 + $0x10] sm:$0xff]
        %v581 = vld [vmem:[#allocation2 + $0x18] sm:$0xff]
        %v582 = vld [vmem:[#allocation2 + $0x20] sm:$0xff]
        %v583 = vld [vmem:[#allocation2 + $0x28] sm:$0xff]
        %v584 = vld [vmem:[#allocation2 + $0x30] sm:$0xff]
        %v585 = vld [vmem:[#allocation2 + $0x38] sm:$0xff]
        %v586 = vld [vmem:[#allocation2 + $0x40] sm:$0xff]
        %v587 = vld [vmem:[#allocation2 + $0x48] sm:$0xff]
        %v588 = vld [vmem:[#allocation2 + $0x50] sm:$0xff]
        %v589 = vld [vmem:[#allocation2 + $0x58] sm:$0xff]
        %v590 = vld [vmem:[#allocation2 + $0x60] sm:$0xff]
        %v591 = vld [vmem:[#allocation2 + $0x68] sm:$0xff]
        %v592 = vld [vmem:[#allocation2 + $0x70] sm:$0xff]
        %v593 = vld [vmem:[#allocation2 + $0x78] sm:$0xff]
        %v594 = vld [vmem:[#allocation2 + $0x80] sm:$0xff]
        %v595 = vld [vmem:[#allocation2 + $0x88] sm:$0xff]
        %v596 = vld [vmem:[#allocation2 + $0x90] sm:$0xff]
        %v597 = vld [vmem:[#allocation2 + $0x98] sm:$0xff]
        %v598 = vld [vmem:[#allocation2 + $0xa0] sm:$0xff]
        %v599 = vld [vmem:[#allocation2 + $0xa8] sm:$0xff]
        %v600 = vld [vmem:[#allocation2 + $0xb0] sm:$0xff]
        %v601 = vld [vmem:[#allocation2 + $0xb8] sm:$0xff]
        %v602 = vld [vmem:[#allocation2 + $0xc0] sm:$0xff]
        %v603 = vld [vmem:[#allocation2 + $0xc8] sm:$0xff]
        %v604 = vld [vmem:[#allocation2 + $0xd0] sm:$0xff]
        %v605 = vld [vmem:[#allocation2 + $0xd8] sm:$0xff]
        %v606 = vld [vmem:[#allocation2 + $0xe0] sm:$0xff]
        %v607 = vld [vmem:[#allocation2 + $0xe8] sm:$0xff]
        %v608 = vld [vmem:[#allocation2 + $0xf0] sm:$0xff]
        %v609 = vld [vmem:[#allocation2 + $0xf8] sm:$0xff]
        %v610 = vld [vmem:[%s206] sm:$0xff]
        %v611 = vld [vmem:[%s206 + $0x8] sm:$0xff]
        %v612 = vld [vmem:[%s206 + $0x10] sm:$0xff]
        %v613 = vld [vmem:[%s206 + $0x18] sm:$0xff]
        %v614 = vld [vmem:[%s206 + $0x20] sm:$0xff]
        %v615 = vld [vmem:[%s206 + $0x28] sm:$0xff]
        %v616 = vld [vmem:[%s206 + $0x30] sm:$0xff]
        %v617 = vld [vmem:[%s206 + $0x38] sm:$0xff]
        %v618 = vld [vmem:[%s206 + $0x40] sm:$0xff]
        %v619 = vld [vmem:[%s206 + $0x48] sm:$0xff]
        %v620 = vld [vmem:[%s206 + $0x50] sm:$0xff]
        %v621 = vld [vmem:[%s206 + $0x58] sm:$0xff]
        %v622 = vld [vmem:[%s206 + $0x60] sm:$0xff]
        %v623 = vld [vmem:[%s206 + $0x68] sm:$0xff]
        %v624 = vld [vmem:[%s206 + $0x70] sm:$0xff]
        %v625 = vld [vmem:[%s206 + $0x78] sm:$0xff]
        %v626 = vld [vmem:[%s206 + $0x80] sm:$0xff]
        %v627 = vld [vmem:[%s206 + $0x88] sm:$0xff]
        %v628 = vld [vmem:[%s206 + $0x90] sm:$0xff]
        %v629 = vld [vmem:[%s206 + $0x98] sm:$0xff]
        %v630 = vld [vmem:[%s206 + $0xa0] sm:$0xff]
        %v631 = vld [vmem:[%s206 + $0xa8] sm:$0xff]
        %v632 = vld [vmem:[%s206 + $0xb0] sm:$0xff]
        %v633 = vld [vmem:[%s206 + $0xb8] sm:$0xff]
        %v634 = vld [vmem:[%s206 + $0xc0] sm:$0xff]
        %v635 = vld [vmem:[%s206 + $0xc8] sm:$0xff]
        %v636 = vld [vmem:[%s206 + $0xd0] sm:$0xff]
        %v637 = vld [vmem:[%s206 + $0xd8] sm:$0xff]
        %v638 = vld [vmem:[%s206 + $0xe0] sm:$0xff]
        %v639 = vld [vmem:[%s206 + $0xe8] sm:$0xff]
        %v640 = vld [vmem:[%s206 + $0xf0] sm:$0xff]
        %v641 = vld [vmem:[%s206 + $0xf8] sm:$0xff]
        %v674 = vunpack.c.l.b16 %v610
        %v675 = vunpack.c.h.b16 %v610
        %v676 = vunpack.c.l.b16 %v611
        %v677 = vunpack.c.h.b16 %v611
        %v678 = vunpack.c.l.b16 %v612
        %v679 = vunpack.c.h.b16 %v612
        %v680 = vunpack.c.l.b16 %v613
        %v681 = vunpack.c.h.b16 %v613
        %v682 = vunpack.c.l.b16 %v614
        %v683 = vunpack.c.h.b16 %v614
        %v684 = vunpack.c.l.b16 %v615
        %v685 = vunpack.c.h.b16 %v615
        %v686 = vunpack.c.l.b16 %v616
        %v687 = vunpack.c.h.b16 %v616
        %v688 = vunpack.c.l.b16 %v617
        %v689 = vunpack.c.h.b16 %v617
        %v690 = vunpack.c.l.b16 %v618
        %v691 = vunpack.c.h.b16 %v618
        %v692 = vunpack.c.l.b16 %v619
        %v693 = vunpack.c.h.b16 %v619
        %v694 = vunpack.c.l.b16 %v620
        %v695 = vunpack.c.h.b16 %v620
        %v696 = vunpack.c.l.b16 %v621
        %v697 = vunpack.c.h.b16 %v621
        %v698 = vunpack.c.l.b16 %v622
        %v699 = vunpack.c.h.b16 %v622
        %v700 = vunpack.c.l.b16 %v623
        %v701 = vunpack.c.h.b16 %v623
        %v702 = vunpack.c.l.b16 %v624
        %v703 = vunpack.c.h.b16 %v624
        %v704 = vunpack.c.l.b16 %v625
        %v705 = vunpack.c.h.b16 %v625
        %v706 = vunpack.c.l.b16 %v626
        %v707 = vunpack.c.h.b16 %v626
        %v708 = vunpack.c.l.b16 %v627
        %v709 = vunpack.c.h.b16 %v627
        %v710 = vunpack.c.l.b16 %v628
        %v711 = vunpack.c.h.b16 %v628
        %v712 = vunpack.c.l.b16 %v629
        %v713 = vunpack.c.h.b16 %v629
        %v714 = vunpack.c.l.b16 %v630
        %v715 = vunpack.c.h.b16 %v630
        %v716 = vunpack.c.l.b16 %v631
        %v717 = vunpack.c.h.b16 %v631
        %v718 = vunpack.c.l.b16 %v632
        %v719 = vunpack.c.h.b16 %v632
        %v720 = vunpack.c.l.b16 %v633
        %v721 = vunpack.c.h.b16 %v633
        %v722 = vunpack.c.l.b16 %v634
        %v723 = vunpack.c.h.b16 %v634
        %v724 = vunpack.c.l.b16 %v635
        %v725 = vunpack.c.h.b16 %v635
        %v726 = vunpack.c.l.b16 %v636
        %v727 = vunpack.c.h.b16 %v636
        %v728 = vunpack.c.l.b16 %v637
        %v729 = vunpack.c.h.b16 %v637
        %v730 = vunpack.c.l.b16 %v638
        %v731 = vunpack.c.h.b16 %v638
        %v732 = vunpack.c.l.b16 %v639
        %v733 = vunpack.c.h.b16 %v639
        %v734 = vunpack.c.l.b16 %v640
        %v735 = vunpack.c.h.b16 %v640
        %v736 = vunpack.c.l.b16 %v641
        %v737 = vunpack.c.h.b16 %v641
        %v738 = vpack.c.b16 %v676, %v674
        %v739 = vpack.c.b16 %v677, %v675
        %v740 = vpack.c.b16 %v680, %v678
        %v741 = vpack.c.b16 %v681, %v679
        %v742 = vpack.c.b16 %v684, %v682
        %v743 = vpack.c.b16 %v685, %v683
        %v744 = vpack.c.b16 %v688, %v686
        %v745 = vpack.c.b16 %v689, %v687
        %v746 = vpack.c.b16 %v692, %v690
        %v747 = vpack.c.b16 %v693, %v691
        %v748 = vpack.c.b16 %v696, %v694
        %v749 = vpack.c.b16 %v697, %v695
        %v750 = vpack.c.b16 %v700, %v698
        %v751 = vpack.c.b16 %v701, %v699
        %v752 = vpack.c.b16 %v704, %v702
        %v753 = vpack.c.b16 %v705, %v703
        %v754 = vpack.c.b16 %v708, %v706
        %v755 = vpack.c.b16 %v709, %v707
        %v756 = vpack.c.b16 %v712, %v710
        %v757 = vpack.c.b16 %v713, %v711
        %v758 = vpack.c.b16 %v716, %v714
        %v759 = vpack.c.b16 %v717, %v715
        %v760 = vpack.c.b16 %v720, %v718
        %v761 = vpack.c.b16 %v721, %v719
        %v762 = vpack.c.b16 %v724, %v722
        %v763 = vpack.c.b16 %v725, %v723
        %v764 = vpack.c.b16 %v728, %v726
        %v765 = vpack.c.b16 %v729, %v727
        %v766 = vpack.c.b16 %v732, %v730
        %v767 = vpack.c.b16 %v733, %v731
        %v768 = vpack.c.b16 %v736, %v734
        %v769 = vpack.c.b16 %v737, %v735
        %802 = vmatpush.bf16.msra.mxu0 %v569
        %803 = vmatpush.bf16.msra.mxu0 %v568
        %804 = vmatpush.bf16.msra.mxu0 %v567
        %805 = vmatpush.bf16.msra.mxu0 %v566
        %806 = vmatpush.bf16.msra.mxu0 %v565
        %807 = vmatpush.bf16.msra.mxu0 %v564
        %808 = vmatpush.bf16.msra.mxu0 %v563
        %809 = vmatpush.bf16.msra.mxu0 %v562
        %810 = vmatmul.bf16.gmra.mxu0 %v738
        %v811 = vpop.f32.mrf.mxu0
        %v812 = vadd.f32 0.0, %v811
        %v813 = vpop.f32.mrf.mxu0
        %v814 = vadd.f32 0.0, %v813
        %815 = vmatmul.bf16.gmra.mxu0 %v740
        %v816 = vpop.f32.mrf.mxu0
        %v817 = vadd.f32 0.0, %v816
        %v818 = vpop.f32.mrf.mxu0
        %v819 = vadd.f32 0.0, %v818
        %820 = vmatmul.bf16.gmra.mxu0 %v742
        %v821 = vpop.f32.mrf.mxu0
        %v822 = vadd.f32 0.0, %v821
        %v823 = vpop.f32.mrf.mxu0
        %v824 = vadd.f32 0.0, %v823
        %825 = vmatmul.bf16.gmra.mxu0 %v744
        %v826 = vpop.f32.mrf.mxu0
        %v827 = vadd.f32 0.0, %v826
        %v828 = vpop.f32.mrf.mxu0
        %v829 = vadd.f32 0.0, %v828
        %830 = vmatmul.bf16.gmra.mxu0 %v746
        %v831 = vpop.f32.mrf.mxu0
        %v832 = vadd.f32 0.0, %v831
        %v833 = vpop.f32.mrf.mxu0
        %v834 = vadd.f32 0.0, %v833
        %835 = vmatmul.bf16.gmra.mxu0 %v748
        %v836 = vpop.f32.mrf.mxu0
        %v837 = vadd.f32 0.0, %v836
        %v838 = vpop.f32.mrf.mxu0
        %v839 = vadd.f32 0.0, %v838
        %840 = vmatmul.bf16.gmra.mxu0 %v750
        %v841 = vpop.f32.mrf.mxu0
        %v842 = vadd.f32 0.0, %v841
        %v843 = vpop.f32.mrf.mxu0
        %v844 = vadd.f32 0.0, %v843
        %845 = vmatmul.bf16.gmra.mxu0 %v752
        %v846 = vpop.f32.mrf.mxu0
        %v847 = vadd.f32 0.0, %v846
        %v848 = vpop.f32.mrf.mxu0
        %v849 = vadd.f32 0.0, %v848
        %850 = vmatmul.bf16.gmra.mxu0 %v754
        %v851 = vpop.f32.mrf.mxu0
        %v852 = vadd.f32 0.0, %v851
        %v853 = vpop.f32.mrf.mxu0
        %v854 = vadd.f32 0.0, %v853
        %855 = vmatmul.bf16.gmra.mxu0 %v756
        %v856 = vpop.f32.mrf.mxu0
        %v857 = vadd.f32 0.0, %v856
        %v858 = vpop.f32.mrf.mxu0
        %v859 = vadd.f32 0.0, %v858
        %860 = vmatmul.bf16.gmra.mxu0 %v758
        %v861 = vpop.f32.mrf.mxu0
        %v862 = vadd.f32 0.0, %v861
        %v863 = vpop.f32.mrf.mxu0
        %v864 = vadd.f32 0.0, %v863
        %865 = vmatmul.bf16.gmra.mxu0 %v760
        %v866 = vpop.f32.mrf.mxu0
        %v867 = vadd.f32 0.0, %v866
        %v868 = vpop.f32.mrf.mxu0
        %v869 = vadd.f32 0.0, %v868
        %870 = vmatmul.bf16.gmra.mxu0 %v762
        %v871 = vpop.f32.mrf.mxu0
        %v872 = vadd.f32 0.0, %v871
        %v873 = vpop.f32.mrf.mxu0
        %v874 = vadd.f32 0.0, %v873
        %875 = vmatmul.bf16.gmra.mxu0 %v764
        %v876 = vpop.f32.mrf.mxu0
        %v877 = vadd.f32 0.0, %v876
        %v878 = vpop.f32.mrf.mxu0
        %v879 = vadd.f32 0.0, %v878
        %880 = vmatmul.bf16.gmra.mxu0 %v766
        %v881 = vpop.f32.mrf.mxu0
        %v882 = vadd.f32 0.0, %v881
        %v883 = vpop.f32.mrf.mxu0
        %v884 = vadd.f32 0.0, %v883
        %885 = vmatmul.bf16.gmra.mxu0 %v768
        %v886 = vpop.f32.mrf.mxu0
        %v887 = vadd.f32 0.0, %v886
        %v888 = vpop.f32.mrf.mxu0
        %v889 = vadd.f32 0.0, %v888
        %890 = vdwg.mxu0
        %891 = vmatpush.bf16.msra.mxu0 %v577
        %892 = vmatpush.bf16.msra.mxu0 %v576
        %893 = vmatpush.bf16.msra.mxu0 %v575
        %894 = vmatpush.bf16.msra.mxu0 %v574
        %895 = vmatpush.bf16.msra.mxu0 %v573
        %896 = vmatpush.bf16.msra.mxu0 %v572
        %897 = vmatpush.bf16.msra.mxu0 %v571
        %898 = vmatpush.bf16.msra.mxu0 %v570
        %899 = vmatmul.bf16.gmra.mxu0 %v739
        %v900 = vpop.f32.mrf.mxu0
        %v901 = vadd.f32 %v812, %v900
        %v902 = vpop.f32.mrf.mxu0
        %v903 = vadd.f32 %v814, %v902
        %904 = vmatmul.bf16.gmra.mxu0 %v741
        %v905 = vpop.f32.mrf.mxu0
        %v906 = vadd.f32 %v817, %v905
        %v907 = vpop.f32.mrf.mxu0
        %v908 = vadd.f32 %v819, %v907
        %909 = vmatmul.bf16.gmra.mxu0 %v743
        %v910 = vpop.f32.mrf.mxu0
        %v911 = vadd.f32 %v822, %v910
        %v912 = vpop.f32.mrf.mxu0
        %v913 = vadd.f32 %v824, %v912
        %914 = vmatmul.bf16.gmra.mxu0 %v745
        %v915 = vpop.f32.mrf.mxu0
        %v916 = vadd.f32 %v827, %v915
        %v917 = vpop.f32.mrf.mxu0
        %v918 = vadd.f32 %v829, %v917
        %919 = vmatmul.bf16.gmra.mxu0 %v747
        %v920 = vpop.f32.mrf.mxu0
        %v921 = vadd.f32 %v832, %v920
        %v922 = vpop.f32.mrf.mxu0
        %v923 = vadd.f32 %v834, %v922
        %924 = vmatmul.bf16.gmra.mxu0 %v749
        %v925 = vpop.f32.mrf.mxu0
        %v926 = vadd.f32 %v837, %v925
        %v927 = vpop.f32.mrf.mxu0
        %v928 = vadd.f32 %v839, %v927
        %929 = vmatmul.bf16.gmra.mxu0 %v751
        %v930 = vpop.f32.mrf.mxu0
        %v931 = vadd.f32 %v842, %v930
        %v932 = vpop.f32.mrf.mxu0
        %v933 = vadd.f32 %v844, %v932
        %934 = vmatmul.bf16.gmra.mxu0 %v753
        %v935 = vpop.f32.mrf.mxu0
        %v936 = vadd.f32 %v847, %v935
        %v937 = vpop.f32.mrf.mxu0
        %v938 = vadd.f32 %v849, %v937
        %939 = vmatmul.bf16.gmra.mxu0 %v755
        %v940 = vpop.f32.mrf.mxu0
        %v941 = vadd.f32 %v852, %v940
        %v942 = vpop.f32.mrf.mxu0
        %v943 = vadd.f32 %v854, %v942
        %944 = vmatmul.bf16.gmra.mxu0 %v757
        %v945 = vpop.f32.mrf.mxu0
        %v946 = vadd.f32 %v857, %v945
        %v947 = vpop.f32.mrf.mxu0
        %v948 = vadd.f32 %v859, %v947
        %949 = vmatmul.bf16.gmra.mxu0 %v759
        %v950 = vpop.f32.mrf.mxu0
        %v951 = vadd.f32 %v862, %v950
        %v952 = vpop.f32.mrf.mxu0
        %v953 = vadd.f32 %v864, %v952
        %954 = vmatmul.bf16.gmra.mxu0 %v761
        %v955 = vpop.f32.mrf.mxu0
        %v956 = vadd.f32 %v867, %v955
        %v957 = vpop.f32.mrf.mxu0
        %v958 = vadd.f32 %v869, %v957
        %959 = vmatmul.bf16.gmra.mxu0 %v763
        %v960 = vpop.f32.mrf.mxu0
        %v961 = vadd.f32 %v872, %v960
        %v962 = vpop.f32.mrf.mxu0
        %v963 = vadd.f32 %v874, %v962
        %964 = vmatmul.bf16.gmra.mxu0 %v765
        %v965 = vpop.f32.mrf.mxu0
        %v966 = vadd.f32 %v877, %v965
        %v967 = vpop.f32.mrf.mxu0
        %v968 = vadd.f32 %v879, %v967
        %969 = vmatmul.bf16.gmra.mxu0 %v767
        %v970 = vpop.f32.mrf.mxu0
        %v971 = vadd.f32 %v882, %v970
        %v972 = vpop.f32.mrf.mxu0
        %v973 = vadd.f32 %v884, %v972
        %974 = vmatmul.bf16.gmra.mxu0 %v769
        %v975 = vpop.f32.mrf.mxu0
        %v976 = vadd.f32 %v887, %v975
        %v977 = vpop.f32.mrf.mxu0
        %v978 = vadd.f32 %v889, %v977
        %979 = vdwg.mxu0
        %v980 = vadd.f32 %v578, %v901
        %v981 = vadd.f32 %v579, %v903
        %v982 = vadd.f32 %v580, %v906
        %v983 = vadd.f32 %v581, %v908
        %v984 = vadd.f32 %v582, %v911
        %v985 = vadd.f32 %v583, %v913
        %v986 = vadd.f32 %v584, %v916
        %v987 = vadd.f32 %v585, %v918
        %v988 = vadd.f32 %v586, %v921
        %v989 = vadd.f32 %v587, %v923
        %v990 = vadd.f32 %v588, %v926
        %v991 = vadd.f32 %v589, %v928
        %v992 = vadd.f32 %v590, %v931
        %v993 = vadd.f32 %v591, %v933
        %v994 = vadd.f32 %v592, %v936
        %v995 = vadd.f32 %v593, %v938
        %v996 = vadd.f32 %v594, %v941
        %v997 = vadd.f32 %v595, %v943
        %v998 = vadd.f32 %v596, %v946
        %v999 = vadd.f32 %v597, %v948
        %v1000 = vadd.f32 %v598, %v951
        %v1001 = vadd.f32 %v599, %v953
        %v1002 = vadd.f32 %v600, %v956
        %v1003 = vadd.f32 %v601, %v958
        %v1004 = vadd.f32 %v602, %v961
        %v1005 = vadd.f32 %v603, %v963
        %v1006 = vadd.f32 %v604, %v966
        %v1007 = vadd.f32 %v605, %v968
        %v1008 = vadd.f32 %v606, %v971
        %v1009 = vadd.f32 %v607, %v973
        %v1010 = vadd.f32 %v608, %v976
        %v1011 = vadd.f32 %v609, %v978
        %1012 = vst [vmem:[#allocation2] sm:$0xff] %v980
        %1013 = vst [vmem:[#allocation2 + $0x8] sm:$0xff] %v981
        %1014 = vst [vmem:[#allocation2 + $0x10] sm:$0xff] %v982
        %1015 = vst [vmem:[#allocation2 + $0x18] sm:$0xff] %v983
        %1016 = vst [vmem:[#allocation2 + $0x20] sm:$0xff] %v984
        %1017 = vst [vmem:[#allocation2 + $0x28] sm:$0xff] %v985
        %1018 = vst [vmem:[#allocation2 + $0x30] sm:$0xff] %v986
        %1019 = vst [vmem:[#allocation2 + $0x38] sm:$0xff] %v987
        %1020 = vst [vmem:[#allocation2 + $0x40] sm:$0xff] %v988
        %1021 = vst [vmem:[#allocation2 + $0x48] sm:$0xff] %v989
        %1022 = vst [vmem:[#allocation2 + $0x50] sm:$0xff] %v990
        %1023 = vst [vmem:[#allocation2 + $0x58] sm:$0xff] %v991
        %1024 = vst [vmem:[#allocation2 + $0x60] sm:$0xff] %v992
        %1025 = vst [vmem:[#allocation2 + $0x68] sm:$0xff] %v993
        %1026 = vst [vmem:[#allocation2 + $0x70] sm:$0xff] %v994
        %1027 = vst [vmem:[#allocation2 + $0x78] sm:$0xff] %v995
        %1028 = vst [vmem:[#allocation2 + $0x80] sm:$0xff] %v996
        %1029 = vst [vmem:[#allocation2 + $0x88] sm:$0xff] %v997
        %1030 = vst [vmem:[#allocation2 + $0x90] sm:$0xff] %v998
        %1031 = vst [vmem:[#allocation2 + $0x98] sm:$0xff] %v999
        %1032 = vst [vmem:[#allocation2 + $0xa0] sm:$0xff] %v1000
        %1033 = vst [vmem:[#allocation2 + $0xa8] sm:$0xff] %v1001
        %1034 = vst [vmem:[#allocation2 + $0xb0] sm:$0xff] %v1002
        %1035 = vst [vmem:[#allocation2 + $0xb8] sm:$0xff] %v1003
        %1036 = vst [vmem:[#allocation2 + $0xc0] sm:$0xff] %v1004
        %1037 = vst [vmem:[#allocation2 + $0xc8] sm:$0xff] %v1005
        %1038 = vst [vmem:[#allocation2 + $0xd0] sm:$0xff] %v1006
        %1039 = vst [vmem:[#allocation2 + $0xd8] sm:$0xff] %v1007
        %1040 = vst [vmem:[#allocation2 + $0xe0] sm:$0xff] %v1008
        %1041 = vst [vmem:[#allocation2 + $0xe8] sm:$0xff] %v1009
        %1042 = vst [vmem:[#allocation2 + $0xf0] sm:$0xff] %v1010
        %1043 = vst [vmem:[#allocation2 + $0xf8] sm:$0xff] %v1011
        %p1044 = scmp.eq.s32.totalorder %s23, 1
        // Predicated region
        $region45: #{supcg_forward.3} parent=35 // pred_check
          %p1045 = pneg %p1044
        $region46: #{supcg_forward.3} parent=35 // pred_check_branch
          %1047 = sbr.rel (%p1045) target = $region48
        $region47: #{supcg_forward.3} parent=35 // pred_region
          %v1048 = vld [vmem:[#allocation2] sm:$0xff]
          %v1049 = vld [vmem:[#allocation2 + $0x8] sm:$0xff]
          %v1050 = vld [vmem:[#allocation2 + $0x10] sm:$0xff]
          %v1051 = vld [vmem:[#allocation2 + $0x18] sm:$0xff]
          %v1052 = vld [vmem:[#allocation2 + $0x20] sm:$0xff]
          %v1053 = vld [vmem:[#allocation2 + $0x28] sm:$0xff]
          %v1054 = vld [vmem:[#allocation2 + $0x30] sm:$0xff]
          %v1055 = vld [vmem:[#allocation2 + $0x38] sm:$0xff]
          %v1056 = vld [vmem:[#allocation2 + $0x40] sm:$0xff]
          %v1057 = vld [vmem:[#allocation2 + $0x48] sm:$0xff]
          %v1058 = vld [vmem:[#allocation2 + $0x50] sm:$0xff]
          %v1059 = vld [vmem:[#allocation2 + $0x58] sm:$0xff]
          %v1060 = vld [vmem:[#allocation2 + $0x60] sm:$0xff]
          %v1061 = vld [vmem:[#allocation2 + $0x68] sm:$0xff]
          %v1062 = vld [vmem:[#allocation2 + $0x70] sm:$0xff]
          %v1063 = vld [vmem:[#allocation2 + $0x78] sm:$0xff]
          %v1064 = vld [vmem:[#allocation2 + $0x80] sm:$0xff]
          %v1065 = vld [vmem:[#allocation2 + $0x88] sm:$0xff]
          %v1066 = vld [vmem:[#allocation2 + $0x90] sm:$0xff]
          %v1067 = vld [vmem:[#allocation2 + $0x98] sm:$0xff]
          %v1068 = vld [vmem:[#allocation2 + $0xa0] sm:$0xff]
          %v1069 = vld [vmem:[#allocation2 + $0xa8] sm:$0xff]
          %v1070 = vld [vmem:[#allocation2 + $0xb0] sm:$0xff]
          %v1071 = vld [vmem:[#allocation2 + $0xb8] sm:$0xff]
          %v1072 = vld [vmem:[#allocation2 + $0xc0] sm:$0xff]
          %v1073 = vld [vmem:[#allocation2 + $0xc8] sm:$0xff]
          %v1074 = vld [vmem:[#allocation2 + $0xd0] sm:$0xff]
          %v1075 = vld [vmem:[#allocation2 + $0xd8] sm:$0xff]
          %v1076 = vld [vmem:[#allocation2 + $0xe0] sm:$0xff]
          %v1077 = vld [vmem:[#allocation2 + $0xe8] sm:$0xff]
          %v1078 = vld [vmem:[#allocation2 + $0xf0] sm:$0xff]
          %v1079 = vld [vmem:[#allocation2 + $0xf8] sm:$0xff]
          %v1080 = vld [vmem:[%s3] sm:$0x1]
          %v1082 = vperm.slane %v1080, 0
          %v1084 = vadd.f32 %v1048, %v1082
          %v1085 = vadd.f32 %v1049, %v1082
          %v1086 = vadd.f32 %v1050, %v1082
          %v1087 = vadd.f32 %v1051, %v1082
          %v1088 = vadd.f32 %v1052, %v1082
          %v1089 = vadd.f32 %v1053, %v1082
          %v1090 = vadd.f32 %v1054, %v1082
          %v1091 = vadd.f32 %v1055, %v1082
          %v1092 = vadd.f32 %v1056, %v1082
          %v1093 = vadd.f32 %v1057, %v1082
          %v1094 = vadd.f32 %v1058, %v1082
          %v1095 = vadd.f32 %v1059, %v1082
          %v1096 = vadd.f32 %v1060, %v1082
          %v1097 = vadd.f32 %v1061, %v1082
          %v1098 = vadd.f32 %v1062, %v1082
          %v1099 = vadd.f32 %v1063, %v1082
          %v1100 = vadd.f32 %v1064, %v1082
          %v1101 = vadd.f32 %v1065, %v1082
          %v1102 = vadd.f32 %v1066, %v1082
          %v1103 = vadd.f32 %v1067, %v1082
          %v1104 = vadd.f32 %v1068, %v1082
          %v1105 = vadd.f32 %v1069, %v1082
          %v1106 = vadd.f32 %v1070, %v1082
          %v1107 = vadd.f32 %v1071, %v1082
          %v1108 = vadd.f32 %v1072, %v1082
          %v1109 = vadd.f32 %v1073, %v1082
          %v1110 = vadd.f32 %v1074, %v1082
          %v1111 = vadd.f32 %v1075, %v1082
          %v1112 = vadd.f32 %v1076, %v1082
          %v1113 = vadd.f32 %v1077, %v1082
          %v1114 = vadd.f32 %v1078, %v1082
          %v1115 = vadd.f32 %v1079, %v1082
          %v1116 = vmax.f32 %v1084, 0.0
          %v1117 = vmax.f32 %v1085, 0.0
          %v1118 = vmax.f32 %v1086, 0.0
          %v1119 = vmax.f32 %v1087, 0.0
          %v1120 = vmax.f32 %v1088, 0.0
          %v1121 = vmax.f32 %v1089, 0.0
          %v1122 = vmax.f32 %v1090, 0.0
          %v1123 = vmax.f32 %v1091, 0.0
          %v1124 = vmax.f32 %v1092, 0.0
          %v1125 = vmax.f32 %v1093, 0.0
          %v1126 = vmax.f32 %v1094, 0.0
          %v1127 = vmax.f32 %v1095, 0.0
          %v1128 = vmax.f32 %v1096, 0.0
          %v1129 = vmax.f32 %v1097, 0.0
          %v1130 = vmax.f32 %v1098, 0.0
          %v1131 = vmax.f32 %v1099, 0.0
          %v1132 = vmax.f32 %v1100, 0.0
          %v1133 = vmax.f32 %v1101, 0.0
          %v1134 = vmax.f32 %v1102, 0.0
          %v1135 = vmax.f32 %v1103, 0.0
          %v1136 = vmax.f32 %v1104, 0.0
          %v1137 = vmax.f32 %v1105, 0.0
          %v1138 = vmax.f32 %v1106, 0.0
          %v1139 = vmax.f32 %v1107, 0.0
          %v1140 = vmax.f32 %v1108, 0.0
          %v1141 = vmax.f32 %v1109, 0.0
          %v1142 = vmax.f32 %v1110, 0.0
          %v1143 = vmax.f32 %v1111, 0.0
          %v1144 = vmax.f32 %v1112, 0.0
          %v1145 = vmax.f32 %v1113, 0.0
          %v1146 = vmax.f32 %v1114, 0.0
          %v1147 = vmax.f32 %v1115, 0.0
          %v1148 = vpack.c.bf16 %v1116, %v1116
          %v1149 = vpack.c.bf16 %v1117, %v1117
          %v1150 = vpack.c.bf16 %v1118, %v1118
          %v1151 = vpack.c.bf16 %v1119, %v1119
          %v1152 = vpack.c.bf16 %v1120, %v1120
          %v1153 = vpack.c.bf16 %v1121, %v1121
          %v1154 = vpack.c.bf16 %v1122, %v1122
          %v1155 = vpack.c.bf16 %v1123, %v1123
          %v1156 = vpack.c.bf16 %v1124, %v1124
          %v1157 = vpack.c.bf16 %v1125, %v1125
          %v1158 = vpack.c.bf16 %v1126, %v1126
          %v1159 = vpack.c.bf16 %v1127, %v1127
          %v1160 = vpack.c.bf16 %v1128, %v1128
          %v1161 = vpack.c.bf16 %v1129, %v1129
          %v1162 = vpack.c.bf16 %v1130, %v1130
          %v1163 = vpack.c.bf16 %v1131, %v1131
          %v1164 = vpack.c.bf16 %v1132, %v1132
          %v1165 = vpack.c.bf16 %v1133, %v1133
          %v1166 = vpack.c.bf16 %v1134, %v1134
          %v1167 = vpack.c.bf16 %v1135, %v1135
          %v1168 = vpack.c.bf16 %v1136, %v1136
          %v1169 = vpack.c.bf16 %v1137, %v1137
          %v1170 = vpack.c.bf16 %v1138, %v1138
          %v1171 = vpack.c.bf16 %v1139, %v1139
          %v1172 = vpack.c.bf16 %v1140, %v1140
          %v1173 = vpack.c.bf16 %v1141, %v1141
          %v1174 = vpack.c.bf16 %v1142, %v1142
          %v1175 = vpack.c.bf16 %v1143, %v1143
          %v1176 = vpack.c.bf16 %v1144, %v1144
          %v1177 = vpack.c.bf16 %v1145, %v1145
          %v1178 = vpack.c.bf16 %v1146, %v1146
          %v1179 = vpack.c.bf16 %v1147, %v1147
          %1180 = vst [vmem:[%s238] sm:$0xf] %v1148
          %1181 = vst [vmem:[%s238 + $0x4] sm:$0xf] %v1149
          %1182 = vst [vmem:[%s238 + $0x8] sm:$0xf] %v1150
          %1183 = vst [vmem:[%s238 + $0xc] sm:$0xf] %v1151
          %1184 = vst [vmem:[%s238 + $0x10] sm:$0xf] %v1152
          %1185 = vst [vmem:[%s238 + $0x14] sm:$0xf] %v1153
          %1186 = vst [vmem:[%s238 + $0x18] sm:$0xf] %v1154
          %1187 = vst [vmem:[%s238 + $0x1c] sm:$0xf] %v1155
          %1188 = vst [vmem:[%s238 + $0x20] sm:$0xf] %v1156
          %1189 = vst [vmem:[%s238 + $0x24] sm:$0xf] %v1157
          %1190 = vst [vmem:[%s238 + $0x28] sm:$0xf] %v1158
          %1191 = vst [vmem:[%s238 + $0x2c] sm:$0xf] %v1159
          %1192 = vst [vmem:[%s238 + $0x30] sm:$0xf] %v1160
          %1193 = vst [vmem:[%s238 + $0x34] sm:$0xf] %v1161
          %1194 = vst [vmem:[%s238 + $0x38] sm:$0xf] %v1162
          %1195 = vst [vmem:[%s238 + $0x3c] sm:$0xf] %v1163
          %1196 = vst [vmem:[%s238 + $0x40] sm:$0xf] %v1164
          %1197 = vst [vmem:[%s238 + $0x44] sm:$0xf] %v1165
          %1198 = vst [vmem:[%s238 + $0x48] sm:$0xf] %v1166
          %1199 = vst [vmem:[%s238 + $0x4c] sm:$0xf] %v1167
          %1200 = vst [vmem:[%s238 + $0x50] sm:$0xf] %v1168
          %1201 = vst [vmem:[%s238 + $0x54] sm:$0xf] %v1169
          %1202 = vst [vmem:[%s238 + $0x58] sm:$0xf] %v1170
          %1203 = vst [vmem:[%s238 + $0x5c] sm:$0xf] %v1171
          %1204 = vst [vmem:[%s238 + $0x60] sm:$0xf] %v1172
          %1205 = vst [vmem:[%s238 + $0x64] sm:$0xf] %v1173
          %1206 = vst [vmem:[%s238 + $0x68] sm:$0xf] %v1174
          %1207 = vst [vmem:[%s238 + $0x6c] sm:$0xf] %v1175
          %1208 = vst [vmem:[%s238 + $0x70] sm:$0xf] %v1176
          %1209 = vst [vmem:[%s238 + $0x74] sm:$0xf] %v1177
          %1210 = vst [vmem:[%s238 + $0x78] sm:$0xf] %v1178
          %1211 = vst [vmem:[%s238 + $0x7c] sm:$0xf] %v1179
        $region48: #{supcg_forward.3} parent=35 // pred_fallthru
          _
        %s1212 = smul.u32 32, %s22
        %p1213 = scmp.lt.s32.totalorder %s1212, 63
        %s1214 = scalar_select %p1213, %s1212, 63
        %s1215 = smul.addr %s1214, 4
        %s1216 = scalar_lea.vmem %s4, %s1215
        // Predicated region
        $region49: #{supcg_forward.3} parent=35 // pred_check
          %p1217 = pneg %p139
        $region50: #{supcg_forward.3} parent=35 // pred_check_branch
          %1219 = sbr.rel (%p1217) target = $region52
        $region51: #{supcg_forward.3} parent=35 // pred_region
          %s1220 = smul.u32 32, %s22
        $region52: #{supcg_forward.3} parent=35 // pred_fallthru
          _
      $region36: #{supcg_forward.3} parent=5 // pred_fallthru
        _
      %p1221 = scmp.le.s32.totalorder 2, %s13
      // Predicated region
      $region53: #{supcg_forward.3} parent=5 // pred_check
        %p1222 = pneg %p1221
      $region54: #{supcg_forward.3} parent=5 // pred_check_branch
        %1224 = sbr.rel (%p1222) target = $region56
      $region55: #{supcg_forward.3} parent=5 // pred_region
        %s1225 = ssub.s32 %s13, 2
        // Predicated region
        $region57: #{supcg_forward.3} parent=55 // pred_check
          %p1226 = pneg %p145
        $region58: #{supcg_forward.3} parent=55 // pred_check_branch
          %1228 = sbr.rel (%p1226) target = $region60
        $region59: #{supcg_forward.3} parent=55 // pred_region
          %s1229 = smul.u32 32, %s24
          %p1230 = scmp.lt.s32.totalorder %s1229, 63
          %s1231 = scalar_select %p1230, %s1229, 63
          %s1232 = smul.addr %s1231, 4
          %s1233 = scalar_lea.vmem %s4, %s1232
        $region60: #{supcg_forward.3} parent=55 // pred_fallthru
          _
      $region56: #{supcg_forward.3} parent=5 // pred_fallthru
        _
    $region6: #{supcg_forward.3} parent=1 // loop_footer
      %s17 = sadd.s32 1, %s13
    $region7: #{supcg_forward.3} parent=1 // loop_footer_branch
      %12 = sbr.rel target = $region3
    $region8: #{supcg_forward.3} parent=1 // loop_exit
      _
    %1234 = vsyncpa [#allocation4], 1
    %s1235 = scalar_lea.sflag [#allocation4], 1
    %1236 = vsyncpa %s1235, 1

// kernel: supcg_forward.5
$region0: #{supcg_forward.5}
  #allocation0 [shape = 'u32[]', space=smem, size = 0x4, offset = 0x4, fixed_abs, tag = 'smem constant byte address 0x4 - core index']
  #allocation1 [shape = 'u32[72,128]{1,0:T(1,128)}', space=vmem, size = 0x9000, scoped, tag = 'internal scratch']
  #allocation2 [shape = 'f32[256,128]{1,0:T(8,128)}', space=vmem, size = 0x20000, scoped, tag = 'scratch operand']
  %s0 = inlined_call_operand.hbm [shape: bf16[512,512], index: 0, kind: input, shape index: {}]
  %s1 = inlined_call_operand.vmem [shape: bf16[512,128], index: 1, kind: input, shape index: {}]
  %s2 = inlined_call_operand.vmem [shape: bf16[128,128], index: 2, kind: input, shape index: {}]
  %s3 = inlined_call_operand.vmem [shape: f32[1,128], index: 3, kind: input, shape index: {}]
  %s4 = inlined_call_operand.vmem [shape: bf16[128,128], index: 4, kind: input, shape index: {}]
  %s5 = inlined_call_operand.vmem [shape: f32[512,128], index: 5, kind: output, shape index: {}]
  %s6 = sld [smem:[#allocation0]]
  $region65: #{supcg_forward.5} parent=0
    _
  %s8 = ssub.s32 1, %s6
  %s9 = scalar_select 0, %s8, %s6
  $region1: #{supcg_forward.5} parent=0
    #allocation3 [shape = 'u8[262144]{0}', space=vmem, size = 0x40000, scoped, tag = 'input window, operand 0']
    #allocation4 [shape = 's32[2]{0}', space=sflag, size = 0x8, scoped, tag = 'scoped memory for supcg_forward.5']
    %10 = vsyncpa [#allocation4], 0
    %s11 = scalar_lea.sflag [#allocation4], 1
    %12 = vsyncpa %s11, 0
    loop: start=0, step=1, limit=6
    $region2: #{supcg_forward.5} parent=1 // loop_pre_header
      _
    $region3: #{supcg_forward.5} parent=1 // loop_header
      %s14 = sphi 0, %s18
      %p15 = scmp.ge.s32.totalorder %s14, 6
      %s21 = sphi 0, %s33
      %s22 = sphi 0, %s29
      %s23 = sphi 0, %s21
      %s24 = sphi 0, %s22
      %s25 = sphi 0, %s23
      %s26 = sphi 0, %s24
      %s38 = sphi 0, %s40
      %s41 = sphi 0, %s38
      %s42 = sphi 0, %s41
      %s58 = sphi 0, %s42
      %s62 = sphi 0, %s62
      %s64 = sphi 0, %s62
      %s65 = sphi 0, %s64
      %s79 = sphi 0, %s65
      %s83 = sphi 0, %s83
      %s85 = sphi 0, %s83
      %s86 = sphi 0, %s85
      %s100 = sphi 0, %s86
      %s104 = sphi 0, %s104
      %s106 = sphi 0, %s104
      %s107 = sphi 0, %s106
      %s121 = sphi 0, %s107
      %s125 = sphi 0, %s125
      %s127 = sphi 0, %s125
      %s128 = sphi 0, %s127
      %s142 = sphi 0, %s128
      %s148 = sphi 0, %s150
      %s151 = sphi 0, %s148
      %s152 = sphi 0, %s151
      %s168 = sphi 0, %s152
    $region4: #{supcg_forward.5} parent=1 // loop_header_branch
      %17 = sbr.rel (%p15) target = $region8
    $region5: #{supcg_forward.5} parent=1 // loop_body
      %s19 = ssub.s32 %s14, 1
      %s20 = ssub.s32 %s14, 2
      %s27 = sadd.s32 1, %s22
      %p28 = scmp.ge.s32.totalorder %s27, 2
      %s29 = scalar_select %p28, 0, %s27
      %s30 = sadd.s32 1, %s21
      %s31 = scalar_select %p28, %s30, %s21
      %p32 = scmp.ge.s32.totalorder %s31, 2
      %s33 = scalar_select %p32, 0, %s31
      %s34 = ssub.s32 %s21, %s33
      %s35 = ssub.s32 %s22, %s29
      %s36 = sor.u32 %s34, %s35
      %p37 = scmp.eq.s32.totalorder %s36, 0
      %s39 = sadd.s32 %s38, 1
      %s40 = scalar_select %p37, %s38, %s39
      %p43 = pneg %p37
      %p44 = scmp.eq.s32.totalorder %s14, 3
      %p45 = por %p43, %p44
      %p46 = scmp.ne.s32.totalorder %s38, %s41
      %p47 = scmp.eq.s32.totalorder %s14, 0
      %p48 = por %p46, %p47
      %p49 = scmp.ne.s32.totalorder %s38, %s41
      %p50 = scmp.eq.s32.totalorder %s19, 3
      %p51 = por %p49, %p50
      %p52 = scmp.ne.s32.totalorder %s41, %s42
      %p53 = scmp.eq.s32.totalorder %s19, 0
      %p54 = por %p52, %p53
      %p55 = scmp.ne.s32.totalorder %s41, %s42
      %p56 = scmp.eq.s32.totalorder %s20, 3
      %p57 = por %p55, %p56
      %p59 = scmp.ne.s32.totalorder %s42, %s58
      %p60 = scmp.eq.s32.totalorder %s20, 0
      %p61 = por %p59, %p60
      %s63 = sadd.s32 %s62, 1
      %p66 = scmp.eq.s32.totalorder %s14, 3
      %p67 = scmp.ne.s32.totalorder %s62, %s64
      %p68 = scmp.eq.s32.totalorder %s14, 0
      %p69 = por %p67, %p68
      %p70 = scmp.ne.s32.totalorder %s62, %s64
      %p71 = scmp.eq.s32.totalorder %s19, 3
      %p72 = por %p70, %p71
      %p73 = scmp.ne.s32.totalorder %s64, %s65
      %p74 = scmp.eq.s32.totalorder %s19, 0
      %p75 = por %p73, %p74
      %p76 = scmp.ne.s32.totalorder %s64, %s65
      %p77 = scmp.eq.s32.totalorder %s20, 3
      %p78 = por %p76, %p77
      %p80 = scmp.ne.s32.totalorder %s65, %s79
      %p81 = scmp.eq.s32.totalorder %s20, 0
      %p82 = por %p80, %p81
      %s84 = sadd.s32 %s83, 1
      %p87 = scmp.eq.s32.totalorder %s14, 3
      %p88 = scmp.ne.s32.totalorder %s83, %s85
      %p89 = scmp.eq.s32.totalorder %s14, 0
      %p90 = por %p88, %p89
      %p91 = scmp.ne.s32.totalorder %s83, %s85
      %p92 = scmp.eq.s32.totalorder %s19, 3
      %p93 = por %p91, %p92
      %p94 = scmp.ne.s32.totalorder %s85, %s86
      %p95 = scmp.eq.s32.totalorder %s19, 0
      %p96 = por %p94, %p95
      %p97 = scmp.ne.s32.totalorder %s85, %s86
      %p98 = scmp.eq.s32.totalorder %s20, 3
      %p99 = por %p97, %p98
      %p101 = scmp.ne.s32.totalorder %s86, %s100
      %p102 = scmp.eq.s32.totalorder %s20, 0
      %p103 = por %p101, %p102
      %s105 = sadd.s32 %s104, 1
      %p108 = scmp.eq.s32.totalorder %s14, 3
      %p109 = scmp.ne.s32.totalorder %s104, %s106
      %p110 = scmp.eq.s32.totalorder %s14, 0
      %p111 = por %p109, %p110
      %p112 = scmp.ne.s32.totalorder %s104, %s106
      %p113 = scmp.eq.s32.totalorder %s19, 3
      %p114 = por %p112, %p113
      %p115 = scmp.ne.s32.totalorder %s106, %s107
      %p116 = scmp.eq.s32.totalorder %s19, 0
      %p117 = por %p115, %p116
      %p118 = scmp.ne.s32.totalorder %s106, %s107
      %p119 = scmp.eq.s32.totalorder %s20, 3
      %p120 = por %p118, %p119
      %p122 = scmp.ne.s32.totalorder %s107, %s121
      %p123 = scmp.eq.s32.totalorder %s20, 0
      %p124 = por %p122, %p123
      %s126 = sadd.s32 %s125, 1
      %p129 = scmp.eq.s32.totalorder %s14, 3
      %p130 = scmp.ne.s32.totalorder %s125, %s127
      %p131 = scmp.eq.s32.totalorder %s14, 0
      %p132 = por %p130, %p131
      %p133 = scmp.ne.s32.totalorder %s125, %s127
      %p134 = scmp.eq.s32.totalorder %s19, 3
      %p135 = por %p133, %p134
      %p136 = scmp.ne.s32.totalorder %s127, %s128
      %p137 = scmp.eq.s32.totalorder %s19, 0
      %p138 = por %p136, %p137
      %p139 = scmp.ne.s32.totalorder %s127, %s128
      %p140 = scmp.eq.s32.totalorder %s20, 3
      %p141 = por %p139, %p140
      %p143 = scmp.ne.s32.totalorder %s128, %s142
      %p144 = scmp.eq.s32.totalorder %s20, 0
      %p145 = por %p143, %p144
      %s146 = ssub.s32 %s21, %s33
      %p147 = scmp.eq.s32.totalorder %s146, 0
      %s149 = sadd.s32 %s148, 1
      %s150 = scalar_select %p147, %s148, %s149
      %p153 = pneg %p147
      %p154 = scmp.eq.s32.totalorder %s14, 3
      %p155 = por %p153, %p154
      %p156 = scmp.ne.s32.totalorder %s148, %s151
      %p157 = scmp.eq.s32.totalorder %s14, 0
      %p158 = por %p156, %p157
      %p159 = scmp.ne.s32.totalorder %s148, %s151
      %p160 = scmp.eq.s32.totalorder %s19, 3
      %p161 = por %p159, %p160
      %p162 = scmp.ne.s32.totalorder %s151, %s152
      %p163 = scmp.eq.s32.totalorder %s19, 0
      %p164 = por %p162, %p163
      %p165 = scmp.ne.s32.totalorder %s151, %s152
      %p166 = scmp.eq.s32.totalorder %s20, 3
      %p167 = por %p165, %p166
      %p169 = scmp.ne.s32.totalorder %s152, %s168
      %p170 = scmp.eq.s32.totalorder %s20, 0
      %p171 = por %p169, %p170
      %p172 = scmp.le.s32.totalorder 1, %s14
      %p173 = scmp.lt.s32.totalorder %s14, 5
      %p174 = pnand %p172, %p173
      %p175 = pneg %p174
      // Predicated region
      $region9: #{supcg_forward.5} parent=5 // pred_check
        _
      $region10: #{supcg_forward.5} parent=5 // pred_check_branch
        %177 = sbr.rel (%p174) target = $region12
      $region11: #{supcg_forward.5} parent=5 // pred_region
        %s178 = ssub.s32 %s14, 1
        // Predicated region
        $region13: #{supcg_forward.5} parent=11 // pred_check
          %p179 = pneg %p75
        $region14: #{supcg_forward.5} parent=11 // pred_check_branch
          %181 = sbr.rel (%p179) target = $region16
        $region15: #{supcg_forward.5} parent=11 // pred_region
          _
        $region16: #{supcg_forward.5} parent=11 // pred_fallthru
          _
        // Predicated region
        $region17: #{supcg_forward.5} parent=11 // pred_check
          %p182 = pneg %p96
        $region18: #{supcg_forward.5} parent=11 // pred_check_branch
          %184 = sbr.rel (%p182) target = $region20
        $region19: #{supcg_forward.5} parent=11 // pred_region
          _
        $region20: #{supcg_forward.5} parent=11 // pred_fallthru
          _
        // Predicated region
        $region21: #{supcg_forward.5} parent=11 // pred_check
          %p185 = pneg %p117
        $region22: #{supcg_forward.5} parent=11 // pred_check_branch
          %187 = sbr.rel (%p185) target = $region24
        $region23: #{supcg_forward.5} parent=11 // pred_region
          _
        $region24: #{supcg_forward.5} parent=11 // pred_fallthru
          _
        // Predicated region
        $region25: #{supcg_forward.5} parent=11 // pred_check
          %p188 = pneg %p138
        $region26: #{supcg_forward.5} parent=11 // pred_check_branch
          %190 = sbr.rel (%p188) target = $region28
        $region27: #{supcg_forward.5} parent=11 // pred_region
          _
        $region28: #{supcg_forward.5} parent=11 // pred_fallthru
          _
      $region12: #{supcg_forward.5} parent=5 // pred_fallthru
        _
      %p191 = scmp.lt.s32.totalorder %s14, 4
      // Predicated region
      $region29: #{supcg_forward.5} parent=5 // pred_check
        %p192 = pneg %p191
      $region30: #{supcg_forward.5} parent=5 // pred_check_branch
        %194 = sbr.rel (%p192) target = $region32
      $region31: #{supcg_forward.5} parent=5 // pred_region
        // Predicated region
        $region33: #{supcg_forward.5} parent=31 // pred_check
          %p195 = pneg %p48
        $region34: #{supcg_forward.5} parent=31 // pred_check_branch
          %197 = sbr.rel (%p195) target = $region36
        $region35: #{supcg_forward.5} parent=31 // pred_region
          %s198 = sand.u32 %s38, 1
          %s199 = scalar_lea.sflag [#allocation4], %s198
          %s200 = sand.u32 %s38, 1
          %s201 = smul.addr %s200, 256
          %s202 = scalar_lea.vmem [#allocation3], %s201
          %s203 = smul.u32 32, %s21
          %s204 = smul.u32 2, %s22
          %206 = vsyncadd %s199, 0
          %s207 = smul.addr %s203, 4
          %s208 = sadd.s32 %s204, %s207
          %s209 = smul.addr %s208, 4
          %s210 = scalar_lea.hbm %s0, %s209
          %s211 = sshll.u32 %s210, 4
          %s212 = int_to_ptr.hbm [resolvable:$true] %s211
          %s213 = sshll.u32 %s202, 4
          %s214 = int_to_ptr.vmem [resolvable:$true] %s213
          %219 = dma.hbm_to_vmem [thread:$0]  %s212, 4096, %s214, %s199, 256, 128, 8
        $region36: #{supcg_forward.5} parent=31 // pred_fallthru
          _
      $region32: #{supcg_forward.5} parent=5 // pred_fallthru
        _
      %p220 = scmp.le.s32.totalorder 1, %s14
      %p221 = scmp.lt.s32.totalorder %s14, 5
      %p222 = pnand %p220, %p221
      %p223 = pneg %p222
      // Predicated region
      $region37: #{supcg_forward.5} parent=5 // pred_check
        _
      $region38: #{supcg_forward.5} parent=5 // pred_check_branch
        %225 = sbr.rel (%p222) target = $region40
      $region39: #{supcg_forward.5} parent=5 // pred_region
        %s226 = ssub.s32 %s14, 1
        %s227 = sand.u32 %s41, 1
        %s228 = scalar_lea.sflag [#allocation4], %s227
        %s229 = sand.u32 %s41, 1
        %s230 = smul.addr %s229, 256
        %s231 = scalar_lea.vmem [#allocation3], %s230
        // Predicated region
        $region41: #{supcg_forward.5} parent=39 // pred_check
          %p232 = pneg %p54
        $region42: #{supcg_forward.5} parent=39 // pred_check_branch
          %234 = sbr.rel (%p232) target = $region44
        $region43: #{supcg_forward.5} parent=39 // pred_region
          %236 = dma.done %s228, 4096
        $region44: #{supcg_forward.5} parent=39 // pred_fallthru
          _
        %s237 = sand.u32 %s41, 1
        %s238 = scalar_lea.sflag [#allocation4], %s237
        %s239 = sand.u32 %s41, 1
        %s240 = smul.addr %s239, 256
        %s241 = scalar_lea.vmem [#allocation3], %s240
        %p242 = pneg %p54
        %p243 = pneg %p51
        %p244 = pneg %p75
        %p245 = pneg %p72
        %p246 = pneg %p96
        %p247 = pneg %p93
        %p248 = pneg %p117
        %p249 = pneg %p114
        %p250 = pneg %p138
        %p251 = pneg %p135
        %p252 = pneg %p164
        %p253 = pneg %p161
        %s254 = smul.u32 32, %s23
        %p255 = scmp.lt.s32.totalorder %s254, 63
        %s256 = scalar_select %p255, %s254, 63
        %s257 = smul.addr %s256, 8
        %s258 = scalar_lea.vmem %s5, %s257
        %s259 = smul.u32 32, %s23
        %s260 = smul.u32 2, %s24
        %s261 = smul.u32 32, %s23
        %p262 = scmp.lt.s32.totalorder %s261, 63
        %s263 = scalar_select %p262, %s261, 63
        %s264 = smul.addr %s263, 8
        %s265 = scalar_lea.vmem %s5, %s264
        %s266 = smul.u32 32, %s23
        %p267 = scmp.eq.s32.totalorder %s24, 0
        // Predicated region
        $region45: #{supcg_forward.5} parent=39 // pred_check
          %p268 = pneg %p267
        $region46: #{supcg_forward.5} parent=39 // pred_check_branch
          %270 = sbr.rel (%p268) target = $region48
        $region47: #{supcg_forward.5} parent=39 // pred_region
          %271 = vst [vmem:[#allocation2] sm:$0xff] 0.0
          %272 = vst [vmem:[#allocation2 + $0x8] sm:$0xff] 0.0
          %273 = vst [vmem:[#allocation2 + $0x10] sm:$0xff] 0.0
          %274 = vst [vmem:[#allocation2 + $0x18] sm:$0xff] 0.0
          %275 = vst [vmem:[#allocation2 + $0x20] sm:$0xff] 0.0
          %276 = vst [vmem:[#allocation2 + $0x28] sm:$0xff] 0.0
          %277 = vst [vmem:[#allocation2 + $0x30] sm:$0xff] 0.0
          %278 = vst [vmem:[#allocation2 + $0x38] sm:$0xff] 0.0
          %279 = vst [vmem:[#allocation2 + $0x40] sm:$0xff] 0.0
          %280 = vst [vmem:[#allocation2 + $0x48] sm:$0xff] 0.0
          %281 = vst [vmem:[#allocation2 + $0x50] sm:$0xff] 0.0
          %282 = vst [vmem:[#allocation2 + $0x58] sm:$0xff] 0.0
          %283 = vst [vmem:[#allocation2 + $0x60] sm:$0xff] 0.0
          %284 = vst [vmem:[#allocation2 + $0x68] sm:$0xff] 0.0
          %285 = vst [vmem:[#allocation2 + $0x70] sm:$0xff] 0.0
          %286 = vst [vmem:[#allocation2 + $0x78] sm:$0xff] 0.0
          %287 = vst [vmem:[#allocation2 + $0x80] sm:$0xff] 0.0
          %288 = vst [vmem:[#allocation2 + $0x88] sm:$0xff] 0.0
          %289 = vst [vmem:[#allocation2 + $0x90] sm:$0xff] 0.0
          %290 = vst [vmem:[#allocation2 + $0x98] sm:$0xff] 0.0
          %291 = vst [vmem:[#allocation2 + $0xa0] sm:$0xff] 0.0
          %292 = vst [vmem:[#allocation2 + $0xa8] sm:$0xff] 0.0
          %293 = vst [vmem:[#allocation2 + $0xb0] sm:$0xff] 0.0
          %294 = vst [vmem:[#allocation2 + $0xb8] sm:$0xff] 0.0
          %295 = vst [vmem:[#allocation2 + $0xc0] sm:$0xff] 0.0
          %296 = vst [vmem:[#allocation2 + $0xc8] sm:$0xff] 0.0
          %297 = vst [vmem:[#allocation2 + $0xd0] sm:$0xff] 0.0
          %298 = vst [vmem:[#allocation2 + $0xd8] sm:$0xff] 0.0
          %299 = vst [vmem:[#allocation2 + $0xe0] sm:$0xff] 0.0
          %300 = vst [vmem:[#allocation2 + $0xe8] sm:$0xff] 0.0
          %301 = vst [vmem:[#allocation2 + $0xf0] sm:$0xff] 0.0
          %302 = vst [vmem:[#allocation2 + $0xf8] sm:$0xff] 0.0
        $region48: #{supcg_forward.5} parent=39 // pred_fallthru
          _
        %s303 = smul.u32 %s24, 256
        %s304 = sshra.s32 %s303, 3
        %s305 = sand.u32 %s303, 7
        %s306 = smul.addr %s304, 4
        %s307 = scalar_lea.vmem %s1, %s306
        %v308 = vld [vmem:[%s307] sm:$0xf]
        %v309 = vld [vmem:[%s307 + $0x4] sm:$0xf]
        %v310 = vld [vmem:[%s307 + $0x8] sm:$0xf]
        %v311 = vld [vmem:[%s307 + $0xc] sm:$0xf]
        %v312 = vld [vmem:[%s307 + $0x10] sm:$0xf]
        %v313 = vld [vmem:[%s307 + $0x14] sm:$0xf]
        %v314 = vld [vmem:[%s307 + $0x18] sm:$0xf]
        %v315 = vld [vmem:[%s307 + $0x1c] sm:$0xf]
        %v316 = vld [vmem:[%s307 + $0x20] sm:$0xf]
        %v317 = vld [vmem:[%s307 + $0x24] sm:$0xf]
        %v318 = vld [vmem:[%s307 + $0x28] sm:$0xf]
        %v319 = vld [vmem:[%s307 + $0x2c] sm:$0xf]
        %v320 = vld [vmem:[%s307 + $0x30] sm:$0xf]
        %v321 = vld [vmem:[%s307 + $0x34] sm:$0xf]
        %v322 = vld [vmem:[%s307 + $0x38] sm:$0xf]
        %v323 = vld [vmem:[%s307 + $0x3c] sm:$0xf]
        %v324 = vld [vmem:[%s307 + $0x40] sm:$0xf]
        %v325 = vld [vmem:[%s307 + $0x44] sm:$0xf]
        %v326 = vld [vmem:[%s307 + $0x48] sm:$0xf]
        %v327 = vld [vmem:[%s307 + $0x4c] sm:$0xf]
        %v328 = vld [vmem:[%s307 + $0x50] sm:$0xf]
        %v329 = vld [vmem:[%s307 + $0x54] sm:$0xf]
        %v330 = vld [vmem:[%s307 + $0x58] sm:$0xf]
        %v331 = vld [vmem:[%s307 + $0x5c] sm:$0xf]
        %v332 = vld [vmem:[%s307 + $0x60] sm:$0xf]
        %v333 = vld [vmem:[%s307 + $0x64] sm:$0xf]
        %v334 = vld [vmem:[%s307 + $0x68] sm:$0xf]
        %v335 = vld [vmem:[%s307 + $0x6c] sm:$0xf]
        %v336 = vld [vmem:[%s307 + $0x70] sm:$0xf]
        %v337 = vld [vmem:[%s307 + $0x74] sm:$0xf]
        %v338 = vld [vmem:[%s307 + $0x78] sm:$0xf]
        %v339 = vld [vmem:[%s307 + $0x7c] sm:$0xf]
        %v340 = vld [vmem:[%s2] sm:$0xf]
        %v341 = vld [vmem:[%s2 + $0x4] sm:$0xf]
        %v342 = vld [vmem:[%s2 + $0x8] sm:$0xf]
        %v343 = vld [vmem:[%s2 + $0xc] sm:$0xf]
        %v344 = vld [vmem:[%s2 + $0x10] sm:$0xf]
        %v345 = vld [vmem:[%s2 + $0x14] sm:$0xf]
        %v346 = vld [vmem:[%s2 + $0x18] sm:$0xf]
        %v347 = vld [vmem:[%s2 + $0x1c] sm:$0xf]
        %v348 = vld [vmem:[%s2 + $0x20] sm:$0xf]
        %v349 = vld [vmem:[%s2 + $0x24] sm:$0xf]
        %v350 = vld [vmem:[%s2 + $0x28] sm:$0xf]
        %v351 = vld [vmem:[%s2 + $0x2c] sm:$0xf]
        %v352 = vld [vmem:[%s2 + $0x30] sm:$0xf]
        %v353 = vld [vmem:[%s2 + $0x34] sm:$0xf]
        %v354 = vld [vmem:[%s2 + $0x38] sm:$0xf]
        %v355 = vld [vmem:[%s2 + $0x3c] sm:$0xf]
        %v388 = vunpack.c.l.b16 %v308
        %v389 = vunpack.c.l.b16 %v309
        %v390 = vunpack.c.l.b16 %v310
        %v391 = vunpack.c.l.b16 %v311
        %v392 = vunpack.c.l.b16 %v312
        %v393 = vunpack.c.l.b16 %v313
        %v394 = vunpack.c.l.b16 %v314
        %v395 = vunpack.c.l.b16 %v315
        %v396 = vunpack.c.l.b16 %v316
        %v397 = vunpack.c.l.b16 %v317
        %v398 = vunpack.c.l.b16 %v318
        %v399 = vunpack.c.l.b16 %v319
        %v400 = vunpack.c.l.b16 %v320
        %v401 = vunpack.c.l.b16 %v321
        %v402 = vunpack.c.l.b16 %v322
        %v403 = vunpack.c.l.b16 %v323
        %v404 = vunpack.c.l.b16 %v324
        %v405 = vunpack.c.l.b16 %v325
        %v406 = vunpack.c.l.b16 %v326
        %v407 = vunpack.c.l.b16 %v327
        %v408 = vunpack.c.l.b16 %v328
        %v409 = vunpack.c.l.b16 %v329
        %v410 = vunpack.c.l.b16 %v330
        %v411 = vunpack.c.l.b16 %v331
        %v412 = vunpack.c.l.b16 %v332
        %v413 = vunpack.c.l.b16 %v333
        %v414 = vunpack.c.l.b16 %v334
        %v415 = vunpack.c.l.b16 %v335
        %v416 = vunpack.c.l.b16 %v336
        %v417 = vunpack.c.l.b16 %v337
        %v418 = vunpack.c.l.b16 %v338
        %v419 = vunpack.c.l.b16 %v339
        %v420 = vpack.c.b16 %v389, %v388
        %v421 = vpack.c.b16 %v391, %v390
        %v422 = vpack.c.b16 %v393, %v392
        %v423 = vpack.c.b16 %v395, %v394
        %v424 = vpack.c.b16 %v397, %v396
        %v425 = vpack.c.b16 %v399, %v398
        %v426 = vpack.c.b16 %v401, %v400
        %v427 = vpack.c.b16 %v403, %v402
        %v428 = vpack.c.b16 %v405, %v404
        %v429 = vpack.c.b16 %v407, %v406
        %v430 = vpack.c.b16 %v409, %v408
        %v431 = vpack.c.b16 %v411, %v410
        %v432 = vpack.c.b16 %v413, %v412
        %v433 = vpack.c.b16 %v415, %v414
        %v434 = vpack.c.b16 %v417, %v416
        %v435 = vpack.c.b16 %v419, %v418
        %v468 = vunpack.c.l.b16 %v340
        %v469 = vunpack.c.l.b16 %v341
        %v470 = vunpack.c.l.b16 %v342
        %v471 = vunpack.c.l.b16 %v343
        %v472 = vunpack.c.l.b16 %v344
        %v473 = vunpack.c.l.b16 %v345
        %v474 = vunpack.c.l.b16 %v346
        %v475 = vunpack.c.l.b16 %v347
        %v476 = vunpack.c.l.b16 %v348
        %v477 = vunpack.c.l.b16 %v349
        %v478 = vunpack.c.l.b16 %v350
        %v479 = vunpack.c.l.b16 %v351
        %v480 = vunpack.c.l.b16 %v352
        %v481 = vunpack.c.l.b16 %v353
        %v482 = vunpack.c.l.b16 %v354
        %v483 = vunpack.c.l.b16 %v355
        %v484 = vpack.c.b16 %v469, %v468
        %v485 = vpack.c.b16 %v471, %v470
        %v486 = vpack.c.b16 %v473, %v472
        %v487 = vpack.c.b16 %v475, %v474
        %v488 = vpack.c.b16 %v477, %v476
        %v489 = vpack.c.b16 %v479, %v478
        %v490 = vpack.c.b16 %v481, %v480
        %v491 = vpack.c.b16 %v483, %v482
        %500 = vmatpush.bf16.msra.mxu0 %v491
        %501 = vmatpush.bf16.msra.mxu0 %v490
        %502 = vmatpush.bf16.msra.mxu0 %v489
        %503 = vmatpush.bf16.msra.mxu0 %v488
        %504 = vmatpush.bf16.msra.mxu0 %v487
        %505 = vmatpush.bf16.msra.mxu0 %v486
        %506 = vmatpush.bf16.msra.mxu0 %v485
        %507 = vmatpush.bf16.msra.mxu0 %v484
        %508 = vmatmul.bf16.gmra.mxu0 %v420
        %v509 = vpop.f32.mrf.mxu0
        %v510 = vadd.f32 0.0, %v509
        %v511 = vpop.f32.mrf.mxu0
        %v512 = vadd.f32 0.0, %v511
        %513 = vmatmul.bf16.gmra.mxu0 %v421
        %v514 = vpop.f32.mrf.mxu0
        %v515 = vadd.f32 0.0, %v514
        %v516 = vpop.f32.mrf.mxu0
        %v517 = vadd.f32 0.0, %v516
        %518 = vmatmul.bf16.gmra.mxu0 %v422
        %v519 = vpop.f32.mrf.mxu0
        %v520 = vadd.f32 0.0, %v519
        %v521 = vpop.f32.mrf.mxu0
        %v522 = vadd.f32 0.0, %v521
        %523 = vmatmul.bf16.gmra.mxu0 %v423
        %v524 = vpop.f32.mrf.mxu0
        %v525 = vadd.f32 0.0, %v524
        %v526 = vpop.f32.mrf.mxu0
        %v527 = vadd.f32 0.0, %v526
        %528 = vmatmul.bf16.gmra.mxu0 %v424
        %v529 = vpop.f32.mrf.mxu0
        %v530 = vadd.f32 0.0, %v529
        %v531 = vpop.f32.mrf.mxu0
        %v532 = vadd.f32 0.0, %v531
        %533 = vmatmul.bf16.gmra.mxu0 %v425
        %v534 = vpop.f32.mrf.mxu0
        %v535 = vadd.f32 0.0, %v534
        %v536 = vpop.f32.mrf.mxu0
        %v537 = vadd.f32 0.0, %v536
        %538 = vmatmul.bf16.gmra.mxu0 %v426
        %v539 = vpop.f32.mrf.mxu0
        %v540 = vadd.f32 0.0, %v539
        %v541 = vpop.f32.mrf.mxu0
        %v542 = vadd.f32 0.0, %v541
        %543 = vmatmul.bf16.gmra.mxu0 %v427
        %v544 = vpop.f32.mrf.mxu0
        %v545 = vadd.f32 0.0, %v544
        %v546 = vpop.f32.mrf.mxu0
        %v547 = vadd.f32 0.0, %v546
        %548 = vmatmul.bf16.gmra.mxu0 %v428
        %v549 = vpop.f32.mrf.mxu0
        %v550 = vadd.f32 0.0, %v549
        %v551 = vpop.f32.mrf.mxu0
        %v552 = vadd.f32 0.0, %v551
        %553 = vmatmul.bf16.gmra.mxu0 %v429
        %v554 = vpop.f32.mrf.mxu0
        %v555 = vadd.f32 0.0, %v554
        %v556 = vpop.f32.mrf.mxu0
        %v557 = vadd.f32 0.0, %v556
        %558 = vmatmul.bf16.gmra.mxu0 %v430
        %v559 = vpop.f32.mrf.mxu0
        %v560 = vadd.f32 0.0, %v559
        %v561 = vpop.f32.mrf.mxu0
        %v562 = vadd.f32 0.0, %v561
        %563 = vmatmul.bf16.gmra.mxu0 %v431
        %v564 = vpop.f32.mrf.mxu0
        %v565 = vadd.f32 0.0, %v564
        %v566 = vpop.f32.mrf.mxu0
        %v567 = vadd.f32 0.0, %v566
        %568 = vmatmul.bf16.gmra.mxu0 %v432
        %v569 = vpop.f32.mrf.mxu0
        %v570 = vadd.f32 0.0, %v569
        %v571 = vpop.f32.mrf.mxu0
        %v572 = vadd.f32 0.0, %v571
        %573 = vmatmul.bf16.gmra.mxu0 %v433
        %v574 = vpop.f32.mrf.mxu0
        %v575 = vadd.f32 0.0, %v574
        %v576 = vpop.f32.mrf.mxu0
        %v577 = vadd.f32 0.0, %v576
        %578 = vmatmul.bf16.gmra.mxu0 %v434
        %v579 = vpop.f32.mrf.mxu0
        %v580 = vadd.f32 0.0, %v579
        %v581 = vpop.f32.mrf.mxu0
        %v582 = vadd.f32 0.0, %v581
        %583 = vmatmul.bf16.gmra.mxu0 %v435
        %v584 = vpop.f32.mrf.mxu0
        %v585 = vadd.f32 0.0, %v584
        %v586 = vpop.f32.mrf.mxu0
        %v587 = vadd.f32 0.0, %v586
        %588 = vdwg.mxu0
        %v589 = vpack.c.bf16 %v512, %v510
        %v590 = vpack.c.bf16 %v517, %v515
        %v591 = vpack.c.bf16 %v522, %v520
        %v592 = vpack.c.bf16 %v527, %v525
        %v593 = vpack.c.bf16 %v532, %v530
        %v594 = vpack.c.bf16 %v537, %v535
        %v595 = vpack.c.bf16 %v542, %v540
        %v596 = vpack.c.bf16 %v547, %v545
        %v597 = vpack.c.bf16 %v552, %v550
        %v598 = vpack.c.bf16 %v557, %v555
        %v599 = vpack.c.bf16 %v562, %v560
        %v600 = vpack.c.bf16 %v567, %v565
        %v601 = vpack.c.bf16 %v572, %v570
        %v602 = vpack.c.bf16 %v577, %v575
        %v603 = vpack.c.bf16 %v582, %v580
        %v604 = vpack.c.bf16 %v587, %v585
        %v605 = vld [vmem:[#allocation2] sm:$0xff]
        %v606 = vld [vmem:[#allocation2 + $0x8] sm:$0xff]
        %v607 = vld [vmem:[#allocation2 + $0x10] sm:$0xff]
        %v608 = vld [vmem:[#allocation2 + $0x18] sm:$0xff]
        %v609 = vld [vmem:[#allocation2 + $0x20] sm:$0xff]
        %v610 = vld [vmem:[#allocation2 + $0x28] sm:$0xff]
        %v611 = vld [vmem:[#allocation2 + $0x30] sm:$0xff]
        %v612 = vld [vmem:[#allocation2 + $0x38] sm:$0xff]
        %v613 = vld [vmem:[#allocation2 + $0x40] sm:$0xff]
        %v614 = vld [vmem:[#allocation2 + $0x48] sm:$0xff]
        %v615 = vld [vmem:[#allocation2 + $0x50] sm:$0xff]
        %v616 = vld [vmem:[#allocation2 + $0x58] sm:$0xff]
        %v617 = vld [vmem:[#allocation2 + $0x60] sm:$0xff]
        %v618 = vld [vmem:[#allocation2 + $0x68] sm:$0xff]
        %v619 = vld [vmem:[#allocation2 + $0x70] sm:$0xff]
        %v620 = vld [vmem:[#allocation2 + $0x78] sm:$0xff]
        %v621 = vld [vmem:[#allocation2 + $0x80] sm:$0xff]
        %v622 = vld [vmem:[#allocation2 + $0x88] sm:$0xff]
        %v623 = vld [vmem:[#allocation2 + $0x90] sm:$0xff]
        %v624 = vld [vmem:[#allocation2 + $0x98] sm:$0xff]
        %v625 = vld [vmem:[#allocation2 + $0xa0] sm:$0xff]
        %v626 = vld [vmem:[#allocation2 + $0xa8] sm:$0xff]
        %v627 = vld [vmem:[#allocation2 + $0xb0] sm:$0xff]
        %v628 = vld [vmem:[#allocation2 + $0xb8] sm:$0xff]
        %v629 = vld [vmem:[#allocation2 + $0xc0] sm:$0xff]
        %v630 = vld [vmem:[#allocation2 + $0xc8] sm:$0xff]
        %v631 = vld [vmem:[#allocation2 + $0xd0] sm:$0xff]
        %v632 = vld [vmem:[#allocation2 + $0xd8] sm:$0xff]
        %v633 = vld [vmem:[#allocation2 + $0xe0] sm:$0xff]
        %v634 = vld [vmem:[#allocation2 + $0xe8] sm:$0xff]
        %v635 = vld [vmem:[#allocation2 + $0xf0] sm:$0xff]
        %v636 = vld [vmem:[#allocation2 + $0xf8] sm:$0xff]
        %v637 = vld [vmem:[%s231] sm:$0xff]
        %v638 = vld [vmem:[%s231 + $0x8] sm:$0xff]
        %v639 = vld [vmem:[%s231 + $0x10] sm:$0xff]
        %v640 = vld [vmem:[%s231 + $0x18] sm:$0xff]
        %v641 = vld [vmem:[%s231 + $0x20] sm:$0xff]
        %v642 = vld [vmem:[%s231 + $0x28] sm:$0xff]
        %v643 = vld [vmem:[%s231 + $0x30] sm:$0xff]
        %v644 = vld [vmem:[%s231 + $0x38] sm:$0xff]
        %v645 = vld [vmem:[%s231 + $0x40] sm:$0xff]
        %v646 = vld [vmem:[%s231 + $0x48] sm:$0xff]
        %v647 = vld [vmem:[%s231 + $0x50] sm:$0xff]
        %v648 = vld [vmem:[%s231 + $0x58] sm:$0xff]
        %v649 = vld [vmem:[%s231 + $0x60] sm:$0xff]
        %v650 = vld [vmem:[%s231 + $0x68] sm:$0xff]
        %v651 = vld [vmem:[%s231 + $0x70] sm:$0xff]
        %v652 = vld [vmem:[%s231 + $0x78] sm:$0xff]
        %v653 = vld [vmem:[%s231 + $0x80] sm:$0xff]
        %v654 = vld [vmem:[%s231 + $0x88] sm:$0xff]
        %v655 = vld [vmem:[%s231 + $0x90] sm:$0xff]
        %v656 = vld [vmem:[%s231 + $0x98] sm:$0xff]
        %v657 = vld [vmem:[%s231 + $0xa0] sm:$0xff]
        %v658 = vld [vmem:[%s231 + $0xa8] sm:$0xff]
        %v659 = vld [vmem:[%s231 + $0xb0] sm:$0xff]
        %v660 = vld [vmem:[%s231 + $0xb8] sm:$0xff]
        %v661 = vld [vmem:[%s231 + $0xc0] sm:$0xff]
        %v662 = vld [vmem:[%s231 + $0xc8] sm:$0xff]
        %v663 = vld [vmem:[%s231 + $0xd0] sm:$0xff]
        %v664 = vld [vmem:[%s231 + $0xd8] sm:$0xff]
        %v665 = vld [vmem:[%s231 + $0xe0] sm:$0xff]
        %v666 = vld [vmem:[%s231 + $0xe8] sm:$0xff]
        %v667 = vld [vmem:[%s231 + $0xf0] sm:$0xff]
        %v668 = vld [vmem:[%s231 + $0xf8] sm:$0xff]
        %v701 = vunpack.c.l.b16 %v637
        %v702 = vunpack.c.h.b16 %v637
        %v703 = vunpack.c.l.b16 %v638
        %v704 = vunpack.c.h.b16 %v638
        %v705 = vunpack.c.l.b16 %v639
        %v706 = vunpack.c.h.b16 %v639
        %v707 = vunpack.c.l.b16 %v640
        %v708 = vunpack.c.h.b16 %v640
        %v709 = vunpack.c.l.b16 %v641
        %v710 = vunpack.c.h.b16 %v641
        %v711 = vunpack.c.l.b16 %v642
        %v712 = vunpack.c.h.b16 %v642
        %v713 = vunpack.c.l.b16 %v643
        %v714 = vunpack.c.h.b16 %v643
        %v715 = vunpack.c.l.b16 %v644
        %v716 = vunpack.c.h.b16 %v644
        %v717 = vunpack.c.l.b16 %v645
        %v718 = vunpack.c.h.b16 %v645
        %v719 = vunpack.c.l.b16 %v646
        %v720 = vunpack.c.h.b16 %v646
        %v721 = vunpack.c.l.b16 %v647
        %v722 = vunpack.c.h.b16 %v647
        %v723 = vunpack.c.l.b16 %v648
        %v724 = vunpack.c.h.b16 %v648
        %v725 = vunpack.c.l.b16 %v649
        %v726 = vunpack.c.h.b16 %v649
        %v727 = vunpack.c.l.b16 %v650
        %v728 = vunpack.c.h.b16 %v650
        %v729 = vunpack.c.l.b16 %v651
        %v730 = vunpack.c.h.b16 %v651
        %v731 = vunpack.c.l.b16 %v652
        %v732 = vunpack.c.h.b16 %v652
        %v733 = vunpack.c.l.b16 %v653
        %v734 = vunpack.c.h.b16 %v653
        %v735 = vunpack.c.l.b16 %v654
        %v736 = vunpack.c.h.b16 %v654
        %v737 = vunpack.c.l.b16 %v655
        %v738 = vunpack.c.h.b16 %v655
        %v739 = vunpack.c.l.b16 %v656
        %v740 = vunpack.c.h.b16 %v656
        %v741 = vunpack.c.l.b16 %v657
        %v742 = vunpack.c.h.b16 %v657
        %v743 = vunpack.c.l.b16 %v658
        %v744 = vunpack.c.h.b16 %v658
        %v745 = vunpack.c.l.b16 %v659
        %v746 = vunpack.c.h.b16 %v659
        %v747 = vunpack.c.l.b16 %v660
        %v748 = vunpack.c.h.b16 %v660
        %v749 = vunpack.c.l.b16 %v661
        %v750 = vunpack.c.h.b16 %v661
        %v751 = vunpack.c.l.b16 %v662
        %v752 = vunpack.c.h.b16 %v662
        %v753 = vunpack.c.l.b16 %v663
        %v754 = vunpack.c.h.b16 %v663
        %v755 = vunpack.c.l.b16 %v664
        %v756 = vunpack.c.h.b16 %v664
        %v757 = vunpack.c.l.b16 %v665
        %v758 = vunpack.c.h.b16 %v665
        %v759 = vunpack.c.l.b16 %v666
        %v760 = vunpack.c.h.b16 %v666
        %v761 = vunpack.c.l.b16 %v667
        %v762 = vunpack.c.h.b16 %v667
        %v763 = vunpack.c.l.b16 %v668
        %v764 = vunpack.c.h.b16 %v668
        %v765 = vpack.c.b16 %v703, %v701
        %v766 = vpack.c.b16 %v704, %v702
        %v767 = vpack.c.b16 %v707, %v705
        %v768 = vpack.c.b16 %v708, %v706
        %v769 = vpack.c.b16 %v711, %v709
        %v770 = vpack.c.b16 %v712, %v710
        %v771 = vpack.c.b16 %v715, %v713
        %v772 = vpack.c.b16 %v716, %v714
        %v773 = vpack.c.b16 %v719, %v717
        %v774 = vpack.c.b16 %v720, %v718
        %v775 = vpack.c.b16 %v723, %v721
        %v776 = vpack.c.b16 %v724, %v722
        %v777 = vpack.c.b16 %v727, %v725
        %v778 = vpack.c.b16 %v728, %v726
        %v779 = vpack.c.b16 %v731, %v729
        %v780 = vpack.c.b16 %v732, %v730
        %v781 = vpack.c.b16 %v735, %v733
        %v782 = vpack.c.b16 %v736, %v734
        %v783 = vpack.c.b16 %v739, %v737
        %v784 = vpack.c.b16 %v740, %v738
        %v785 = vpack.c.b16 %v743, %v741
        %v786 = vpack.c.b16 %v744, %v742
        %v787 = vpack.c.b16 %v747, %v745
        %v788 = vpack.c.b16 %v748, %v746
        %v789 = vpack.c.b16 %v751, %v749
        %v790 = vpack.c.b16 %v752, %v750
        %v791 = vpack.c.b16 %v755, %v753
        %v792 = vpack.c.b16 %v756, %v754
        %v793 = vpack.c.b16 %v759, %v757
        %v794 = vpack.c.b16 %v760, %v758
        %v795 = vpack.c.b16 %v763, %v761
        %v796 = vpack.c.b16 %v764, %v762
        %829 = vmatpush.bf16.msra.mxu0 %v596
        %830 = vmatpush.bf16.msra.mxu0 %v595
        %831 = vmatpush.bf16.msra.mxu0 %v594
        %832 = vmatpush.bf16.msra.mxu0 %v593
        %833 = vmatpush.bf16.msra.mxu0 %v592
        %834 = vmatpush.bf16.msra.mxu0 %v591
        %835 = vmatpush.bf16.msra.mxu0 %v590
        %836 = vmatpush.bf16.msra.mxu0 %v589
        %837 = vmatmul.bf16.gmra.mxu0 %v765
        %v838 = vpop.f32.mrf.mxu0
        %v839 = vadd.f32 0.0, %v838
        %v840 = vpop.f32.mrf.mxu0
        %v841 = vadd.f32 0.0, %v840
        %842 = vmatmul.bf16.gmra.mxu0 %v767
        %v843 = vpop.f32.mrf.mxu0
        %v844 = vadd.f32 0.0, %v843
        %v845 = vpop.f32.mrf.mxu0
        %v846 = vadd.f32 0.0, %v845
        %847 = vmatmul.bf16.gmra.mxu0 %v769
        %v848 = vpop.f32.mrf.mxu0
        %v849 = vadd.f32 0.0, %v848
        %v850 = vpop.f32.mrf.mxu0
        %v851 = vadd.f32 0.0, %v850
        %852 = vmatmul.bf16.gmra.mxu0 %v771
        %v853 = vpop.f32.mrf.mxu0
        %v854 = vadd.f32 0.0, %v853
        %v855 = vpop.f32.mrf.mxu0
        %v856 = vadd.f32 0.0, %v855
        %857 = vmatmul.bf16.gmra.mxu0 %v773
        %v858 = vpop.f32.mrf.mxu0
        %v859 = vadd.f32 0.0, %v858
        %v860 = vpop.f32.mrf.mxu0
        %v861 = vadd.f32 0.0, %v860
        %862 = vmatmul.bf16.gmra.mxu0 %v775
        %v863 = vpop.f32.mrf.mxu0
        %v864 = vadd.f32 0.0, %v863
        %v865 = vpop.f32.mrf.mxu0
        %v866 = vadd.f32 0.0, %v865
        %867 = vmatmul.bf16.gmra.mxu0 %v777
        %v868 = vpop.f32.mrf.mxu0
        %v869 = vadd.f32 0.0, %v868
        %v870 = vpop.f32.mrf.mxu0
        %v871 = vadd.f32 0.0, %v870
        %872 = vmatmul.bf16.gmra.mxu0 %v779
        %v873 = vpop.f32.mrf.mxu0
        %v874 = vadd.f32 0.0, %v873
        %v875 = vpop.f32.mrf.mxu0
        %v876 = vadd.f32 0.0, %v875
        %877 = vmatmul.bf16.gmra.mxu0 %v781
        %v878 = vpop.f32.mrf.mxu0
        %v879 = vadd.f32 0.0, %v878
        %v880 = vpop.f32.mrf.mxu0
        %v881 = vadd.f32 0.0, %v880
        %882 = vmatmul.bf16.gmra.mxu0 %v783
        %v883 = vpop.f32.mrf.mxu0
        %v884 = vadd.f32 0.0, %v883
        %v885 = vpop.f32.mrf.mxu0
        %v886 = vadd.f32 0.0, %v885
        %887 = vmatmul.bf16.gmra.mxu0 %v785
        %v888 = vpop.f32.mrf.mxu0
        %v889 = vadd.f32 0.0, %v888
        %v890 = vpop.f32.mrf.mxu0
        %v891 = vadd.f32 0.0, %v890
        %892 = vmatmul.bf16.gmra.mxu0 %v787
        %v893 = vpop.f32.mrf.mxu0
        %v894 = vadd.f32 0.0, %v893
        %v895 = vpop.f32.mrf.mxu0
        %v896 = vadd.f32 0.0, %v895
        %897 = vmatmul.bf16.gmra.mxu0 %v789
        %v898 = vpop.f32.mrf.mxu0
        %v899 = vadd.f32 0.0, %v898
        %v900 = vpop.f32.mrf.mxu0
        %v901 = vadd.f32 0.0, %v900
        %902 = vmatmul.bf16.gmra.mxu0 %v791
        %v903 = vpop.f32.mrf.mxu0
        %v904 = vadd.f32 0.0, %v903
        %v905 = vpop.f32.mrf.mxu0
        %v906 = vadd.f32 0.0, %v905
        %907 = vmatmul.bf16.gmra.mxu0 %v793
        %v908 = vpop.f32.mrf.mxu0
        %v909 = vadd.f32 0.0, %v908
        %v910 = vpop.f32.mrf.mxu0
        %v911 = vadd.f32 0.0, %v910
        %912 = vmatmul.bf16.gmra.mxu0 %v795
        %v913 = vpop.f32.mrf.mxu0
        %v914 = vadd.f32 0.0, %v913
        %v915 = vpop.f32.mrf.mxu0
        %v916 = vadd.f32 0.0, %v915
        %917 = vdwg.mxu0
        %918 = vmatpush.bf16.msra.mxu0 %v604
        %919 = vmatpush.bf16.msra.mxu0 %v603
        %920 = vmatpush.bf16.msra.mxu0 %v602
        %921 = vmatpush.bf16.msra.mxu0 %v601
        %922 = vmatpush.bf16.msra.mxu0 %v600
        %923 = vmatpush.bf16.msra.mxu0 %v599
        %924 = vmatpush.bf16.msra.mxu0 %v598
        %925 = vmatpush.bf16.msra.mxu0 %v597
        %926 = vmatmul.bf16.gmra.mxu0 %v766
        %v927 = vpop.f32.mrf.mxu0
        %v928 = vadd.f32 %v839, %v927
        %v929 = vpop.f32.mrf.mxu0
        %v930 = vadd.f32 %v841, %v929
        %931 = vmatmul.bf16.gmra.mxu0 %v768
        %v932 = vpop.f32.mrf.mxu0
        %v933 = vadd.f32 %v844, %v932
        %v934 = vpop.f32.mrf.mxu0
        %v935 = vadd.f32 %v846, %v934
        %936 = vmatmul.bf16.gmra.mxu0 %v770
        %v937 = vpop.f32.mrf.mxu0
        %v938 = vadd.f32 %v849, %v937
        %v939 = vpop.f32.mrf.mxu0
        %v940 = vadd.f32 %v851, %v939
        %941 = vmatmul.bf16.gmra.mxu0 %v772
        %v942 = vpop.f32.mrf.mxu0
        %v943 = vadd.f32 %v854, %v942
        %v944 = vpop.f32.mrf.mxu0
        %v945 = vadd.f32 %v856, %v944
        %946 = vmatmul.bf16.gmra.mxu0 %v774
        %v947 = vpop.f32.mrf.mxu0
        %v948 = vadd.f32 %v859, %v947
        %v949 = vpop.f32.mrf.mxu0
        %v950 = vadd.f32 %v861, %v949
        %951 = vmatmul.bf16.gmra.mxu0 %v776
        %v952 = vpop.f32.mrf.mxu0
        %v953 = vadd.f32 %v864, %v952
        %v954 = vpop.f32.mrf.mxu0
        %v955 = vadd.f32 %v866, %v954
        %956 = vmatmul.bf16.gmra.mxu0 %v778
        %v957 = vpop.f32.mrf.mxu0
        %v958 = vadd.f32 %v869, %v957
        %v959 = vpop.f32.mrf.mxu0
        %v960 = vadd.f32 %v871, %v959
        %961 = vmatmul.bf16.gmra.mxu0 %v780
        %v962 = vpop.f32.mrf.mxu0
        %v963 = vadd.f32 %v874, %v962
        %v964 = vpop.f32.mrf.mxu0
        %v965 = vadd.f32 %v876, %v964
        %966 = vmatmul.bf16.gmra.mxu0 %v782
        %v967 = vpop.f32.mrf.mxu0
        %v968 = vadd.f32 %v879, %v967
        %v969 = vpop.f32.mrf.mxu0
        %v970 = vadd.f32 %v881, %v969
        %971 = vmatmul.bf16.gmra.mxu0 %v784
        %v972 = vpop.f32.mrf.mxu0
        %v973 = vadd.f32 %v884, %v972
        %v974 = vpop.f32.mrf.mxu0
        %v975 = vadd.f32 %v886, %v974
        %976 = vmatmul.bf16.gmra.mxu0 %v786
        %v977 = vpop.f32.mrf.mxu0
        %v978 = vadd.f32 %v889, %v977
        %v979 = vpop.f32.mrf.mxu0
        %v980 = vadd.f32 %v891, %v979
        %981 = vmatmul.bf16.gmra.mxu0 %v788
        %v982 = vpop.f32.mrf.mxu0
        %v983 = vadd.f32 %v894, %v982
        %v984 = vpop.f32.mrf.mxu0
        %v985 = vadd.f32 %v896, %v984
        %986 = vmatmul.bf16.gmra.mxu0 %v790
        %v987 = vpop.f32.mrf.mxu0
        %v988 = vadd.f32 %v899, %v987
        %v989 = vpop.f32.mrf.mxu0
        %v990 = vadd.f32 %v901, %v989
        %991 = vmatmul.bf16.gmra.mxu0 %v792
        %v992 = vpop.f32.mrf.mxu0
        %v993 = vadd.f32 %v904, %v992
        %v994 = vpop.f32.mrf.mxu0
        %v995 = vadd.f32 %v906, %v994
        %996 = vmatmul.bf16.gmra.mxu0 %v794
        %v997 = vpop.f32.mrf.mxu0
        %v998 = vadd.f32 %v909, %v997
        %v999 = vpop.f32.mrf.mxu0
        %v1000 = vadd.f32 %v911, %v999
        %1001 = vmatmul.bf16.gmra.mxu0 %v796
        %v1002 = vpop.f32.mrf.mxu0
        %v1003 = vadd.f32 %v914, %v1002
        %v1004 = vpop.f32.mrf.mxu0
        %v1005 = vadd.f32 %v916, %v1004
        %1006 = vdwg.mxu0
        %v1007 = vadd.f32 %v605, %v928
        %v1008 = vadd.f32 %v606, %v930
        %v1009 = vadd.f32 %v607, %v933
        %v1010 = vadd.f32 %v608, %v935
        %v1011 = vadd.f32 %v609, %v938
        %v1012 = vadd.f32 %v610, %v940
        %v1013 = vadd.f32 %v611, %v943
        %v1014 = vadd.f32 %v612, %v945
        %v1015 = vadd.f32 %v613, %v948
        %v1016 = vadd.f32 %v614, %v950
        %v1017 = vadd.f32 %v615, %v953
        %v1018 = vadd.f32 %v616, %v955
        %v1019 = vadd.f32 %v617, %v958
        %v1020 = vadd.f32 %v618, %v960
        %v1021 = vadd.f32 %v619, %v963
        %v1022 = vadd.f32 %v620, %v965
        %v1023 = vadd.f32 %v621, %v968
        %v1024 = vadd.f32 %v622, %v970
        %v1025 = vadd.f32 %v623, %v973
        %v1026 = vadd.f32 %v624, %v975
        %v1027 = vadd.f32 %v625, %v978
        %v1028 = vadd.f32 %v626, %v980
        %v1029 = vadd.f32 %v627, %v983
        %v1030 = vadd.f32 %v628, %v985
        %v1031 = vadd.f32 %v629, %v988
        %v1032 = vadd.f32 %v630, %v990
        %v1033 = vadd.f32 %v631, %v993
        %v1034 = vadd.f32 %v632, %v995
        %v1035 = vadd.f32 %v633, %v998
        %v1036 = vadd.f32 %v634, %v1000
        %v1037 = vadd.f32 %v635, %v1003
        %v1038 = vadd.f32 %v636, %v1005
        %1039 = vst [vmem:[#allocation2] sm:$0xff] %v1007
        %1040 = vst [vmem:[#allocation2 + $0x8] sm:$0xff] %v1008
        %1041 = vst [vmem:[#allocation2 + $0x10] sm:$0xff] %v1009
        %1042 = vst [vmem:[#allocation2 + $0x18] sm:$0xff] %v1010
        %1043 = vst [vmem:[#allocation2 + $0x20] sm:$0xff] %v1011
        %1044 = vst [vmem:[#allocation2 + $0x28] sm:$0xff] %v1012
        %1045 = vst [vmem:[#allocation2 + $0x30] sm:$0xff] %v1013
        %1046 = vst [vmem:[#allocation2 + $0x38] sm:$0xff] %v1014
        %1047 = vst [vmem:[#allocation2 + $0x40] sm:$0xff] %v1015
        %1048 = vst [vmem:[#allocation2 + $0x48] sm:$0xff] %v1016
        %1049 = vst [vmem:[#allocation2 + $0x50] sm:$0xff] %v1017
        %1050 = vst [vmem:[#allocation2 + $0x58] sm:$0xff] %v1018
        %1051 = vst [vmem:[#allocation2 + $0x60] sm:$0xff] %v1019
        %1052 = vst [vmem:[#allocation2 + $0x68] sm:$0xff] %v1020
        %1053 = vst [vmem:[#allocation2 + $0x70] sm:$0xff] %v1021
        %1054 = vst [vmem:[#allocation2 + $0x78] sm:$0xff] %v1022
        %1055 = vst [vmem:[#allocation2 + $0x80] sm:$0xff] %v1023
        %1056 = vst [vmem:[#allocation2 + $0x88] sm:$0xff] %v1024
        %1057 = vst [vmem:[#allocation2 + $0x90] sm:$0xff] %v1025
        %1058 = vst [vmem:[#allocation2 + $0x98] sm:$0xff] %v1026
        %1059 = vst [vmem:[#allocation2 + $0xa0] sm:$0xff] %v1027
        %1060 = vst [vmem:[#allocation2 + $0xa8] sm:$0xff] %v1028
        %1061 = vst [vmem:[#allocation2 + $0xb0] sm:$0xff] %v1029
        %1062 = vst [vmem:[#allocation2 + $0xb8] sm:$0xff] %v1030
        %1063 = vst [vmem:[#allocation2 + $0xc0] sm:$0xff] %v1031
        %1064 = vst [vmem:[#allocation2 + $0xc8] sm:$0xff] %v1032
        %1065 = vst [vmem:[#allocation2 + $0xd0] sm:$0xff] %v1033
        %1066 = vst [vmem:[#allocation2 + $0xd8] sm:$0xff] %v1034
        %1067 = vst [vmem:[#allocation2 + $0xe0] sm:$0xff] %v1035
        %1068 = vst [vmem:[#allocation2 + $0xe8] sm:$0xff] %v1036
        %1069 = vst [vmem:[#allocation2 + $0xf0] sm:$0xff] %v1037
        %1070 = vst [vmem:[#allocation2 + $0xf8] sm:$0xff] %v1038
        %p1071 = scmp.eq.s32.totalorder %s24, 1
        // Predicated region
        $region49: #{supcg_forward.5} parent=39 // pred_check
          %p1072 = pneg %p1071
        $region50: #{supcg_forward.5} parent=39 // pred_check_branch
          %1074 = sbr.rel (%p1072) target = $region52
        $region51: #{supcg_forward.5} parent=39 // pred_region
          %v1075 = vld [vmem:[#allocation2] sm:$0xff]
          %v1076 = vld [vmem:[#allocation2 + $0x8] sm:$0xff]
          %v1077 = vld [vmem:[#allocation2 + $0x10] sm:$0xff]
          %v1078 = vld [vmem:[#allocation2 + $0x18] sm:$0xff]
          %v1079 = vld [vmem:[#allocation2 + $0x20] sm:$0xff]
          %v1080 = vld [vmem:[#allocation2 + $0x28] sm:$0xff]
          %v1081 = vld [vmem:[#allocation2 + $0x30] sm:$0xff]
          %v1082 = vld [vmem:[#allocation2 + $0x38] sm:$0xff]
          %v1083 = vld [vmem:[#allocation2 + $0x40] sm:$0xff]
          %v1084 = vld [vmem:[#allocation2 + $0x48] sm:$0xff]
          %v1085 = vld [vmem:[#allocation2 + $0x50] sm:$0xff]
          %v1086 = vld [vmem:[#allocation2 + $0x58] sm:$0xff]
          %v1087 = vld [vmem:[#allocation2 + $0x60] sm:$0xff]
          %v1088 = vld [vmem:[#allocation2 + $0x68] sm:$0xff]
          %v1089 = vld [vmem:[#allocation2 + $0x70] sm:$0xff]
          %v1090 = vld [vmem:[#allocation2 + $0x78] sm:$0xff]
          %v1091 = vld [vmem:[#allocation2 + $0x80] sm:$0xff]
          %v1092 = vld [vmem:[#allocation2 + $0x88] sm:$0xff]
          %v1093 = vld [vmem:[#allocation2 + $0x90] sm:$0xff]
          %v1094 = vld [vmem:[#allocation2 + $0x98] sm:$0xff]
          %v1095 = vld [vmem:[#allocation2 + $0xa0] sm:$0xff]
          %v1096 = vld [vmem:[#allocation2 + $0xa8] sm:$0xff]
          %v1097 = vld [vmem:[#allocation2 + $0xb0] sm:$0xff]
          %v1098 = vld [vmem:[#allocation2 + $0xb8] sm:$0xff]
          %v1099 = vld [vmem:[#allocation2 + $0xc0] sm:$0xff]
          %v1100 = vld [vmem:[#allocation2 + $0xc8] sm:$0xff]
          %v1101 = vld [vmem:[#allocation2 + $0xd0] sm:$0xff]
          %v1102 = vld [vmem:[#allocation2 + $0xd8] sm:$0xff]
          %v1103 = vld [vmem:[#allocation2 + $0xe0] sm:$0xff]
          %v1104 = vld [vmem:[#allocation2 + $0xe8] sm:$0xff]
          %v1105 = vld [vmem:[#allocation2 + $0xf0] sm:$0xff]
          %v1106 = vld [vmem:[#allocation2 + $0xf8] sm:$0xff]
          %v1107 = vld [vmem:[%s3] sm:$0x1]
          %v1109 = vperm.slane %v1107, 0
          %v1111 = vadd.f32 %v1075, %v1109
          %v1112 = vadd.f32 %v1076, %v1109
          %v1113 = vadd.f32 %v1077, %v1109
          %v1114 = vadd.f32 %v1078, %v1109
          %v1115 = vadd.f32 %v1079, %v1109
          %v1116 = vadd.f32 %v1080, %v1109
          %v1117 = vadd.f32 %v1081, %v1109
          %v1118 = vadd.f32 %v1082, %v1109
          %v1119 = vadd.f32 %v1083, %v1109
          %v1120 = vadd.f32 %v1084, %v1109
          %v1121 = vadd.f32 %v1085, %v1109
          %v1122 = vadd.f32 %v1086, %v1109
          %v1123 = vadd.f32 %v1087, %v1109
          %v1124 = vadd.f32 %v1088, %v1109
          %v1125 = vadd.f32 %v1089, %v1109
          %v1126 = vadd.f32 %v1090, %v1109
          %v1127 = vadd.f32 %v1091, %v1109
          %v1128 = vadd.f32 %v1092, %v1109
          %v1129 = vadd.f32 %v1093, %v1109
          %v1130 = vadd.f32 %v1094, %v1109
          %v1131 = vadd.f32 %v1095, %v1109
          %v1132 = vadd.f32 %v1096, %v1109
          %v1133 = vadd.f32 %v1097, %v1109
          %v1134 = vadd.f32 %v1098, %v1109
          %v1135 = vadd.f32 %v1099, %v1109
          %v1136 = vadd.f32 %v1100, %v1109
          %v1137 = vadd.f32 %v1101, %v1109
          %v1138 = vadd.f32 %v1102, %v1109
          %v1139 = vadd.f32 %v1103, %v1109
          %v1140 = vadd.f32 %v1104, %v1109
          %v1141 = vadd.f32 %v1105, %v1109
          %v1142 = vadd.f32 %v1106, %v1109
          %v1143 = vmax.f32 %v1111, 0.0
          %v1144 = vmax.f32 %v1112, 0.0
          %v1145 = vmax.f32 %v1113, 0.0
          %v1146 = vmax.f32 %v1114, 0.0
          %v1147 = vmax.f32 %v1115, 0.0
          %v1148 = vmax.f32 %v1116, 0.0
          %v1149 = vmax.f32 %v1117, 0.0
          %v1150 = vmax.f32 %v1118, 0.0
          %v1151 = vmax.f32 %v1119, 0.0
          %v1152 = vmax.f32 %v1120, 0.0
          %v1153 = vmax.f32 %v1121, 0.0
          %v1154 = vmax.f32 %v1122, 0.0
          %v1155 = vmax.f32 %v1123, 0.0
          %v1156 = vmax.f32 %v1124, 0.0
          %v1157 = vmax.f32 %v1125, 0.0
          %v1158 = vmax.f32 %v1126, 0.0
          %v1159 = vmax.f32 %v1127, 0.0
          %v1160 = vmax.f32 %v1128, 0.0
          %v1161 = vmax.f32 %v1129, 0.0
          %v1162 = vmax.f32 %v1130, 0.0
          %v1163 = vmax.f32 %v1131, 0.0
          %v1164 = vmax.f32 %v1132, 0.0
          %v1165 = vmax.f32 %v1133, 0.0
          %v1166 = vmax.f32 %v1134, 0.0
          %v1167 = vmax.f32 %v1135, 0.0
          %v1168 = vmax.f32 %v1136, 0.0
          %v1169 = vmax.f32 %v1137, 0.0
          %v1170 = vmax.f32 %v1138, 0.0
          %v1171 = vmax.f32 %v1139, 0.0
          %v1172 = vmax.f32 %v1140, 0.0
          %v1173 = vmax.f32 %v1141, 0.0
          %v1174 = vmax.f32 %v1142, 0.0
          %v1175 = vpack.c.bf16 %v1144, %v1143
          %v1176 = vpack.c.bf16 %v1146, %v1145
          %v1177 = vpack.c.bf16 %v1148, %v1147
          %v1178 = vpack.c.bf16 %v1150, %v1149
          %v1179 = vpack.c.bf16 %v1152, %v1151
          %v1180 = vpack.c.bf16 %v1154, %v1153
          %v1181 = vpack.c.bf16 %v1156, %v1155
          %v1182 = vpack.c.bf16 %v1158, %v1157
          %v1183 = vpack.c.bf16 %v1160, %v1159
          %v1184 = vpack.c.bf16 %v1162, %v1161
          %v1185 = vpack.c.bf16 %v1164, %v1163
          %v1186 = vpack.c.bf16 %v1166, %v1165
          %v1187 = vpack.c.bf16 %v1168, %v1167
          %v1188 = vpack.c.bf16 %v1170, %v1169
          %v1189 = vpack.c.bf16 %v1172, %v1171
          %v1190 = vpack.c.bf16 %v1174, %v1173
          %v1191 = vld [vmem:[%s4] sm:$0xf]
          %v1192 = vld [vmem:[%s4 + $0x4] sm:$0xf]
          %v1193 = vld [vmem:[%s4 + $0x8] sm:$0xf]
          %v1194 = vld [vmem:[%s4 + $0xc] sm:$0xf]
          %v1195 = vld [vmem:[%s4 + $0x10] sm:$0xf]
          %v1196 = vld [vmem:[%s4 + $0x14] sm:$0xf]
          %v1197 = vld [vmem:[%s4 + $0x18] sm:$0xf]
          %v1198 = vld [vmem:[%s4 + $0x1c] sm:$0xf]
          %v1199 = vld [vmem:[%s4 + $0x20] sm:$0xf]
          %v1200 = vld [vmem:[%s4 + $0x24] sm:$0xf]
          %v1201 = vld [vmem:[%s4 + $0x28] sm:$0xf]
          %v1202 = vld [vmem:[%s4 + $0x2c] sm:$0xf]
          %v1203 = vld [vmem:[%s4 + $0x30] sm:$0xf]
          %v1204 = vld [vmem:[%s4 + $0x34] sm:$0xf]
          %v1205 = vld [vmem:[%s4 + $0x38] sm:$0xf]
          %v1206 = vld [vmem:[%s4 + $0x3c] sm:$0xf]
          %v1223 = vunpack.c.l.b16 %v1191
          %v1224 = vunpack.c.l.b16 %v1192
          %v1225 = vunpack.c.l.b16 %v1193
          %v1226 = vunpack.c.l.b16 %v1194
          %v1227 = vunpack.c.l.b16 %v1195
          %v1228 = vunpack.c.l.b16 %v1196
          %v1229 = vunpack.c.l.b16 %v1197
          %v1230 = vunpack.c.l.b16 %v1198
          %v1231 = vunpack.c.l.b16 %v1199
          %v1232 = vunpack.c.l.b16 %v1200
          %v1233 = vunpack.c.l.b16 %v1201
          %v1234 = vunpack.c.l.b16 %v1202
          %v1235 = vunpack.c.l.b16 %v1203
          %v1236 = vunpack.c.l.b16 %v1204
          %v1237 = vunpack.c.l.b16 %v1205
          %v1238 = vunpack.c.l.b16 %v1206
          %v1239 = vpack.c.b16 %v1224, %v1223
          %v1240 = vpack.c.b16 %v1226, %v1225
          %v1241 = vpack.c.b16 %v1228, %v1227
          %v1242 = vpack.c.b16 %v1230, %v1229
          %v1243 = vpack.c.b16 %v1232, %v1231
          %v1244 = vpack.c.b16 %v1234, %v1233
          %v1245 = vpack.c.b16 %v1236, %v1235
          %v1246 = vpack.c.b16 %v1238, %v1237
          %1255 = vmatpush.bf16.msra.mxu0 %v1246
          %1256 = vmatpush.bf16.msra.mxu0 %v1245
          %1257 = vmatpush.bf16.msra.mxu0 %v1244
          %1258 = vmatpush.bf16.msra.mxu0 %v1243
          %1259 = vmatpush.bf16.msra.mxu0 %v1242
          %1260 = vmatpush.bf16.msra.mxu0 %v1241
          %1261 = vmatpush.bf16.msra.mxu0 %v1240
          %1262 = vmatpush.bf16.msra.mxu0 %v1239
          %1263 = vmatmul.bf16.gmra.mxu0 %v1175
          %v1264 = vpop.f32.mrf.mxu0
          %v1265 = vadd.f32 0.0, %v1264
          %v1266 = vpop.f32.mrf.mxu0
          %v1267 = vadd.f32 0.0, %v1266
          %1268 = vmatmul.bf16.gmra.mxu0 %v1176
          %v1269 = vpop.f32.mrf.mxu0
          %v1270 = vadd.f32 0.0, %v1269
          %v1271 = vpop.f32.mrf.mxu0
          %v1272 = vadd.f32 0.0, %v1271
          %1273 = vmatmul.bf16.gmra.mxu0 %v1177
          %v1274 = vpop.f32.mrf.mxu0
          %v1275 = vadd.f32 0.0, %v1274
          %v1276 = vpop.f32.mrf.mxu0
          %v1277 = vadd.f32 0.0, %v1276
          %1278 = vmatmul.bf16.gmra.mxu0 %v1178
          %v1279 = vpop.f32.mrf.mxu0
          %v1280 = vadd.f32 0.0, %v1279
          %v1281 = vpop.f32.mrf.mxu0
          %v1282 = vadd.f32 0.0, %v1281
          %1283 = vmatmul.bf16.gmra.mxu0 %v1179
          %v1284 = vpop.f32.mrf.mxu0
          %v1285 = vadd.f32 0.0, %v1284
          %v1286 = vpop.f32.mrf.mxu0
          %v1287 = vadd.f32 0.0, %v1286
          %1288 = vmatmul.bf16.gmra.mxu0 %v1180
          %v1289 = vpop.f32.mrf.mxu0
          %v1290 = vadd.f32 0.0, %v1289
          %v1291 = vpop.f32.mrf.mxu0
          %v1292 = vadd.f32 0.0, %v1291
          %1293 = vmatmul.bf16.gmra.mxu0 %v1181
          %v1294 = vpop.f32.mrf.mxu0
          %v1295 = vadd.f32 0.0, %v1294
          %v1296 = vpop.f32.mrf.mxu0
          %v1297 = vadd.f32 0.0, %v1296
          %1298 = vmatmul.bf16.gmra.mxu0 %v1182
          %v1299 = vpop.f32.mrf.mxu0
          %v1300 = vadd.f32 0.0, %v1299
          %v1301 = vpop.f32.mrf.mxu0
          %v1302 = vadd.f32 0.0, %v1301
          %1303 = vmatmul.bf16.gmra.mxu0 %v1183
          %v1304 = vpop.f32.mrf.mxu0
          %v1305 = vadd.f32 0.0, %v1304
          %v1306 = vpop.f32.mrf.mxu0
          %v1307 = vadd.f32 0.0, %v1306
          %1308 = vmatmul.bf16.gmra.mxu0 %v1184
          %v1309 = vpop.f32.mrf.mxu0
          %v1310 = vadd.f32 0.0, %v1309
          %v1311 = vpop.f32.mrf.mxu0
          %v1312 = vadd.f32 0.0, %v1311
          %1313 = vmatmul.bf16.gmra.mxu0 %v1185
          %v1314 = vpop.f32.mrf.mxu0
          %v1315 = vadd.f32 0.0, %v1314
          %v1316 = vpop.f32.mrf.mxu0
          %v1317 = vadd.f32 0.0, %v1316
          %1318 = vmatmul.bf16.gmra.mxu0 %v1186
          %v1319 = vpop.f32.mrf.mxu0
          %v1320 = vadd.f32 0.0, %v1319
          %v1321 = vpop.f32.mrf.mxu0
          %v1322 = vadd.f32 0.0, %v1321
          %1323 = vmatmul.bf16.gmra.mxu0 %v1187
          %v1324 = vpop.f32.mrf.mxu0
          %v1325 = vadd.f32 0.0, %v1324
          %v1326 = vpop.f32.mrf.mxu0
          %v1327 = vadd.f32 0.0, %v1326
          %1328 = vmatmul.bf16.gmra.mxu0 %v1188
          %v1329 = vpop.f32.mrf.mxu0
          %v1330 = vadd.f32 0.0, %v1329
          %v1331 = vpop.f32.mrf.mxu0
          %v1332 = vadd.f32 0.0, %v1331
          %1333 = vmatmul.bf16.gmra.mxu0 %v1189
          %v1334 = vpop.f32.mrf.mxu0
          %v1335 = vadd.f32 0.0, %v1334
          %v1336 = vpop.f32.mrf.mxu0
          %v1337 = vadd.f32 0.0, %v1336
          %1338 = vmatmul.bf16.gmra.mxu0 %v1190
          %v1339 = vpop.f32.mrf.mxu0
          %v1340 = vadd.f32 0.0, %v1339
          %v1341 = vpop.f32.mrf.mxu0
          %v1342 = vadd.f32 0.0, %v1341
          %1343 = vdwg.mxu0
          %v1344 = vmax.f32 %v1265, 0.0
          %v1345 = vmax.f32 %v1267, 0.0
          %v1346 = vmax.f32 %v1270, 0.0
          %v1347 = vmax.f32 %v1272, 0.0
          %v1348 = vmax.f32 %v1275, 0.0
          %v1349 = vmax.f32 %v1277, 0.0
          %v1350 = vmax.f32 %v1280, 0.0
          %v1351 = vmax.f32 %v1282, 0.0
          %v1352 = vmax.f32 %v1285, 0.0
          %v1353 = vmax.f32 %v1287, 0.0
          %v1354 = vmax.f32 %v1290, 0.0
          %v1355 = vmax.f32 %v1292, 0.0
          %v1356 = vmax.f32 %v1295, 0.0
          %v1357 = vmax.f32 %v1297, 0.0
          %v1358 = vmax.f32 %v1300, 0.0
          %v1359 = vmax.f32 %v1302, 0.0
          %v1360 = vmax.f32 %v1305, 0.0
          %v1361 = vmax.f32 %v1307, 0.0
          %v1362 = vmax.f32 %v1310, 0.0
          %v1363 = vmax.f32 %v1312, 0.0
          %v1364 = vmax.f32 %v1315, 0.0
          %v1365 = vmax.f32 %v1317, 0.0
          %v1366 = vmax.f32 %v1320, 0.0
          %v1367 = vmax.f32 %v1322, 0.0
          %v1368 = vmax.f32 %v1325, 0.0
          %v1369 = vmax.f32 %v1327, 0.0
          %v1370 = vmax.f32 %v1330, 0.0
          %v1371 = vmax.f32 %v1332, 0.0
          %v1372 = vmax.f32 %v1335, 0.0
          %v1373 = vmax.f32 %v1337, 0.0
          %v1374 = vmax.f32 %v1340, 0.0
          %v1375 = vmax.f32 %v1342, 0.0
          %v1376 = vmul.f32 %v1344, %v1344
          %v1377 = vmul.f32 %v1345, %v1345
          %v1378 = vmul.f32 %v1346, %v1346
          %v1379 = vmul.f32 %v1347, %v1347
          %v1380 = vmul.f32 %v1348, %v1348
          %v1381 = vmul.f32 %v1349, %v1349
          %v1382 = vmul.f32 %v1350, %v1350
          %v1383 = vmul.f32 %v1351, %v1351
          %v1384 = vmul.f32 %v1352, %v1352
          %v1385 = vmul.f32 %v1353, %v1353
          %v1386 = vmul.f32 %v1354, %v1354
          %v1387 = vmul.f32 %v1355, %v1355
          %v1388 = vmul.f32 %v1356, %v1356
          %v1389 = vmul.f32 %v1357, %v1357
          %v1390 = vmul.f32 %v1358, %v1358
          %v1391 = vmul.f32 %v1359, %v1359
          %v1392 = vmul.f32 %v1360, %v1360
          %v1393 = vmul.f32 %v1361, %v1361
          %v1394 = vmul.f32 %v1362, %v1362
          %v1395 = vmul.f32 %v1363, %v1363
          %v1396 = vmul.f32 %v1364, %v1364
          %v1397 = vmul.f32 %v1365, %v1365
          %v1398 = vmul.f32 %v1366, %v1366
          %v1399 = vmul.f32 %v1367, %v1367
          %v1400 = vmul.f32 %v1368, %v1368
          %v1401 = vmul.f32 %v1369, %v1369
          %v1402 = vmul.f32 %v1370, %v1370
          %v1403 = vmul.f32 %v1371, %v1371
          %v1404 = vmul.f32 %v1372, %v1372
          %v1405 = vmul.f32 %v1373, %v1373
          %v1406 = vmul.f32 %v1374, %v1374
          %v1407 = vmul.f32 %v1375, %v1375
          %1408 = vadd.xlane.f32.xlu0 %v1376
          %v1409 = vpop.xlane.xlu0 %1408
          %1410 = vadd.xlane.f32.xlu0 %v1377
          %v1411 = vpop.xlane.xlu0 %1410
          %1412 = vadd.xlane.f32.xlu0 %v1378
          %v1413 = vpop.xlane.xlu0 %1412
          %1414 = vadd.xlane.f32.xlu0 %v1379
          %v1415 = vpop.xlane.xlu0 %1414
          %1416 = vadd.xlane.f32.xlu0 %v1380
          %v1417 = vpop.xlane.xlu0 %1416
          %1418 = vadd.xlane.f32.xlu0 %v1381
          %v1419 = vpop.xlane.xlu0 %1418
          %1420 = vadd.xlane.f32.xlu0 %v1382
          %v1421 = vpop.xlane.xlu0 %1420
          %1422 = vadd.xlane.f32.xlu0 %v1383
          %v1423 = vpop.xlane.xlu0 %1422
          %1424 = vadd.xlane.f32.xlu0 %v1384
          %v1425 = vpop.xlane.xlu0 %1424
          %1426 = vadd.xlane.f32.xlu0 %v1385
          %v1427 = vpop.xlane.xlu0 %1426
          %1428 = vadd.xlane.f32.xlu0 %v1386
          %v1429 = vpop.xlane.xlu0 %1428
          %1430 = vadd.xlane.f32.xlu0 %v1387
          %v1431 = vpop.xlane.xlu0 %1430
          %1432 = vadd.xlane.f32.xlu0 %v1388
          %v1433 = vpop.xlane.xlu0 %1432
          %1434 = vadd.xlane.f32.xlu0 %v1389
          %v1435 = vpop.xlane.xlu0 %1434
          %1436 = vadd.xlane.f32.xlu0 %v1390
          %v1437 = vpop.xlane.xlu0 %1436
          %1438 = vadd.xlane.f32.xlu0 %v1391
          %v1439 = vpop.xlane.xlu0 %1438
          %1440 = vadd.xlane.f32.xlu0 %v1392
          %v1441 = vpop.xlane.xlu0 %1440
          %1442 = vadd.xlane.f32.xlu0 %v1393
          %v1443 = vpop.xlane.xlu0 %1442
          %1444 = vadd.xlane.f32.xlu0 %v1394
          %v1445 = vpop.xlane.xlu0 %1444
          %1446 = vadd.xlane.f32.xlu0 %v1395
          %v1447 = vpop.xlane.xlu0 %1446
          %1448 = vadd.xlane.f32.xlu0 %v1396
          %v1449 = vpop.xlane.xlu0 %1448
          %1450 = vadd.xlane.f32.xlu0 %v1397
          %v1451 = vpop.xlane.xlu0 %1450
          %1452 = vadd.xlane.f32.xlu0 %v1398
          %v1453 = vpop.xlane.xlu0 %1452
          %1454 = vadd.xlane.f32.xlu0 %v1399
          %v1455 = vpop.xlane.xlu0 %1454
          %1456 = vadd.xlane.f32.xlu0 %v1400
          %v1457 = vpop.xlane.xlu0 %1456
          %1458 = vadd.xlane.f32.xlu0 %v1401
          %v1459 = vpop.xlane.xlu0 %1458
          %1460 = vadd.xlane.f32.xlu0 %v1402
          %v1461 = vpop.xlane.xlu0 %1460
          %1462 = vadd.xlane.f32.xlu0 %v1403
          %v1463 = vpop.xlane.xlu0 %1462
          %1464 = vadd.xlane.f32.xlu0 %v1404
          %v1465 = vpop.xlane.xlu0 %1464
          %1466 = vadd.xlane.f32.xlu0 %v1405
          %v1467 = vpop.xlane.xlu0 %1466
          %1468 = vadd.xlane.f32.xlu0 %v1406
          %v1469 = vpop.xlane.xlu0 %1468
          %1470 = vadd.xlane.f32.xlu0 %v1407
          %v1471 = vpop.xlane.xlu0 %1470
          %v1472 = vmax.f32 %v1409, 1e-24
          %v1473 = vmax.f32 %v1411, 1e-24
          %v1474 = vmax.f32 %v1413, 1e-24
          %v1475 = vmax.f32 %v1415, 1e-24
          %v1476 = vmax.f32 %v1417, 1e-24
          %v1477 = vmax.f32 %v1419, 1e-24
          %v1478 = vmax.f32 %v1421, 1e-24
          %v1479 = vmax.f32 %v1423, 1e-24
          %v1480 = vmax.f32 %v1425, 1e-24
          %v1481 = vmax.f32 %v1427, 1e-24
          %v1482 = vmax.f32 %v1429, 1e-24
          %v1483 = vmax.f32 %v1431, 1e-24
          %v1484 = vmax.f32 %v1433, 1e-24
          %v1485 = vmax.f32 %v1435, 1e-24
          %v1486 = vmax.f32 %v1437, 1e-24
          %v1487 = vmax.f32 %v1439, 1e-24
          %v1488 = vmax.f32 %v1441, 1e-24
          %v1489 = vmax.f32 %v1443, 1e-24
          %v1490 = vmax.f32 %v1445, 1e-24
          %v1491 = vmax.f32 %v1447, 1e-24
          %v1492 = vmax.f32 %v1449, 1e-24
          %v1493 = vmax.f32 %v1451, 1e-24
          %v1494 = vmax.f32 %v1453, 1e-24
          %v1495 = vmax.f32 %v1455, 1e-24
          %v1496 = vmax.f32 %v1457, 1e-24
          %v1497 = vmax.f32 %v1459, 1e-24
          %v1498 = vmax.f32 %v1461, 1e-24
          %v1499 = vmax.f32 %v1463, 1e-24
          %v1500 = vmax.f32 %v1465, 1e-24
          %v1501 = vmax.f32 %v1467, 1e-24
          %v1502 = vmax.f32 %v1469, 1e-24
          %v1503 = vmax.f32 %v1471, 1e-24
          %v1504 = vrsqrt.pop %v1472
          %v1505 = vmul.f32 %v1504, %v1472
          %v1506 = vmul.f32 %v1505, %v1504
          %v1507 = vmul.f32 0.5, %v1506
          %v1508 = vsub.f32 1.5, %v1507
          %v1509 = vmul.f32 %v1504, %v1508
          %vm1510 = vweird.f32 %v1472
          %vm1511 = vweird.f32 %v1504
          %vm1512 = vmor %vm1510, %vm1511
          %v1513 = vsel %vm1512, %v1504, %v1509
          %v1514 = vrsqrt.pop %v1473
          %v1515 = vmul.f32 %v1514, %v1473
          %v1516 = vmul.f32 %v1515, %v1514
          %v1517 = vmul.f32 0.5, %v1516
          %v1518 = vsub.f32 1.5, %v1517
          %v1519 = vmul.f32 %v1514, %v1518
          %vm1520 = vweird.f32 %v1473
          %vm1521 = vweird.f32 %v1514
          %vm1522 = vmor %vm1520, %vm1521
          %v1523 = vsel %vm1522, %v1514, %v1519
          %v1524 = vrsqrt.pop %v1474
          %v1525 = vmul.f32 %v1524, %v1474
          %v1526 = vmul.f32 %v1525, %v1524
          %v1527 = vmul.f32 0.5, %v1526
          %v1528 = vsub.f32 1.5, %v1527
          %v1529 = vmul.f32 %v1524, %v1528
          %vm1530 = vweird.f32 %v1474
          %vm1531 = vweird.f32 %v1524
          %vm1532 = vmor %vm1530, %vm1531
          %v1533 = vsel %vm1532, %v1524, %v1529
          %v1534 = vrsqrt.pop %v1475
          %v1535 = vmul.f32 %v1534, %v1475
          %v1536 = vmul.f32 %v1535, %v1534
          %v1537 = vmul.f32 0.5, %v1536
          %v1538 = vsub.f32 1.5, %v1537
          %v1539 = vmul.f32 %v1534, %v1538
          %vm1540 = vweird.f32 %v1475
          %vm1541 = vweird.f32 %v1534
          %vm1542 = vmor %vm1540, %vm1541
          %v1543 = vsel %vm1542, %v1534, %v1539
          %v1544 = vrsqrt.pop %v1476
          %v1545 = vmul.f32 %v1544, %v1476
          %v1546 = vmul.f32 %v1545, %v1544
          %v1547 = vmul.f32 0.5, %v1546
          %v1548 = vsub.f32 1.5, %v1547
          %v1549 = vmul.f32 %v1544, %v1548
          %vm1550 = vweird.f32 %v1476
          %vm1551 = vweird.f32 %v1544
          %vm1552 = vmor %vm1550, %vm1551
          %v1553 = vsel %vm1552, %v1544, %v1549
          %v1554 = vrsqrt.pop %v1477
          %v1555 = vmul.f32 %v1554, %v1477
          %v1556 = vmul.f32 %v1555, %v1554
          %v1557 = vmul.f32 0.5, %v1556
          %v1558 = vsub.f32 1.5, %v1557
          %v1559 = vmul.f32 %v1554, %v1558
          %vm1560 = vweird.f32 %v1477
          %vm1561 = vweird.f32 %v1554
          %vm1562 = vmor %vm1560, %vm1561
          %v1563 = vsel %vm1562, %v1554, %v1559
          %v1564 = vrsqrt.pop %v1478
          %v1565 = vmul.f32 %v1564, %v1478
          %v1566 = vmul.f32 %v1565, %v1564
          %v1567 = vmul.f32 0.5, %v1566
          %v1568 = vsub.f32 1.5, %v1567
          %v1569 = vmul.f32 %v1564, %v1568
          %vm1570 = vweird.f32 %v1478
          %vm1571 = vweird.f32 %v1564
          %vm1572 = vmor %vm1570, %vm1571
          %v1573 = vsel %vm1572, %v1564, %v1569
          %v1574 = vrsqrt.pop %v1479
          %v1575 = vmul.f32 %v1574, %v1479
          %v1576 = vmul.f32 %v1575, %v1574
          %v1577 = vmul.f32 0.5, %v1576
          %v1578 = vsub.f32 1.5, %v1577
          %v1579 = vmul.f32 %v1574, %v1578
          %vm1580 = vweird.f32 %v1479
          %vm1581 = vweird.f32 %v1574
          %vm1582 = vmor %vm1580, %vm1581
          %v1583 = vsel %vm1582, %v1574, %v1579
          %v1584 = vrsqrt.pop %v1480
          %v1585 = vmul.f32 %v1584, %v1480
          %v1586 = vmul.f32 %v1585, %v1584
          %v1587 = vmul.f32 0.5, %v1586
          %v1588 = vsub.f32 1.5, %v1587
          %v1589 = vmul.f32 %v1584, %v1588
          %vm1590 = vweird.f32 %v1480
          %vm1591 = vweird.f32 %v1584
          %vm1592 = vmor %vm1590, %vm1591
          %v1593 = vsel %vm1592, %v1584, %v1589
          %v1594 = vrsqrt.pop %v1481
          %v1595 = vmul.f32 %v1594, %v1481
          %v1596 = vmul.f32 %v1595, %v1594
          %v1597 = vmul.f32 0.5, %v1596
          %v1598 = vsub.f32 1.5, %v1597
          %v1599 = vmul.f32 %v1594, %v1598
          %vm1600 = vweird.f32 %v1481
          %vm1601 = vweird.f32 %v1594
          %vm1602 = vmor %vm1600, %vm1601
          %v1603 = vsel %vm1602, %v1594, %v1599
          %v1604 = vrsqrt.pop %v1482
          %v1605 = vmul.f32 %v1604, %v1482
          %v1606 = vmul.f32 %v1605, %v1604
          %v1607 = vmul.f32 0.5, %v1606
          %v1608 = vsub.f32 1.5, %v1607
          %v1609 = vmul.f32 %v1604, %v1608
          %vm1610 = vweird.f32 %v1482
          %vm1611 = vweird.f32 %v1604
          %vm1612 = vmor %vm1610, %vm1611
          %v1613 = vsel %vm1612, %v1604, %v1609
          %v1614 = vrsqrt.pop %v1483
          %v1615 = vmul.f32 %v1614, %v1483
          %v1616 = vmul.f32 %v1615, %v1614
          %v1617 = vmul.f32 0.5, %v1616
          %v1618 = vsub.f32 1.5, %v1617
          %v1619 = vmul.f32 %v1614, %v1618
          %vm1620 = vweird.f32 %v1483
          %vm1621 = vweird.f32 %v1614
          %vm1622 = vmor %vm1620, %vm1621
          %v1623 = vsel %vm1622, %v1614, %v1619
          %v1624 = vrsqrt.pop %v1484
          %v1625 = vmul.f32 %v1624, %v1484
          %v1626 = vmul.f32 %v1625, %v1624
          %v1627 = vmul.f32 0.5, %v1626
          %v1628 = vsub.f32 1.5, %v1627
          %v1629 = vmul.f32 %v1624, %v1628
          %vm1630 = vweird.f32 %v1484
          %vm1631 = vweird.f32 %v1624
          %vm1632 = vmor %vm1630, %vm1631
          %v1633 = vsel %vm1632, %v1624, %v1629
          %v1634 = vrsqrt.pop %v1485
          %v1635 = vmul.f32 %v1634, %v1485
          %v1636 = vmul.f32 %v1635, %v1634
          %v1637 = vmul.f32 0.5, %v1636
          %v1638 = vsub.f32 1.5, %v1637
          %v1639 = vmul.f32 %v1634, %v1638
          %vm1640 = vweird.f32 %v1485
          %vm1641 = vweird.f32 %v1634
          %vm1642 = vmor %vm1640, %vm1641
          %v1643 = vsel %vm1642, %v1634, %v1639
          %v1644 = vrsqrt.pop %v1486
          %v1645 = vmul.f32 %v1644, %v1486
          %v1646 = vmul.f32 %v1645, %v1644
          %v1647 = vmul.f32 0.5, %v1646
          %v1648 = vsub.f32 1.5, %v1647
          %v1649 = vmul.f32 %v1644, %v1648
          %vm1650 = vweird.f32 %v1486
          %vm1651 = vweird.f32 %v1644
          %vm1652 = vmor %vm1650, %vm1651
          %v1653 = vsel %vm1652, %v1644, %v1649
          %v1654 = vrsqrt.pop %v1487
          %v1655 = vmul.f32 %v1654, %v1487
          %v1656 = vmul.f32 %v1655, %v1654
          %v1657 = vmul.f32 0.5, %v1656
          %v1658 = vsub.f32 1.5, %v1657
          %v1659 = vmul.f32 %v1654, %v1658
          %vm1660 = vweird.f32 %v1487
          %vm1661 = vweird.f32 %v1654
          %vm1662 = vmor %vm1660, %vm1661
          %v1663 = vsel %vm1662, %v1654, %v1659
          %v1664 = vrsqrt.pop %v1488
          %v1665 = vmul.f32 %v1664, %v1488
          %v1666 = vmul.f32 %v1665, %v1664
          %v1667 = vmul.f32 0.5, %v1666
          %v1668 = vsub.f32 1.5, %v1667
          %v1669 = vmul.f32 %v1664, %v1668
          %vm1670 = vweird.f32 %v1488
          %vm1671 = vweird.f32 %v1664
          %vm1672 = vmor %vm1670, %vm1671
          %v1673 = vsel %vm1672, %v1664, %v1669
          %v1674 = vrsqrt.pop %v1489
          %v1675 = vmul.f32 %v1674, %v1489
          %v1676 = vmul.f32 %v1675, %v1674
          %v1677 = vmul.f32 0.5, %v1676
          %v1678 = vsub.f32 1.5, %v1677
          %v1679 = vmul.f32 %v1674, %v1678
          %vm1680 = vweird.f32 %v1489
          %vm1681 = vweird.f32 %v1674
          %vm1682 = vmor %vm1680, %vm1681
          %v1683 = vsel %vm1682, %v1674, %v1679
          %v1684 = vrsqrt.pop %v1490
          %v1685 = vmul.f32 %v1684, %v1490
          %v1686 = vmul.f32 %v1685, %v1684
          %v1687 = vmul.f32 0.5, %v1686
          %v1688 = vsub.f32 1.5, %v1687
          %v1689 = vmul.f32 %v1684, %v1688
          %vm1690 = vweird.f32 %v1490
          %vm1691 = vweird.f32 %v1684
          %vm1692 = vmor %vm1690, %vm1691
          %v1693 = vsel %vm1692, %v1684, %v1689
          %v1694 = vrsqrt.pop %v1491
          %v1695 = vmul.f32 %v1694, %v1491
          %v1696 = vmul.f32 %v1695, %v1694
          %v1697 = vmul.f32 0.5, %v1696
          %v1698 = vsub.f32 1.5, %v1697
          %v1699 = vmul.f32 %v1694, %v1698
          %vm1700 = vweird.f32 %v1491
          %vm1701 = vweird.f32 %v1694
          %vm1702 = vmor %vm1700, %vm1701
          %v1703 = vsel %vm1702, %v1694, %v1699
          %v1704 = vrsqrt.pop %v1492
          %v1705 = vmul.f32 %v1704, %v1492
          %v1706 = vmul.f32 %v1705, %v1704
          %v1707 = vmul.f32 0.5, %v1706
          %v1708 = vsub.f32 1.5, %v1707
          %v1709 = vmul.f32 %v1704, %v1708
          %vm1710 = vweird.f32 %v1492
          %vm1711 = vweird.f32 %v1704
          %vm1712 = vmor %vm1710, %vm1711
          %v1713 = vsel %vm1712, %v1704, %v1709
          %v1714 = vrsqrt.pop %v1493
          %v1715 = vmul.f32 %v1714, %v1493
          %v1716 = vmul.f32 %v1715, %v1714
          %v1717 = vmul.f32 0.5, %v1716
          %v1718 = vsub.f32 1.5, %v1717
          %v1719 = vmul.f32 %v1714, %v1718
          %vm1720 = vweird.f32 %v1493
          %vm1721 = vweird.f32 %v1714
          %vm1722 = vmor %vm1720, %vm1721
          %v1723 = vsel %vm1722, %v1714, %v1719
          %v1724 = vrsqrt.pop %v1494
          %v1725 = vmul.f32 %v1724, %v1494
          %v1726 = vmul.f32 %v1725, %v1724
          %v1727 = vmul.f32 0.5, %v1726
          %v1728 = vsub.f32 1.5, %v1727
          %v1729 = vmul.f32 %v1724, %v1728
          %vm1730 = vweird.f32 %v1494
          %vm1731 = vweird.f32 %v1724
          %vm1732 = vmor %vm1730, %vm1731
          %v1733 = vsel %vm1732, %v1724, %v1729
          %v1734 = vrsqrt.pop %v1495
          %v1735 = vmul.f32 %v1734, %v1495
          %v1736 = vmul.f32 %v1735, %v1734
          %v1737 = vmul.f32 0.5, %v1736
          %v1738 = vsub.f32 1.5, %v1737
          %v1739 = vmul.f32 %v1734, %v1738
          %vm1740 = vweird.f32 %v1495
          %vm1741 = vweird.f32 %v1734
          %vm1742 = vmor %vm1740, %vm1741
          %v1743 = vsel %vm1742, %v1734, %v1739
          %v1744 = vrsqrt.pop %v1496
          %v1745 = vmul.f32 %v1744, %v1496
          %v1746 = vmul.f32 %v1745, %v1744
          %v1747 = vmul.f32 0.5, %v1746
          %v1748 = vsub.f32 1.5, %v1747
          %v1749 = vmul.f32 %v1744, %v1748
          %vm1750 = vweird.f32 %v1496
          %vm1751 = vweird.f32 %v1744
          %vm1752 = vmor %vm1750, %vm1751
          %v1753 = vsel %vm1752, %v1744, %v1749
          %v1754 = vrsqrt.pop %v1497
          %v1755 = vmul.f32 %v1754, %v1497
          %v1756 = vmul.f32 %v1755, %v1754
          %v1757 = vmul.f32 0.5, %v1756
          %v1758 = vsub.f32 1.5, %v1757
          %v1759 = vmul.f32 %v1754, %v1758
          %vm1760 = vweird.f32 %v1497
          %vm1761 = vweird.f32 %v1754
          %vm1762 = vmor %vm1760, %vm1761
          %v1763 = vsel %vm1762, %v1754, %v1759
          %v1764 = vrsqrt.pop %v1498
          %v1765 = vmul.f32 %v1764, %v1498
          %v1766 = vmul.f32 %v1765, %v1764
          %v1767 = vmul.f32 0.5, %v1766
          %v1768 = vsub.f32 1.5, %v1767
          %v1769 = vmul.f32 %v1764, %v1768
          %vm1770 = vweird.f32 %v1498
          %vm1771 = vweird.f32 %v1764
          %vm1772 = vmor %vm1770, %vm1771
          %v1773 = vsel %vm1772, %v1764, %v1769
          %v1774 = vrsqrt.pop %v1499
          %v1775 = vmul.f32 %v1774, %v1499
          %v1776 = vmul.f32 %v1775, %v1774
          %v1777 = vmul.f32 0.5, %v1776
          %v1778 = vsub.f32 1.5, %v1777
          %v1779 = vmul.f32 %v1774, %v1778
          %vm1780 = vweird.f32 %v1499
          %vm1781 = vweird.f32 %v1774
          %vm1782 = vmor %vm1780, %vm1781
          %v1783 = vsel %vm1782, %v1774, %v1779
          %v1784 = vrsqrt.pop %v1500
          %v1785 = vmul.f32 %v1784, %v1500
          %v1786 = vmul.f32 %v1785, %v1784
          %v1787 = vmul.f32 0.5, %v1786
          %v1788 = vsub.f32 1.5, %v1787
          %v1789 = vmul.f32 %v1784, %v1788
          %vm1790 = vweird.f32 %v1500
          %vm1791 = vweird.f32 %v1784
          %vm1792 = vmor %vm1790, %vm1791
          %v1793 = vsel %vm1792, %v1784, %v1789
          %v1794 = vrsqrt.pop %v1501
          %v1795 = vmul.f32 %v1794, %v1501
          %v1796 = vmul.f32 %v1795, %v1794
          %v1797 = vmul.f32 0.5, %v1796
          %v1798 = vsub.f32 1.5, %v1797
          %v1799 = vmul.f32 %v1794, %v1798
          %vm1800 = vweird.f32 %v1501
          %vm1801 = vweird.f32 %v1794
          %vm1802 = vmor %vm1800, %vm1801
          %v1803 = vsel %vm1802, %v1794, %v1799
          %v1804 = vrsqrt.pop %v1502
          %v1805 = vmul.f32 %v1804, %v1502
          %v1806 = vmul.f32 %v1805, %v1804
          %v1807 = vmul.f32 0.5, %v1806
          %v1808 = vsub.f32 1.5, %v1807
          %v1809 = vmul.f32 %v1804, %v1808
          %vm1810 = vweird.f32 %v1502
          %vm1811 = vweird.f32 %v1804
          %vm1812 = vmor %vm1810, %vm1811
          %v1813 = vsel %vm1812, %v1804, %v1809
          %v1814 = vrsqrt.pop %v1503
          %v1815 = vmul.f32 %v1814, %v1503
          %v1816 = vmul.f32 %v1815, %v1814
          %v1817 = vmul.f32 0.5, %v1816
          %v1818 = vsub.f32 1.5, %v1817
          %v1819 = vmul.f32 %v1814, %v1818
          %vm1820 = vweird.f32 %v1503
          %vm1821 = vweird.f32 %v1814
          %vm1822 = vmor %vm1820, %vm1821
          %v1823 = vsel %vm1822, %v1814, %v1819
          %v1824 = vmul.f32 %v1344, %v1513
          %v1825 = vmul.f32 %v1345, %v1523
          %v1826 = vmul.f32 %v1346, %v1533
          %v1827 = vmul.f32 %v1347, %v1543
          %v1828 = vmul.f32 %v1348, %v1553
          %v1829 = vmul.f32 %v1349, %v1563
          %v1830 = vmul.f32 %v1350, %v1573
          %v1831 = vmul.f32 %v1351, %v1583
          %v1832 = vmul.f32 %v1352, %v1593
          %v1833 = vmul.f32 %v1353, %v1603
          %v1834 = vmul.f32 %v1354, %v1613
          %v1835 = vmul.f32 %v1355, %v1623
          %v1836 = vmul.f32 %v1356, %v1633
          %v1837 = vmul.f32 %v1357, %v1643
          %v1838 = vmul.f32 %v1358, %v1653
          %v1839 = vmul.f32 %v1359, %v1663
          %v1840 = vmul.f32 %v1360, %v1673
          %v1841 = vmul.f32 %v1361, %v1683
          %v1842 = vmul.f32 %v1362, %v1693
          %v1843 = vmul.f32 %v1363, %v1703
          %v1844 = vmul.f32 %v1364, %v1713
          %v1845 = vmul.f32 %v1365, %v1723
          %v1846 = vmul.f32 %v1366, %v1733
          %v1847 = vmul.f32 %v1367, %v1743
          %v1848 = vmul.f32 %v1368, %v1753
          %v1849 = vmul.f32 %v1369, %v1763
          %v1850 = vmul.f32 %v1370, %v1773
          %v1851 = vmul.f32 %v1371, %v1783
          %v1852 = vmul.f32 %v1372, %v1793
          %v1853 = vmul.f32 %v1373, %v1803
          %v1854 = vmul.f32 %v1374, %v1813
          %v1855 = vmul.f32 %v1375, %v1823
          %1856 = vst [vmem:[%s265] sm:$0xff] %v1824
          %1857 = vst [vmem:[%s265 + $0x8] sm:$0xff] %v1825
          %1858 = vst [vmem:[%s265 + $0x10] sm:$0xff] %v1826
          %1859 = vst [vmem:[%s265 + $0x18] sm:$0xff] %v1827
          %1860 = vst [vmem:[%s265 + $0x20] sm:$0xff] %v1828
          %1861 = vst [vmem:[%s265 + $0x28] sm:$0xff] %v1829
          %1862 = vst [vmem:[%s265 + $0x30] sm:$0xff] %v1830
          %1863 = vst [vmem:[%s265 + $0x38] sm:$0xff] %v1831
          %1864 = vst [vmem:[%s265 + $0x40] sm:$0xff] %v1832
          %1865 = vst [vmem:[%s265 + $0x48] sm:$0xff] %v1833
          %1866 = vst [vmem:[%s265 + $0x50] sm:$0xff] %v1834
          %1867 = vst [vmem:[%s265 + $0x58] sm:$0xff] %v1835
          %1868 = vst [vmem:[%s265 + $0x60] sm:$0xff] %v1836
          %1869 = vst [vmem:[%s265 + $0x68] sm:$0xff] %v1837
          %1870 = vst [vmem:[%s265 + $0x70] sm:$0xff] %v1838
          %1871 = vst [vmem:[%s265 + $0x78] sm:$0xff] %v1839
          %1872 = vst [vmem:[%s265 + $0x80] sm:$0xff] %v1840
          %1873 = vst [vmem:[%s265 + $0x88] sm:$0xff] %v1841
          %1874 = vst [vmem:[%s265 + $0x90] sm:$0xff] %v1842
          %1875 = vst [vmem:[%s265 + $0x98] sm:$0xff] %v1843
          %1876 = vst [vmem:[%s265 + $0xa0] sm:$0xff] %v1844
          %1877 = vst [vmem:[%s265 + $0xa8] sm:$0xff] %v1845
          %1878 = vst [vmem:[%s265 + $0xb0] sm:$0xff] %v1846
          %1879 = vst [vmem:[%s265 + $0xb8] sm:$0xff] %v1847
          %1880 = vst [vmem:[%s265 + $0xc0] sm:$0xff] %v1848
          %1881 = vst [vmem:[%s265 + $0xc8] sm:$0xff] %v1849
          %1882 = vst [vmem:[%s265 + $0xd0] sm:$0xff] %v1850
          %1883 = vst [vmem:[%s265 + $0xd8] sm:$0xff] %v1851
          %1884 = vst [vmem:[%s265 + $0xe0] sm:$0xff] %v1852
          %1885 = vst [vmem:[%s265 + $0xe8] sm:$0xff] %v1853
          %1886 = vst [vmem:[%s265 + $0xf0] sm:$0xff] %v1854
          %1887 = vst [vmem:[%s265 + $0xf8] sm:$0xff] %v1855
        $region52: #{supcg_forward.5} parent=39 // pred_fallthru
          _
        %s1888 = smul.u32 32, %s23
        %p1889 = scmp.lt.s32.totalorder %s1888, 63
        %s1890 = scalar_select %p1889, %s1888, 63
        %s1891 = smul.addr %s1890, 8
        %s1892 = scalar_lea.vmem %s5, %s1891
        // Predicated region
        $region53: #{supcg_forward.5} parent=39 // pred_check
          %p1893 = pneg %p161
        $region54: #{supcg_forward.5} parent=39 // pred_check_branch
          %1895 = sbr.rel (%p1893) target = $region56
        $region55: #{supcg_forward.5} parent=39 // pred_region
          %s1896 = smul.u32 32, %s23
        $region56: #{supcg_forward.5} parent=39 // pred_fallthru
          _
      $region40: #{supcg_forward.5} parent=5 // pred_fallthru
        _
      %p1897 = scmp.le.s32.totalorder 2, %s14
      // Predicated region
      $region57: #{supcg_forward.5} parent=5 // pred_check
        %p1898 = pneg %p1897
      $region58: #{supcg_forward.5} parent=5 // pred_check_branch
        %1900 = sbr.rel (%p1898) target = $region60
      $region59: #{supcg_forward.5} parent=5 // pred_region
        %s1901 = ssub.s32 %s14, 2
        // Predicated region
        $region61: #{supcg_forward.5} parent=59 // pred_check
          %p1902 = pneg %p167
        $region62: #{supcg_forward.5} parent=59 // pred_check_branch
          %1904 = sbr.rel (%p1902) target = $region64
        $region63: #{supcg_forward.5} parent=59 // pred_region
          %s1905 = smul.u32 32, %s25
          %p1906 = scmp.lt.s32.totalorder %s1905, 63
          %s1907 = scalar_select %p1906, %s1905, 63
          %s1908 = smul.addr %s1907, 8
          %s1909 = scalar_lea.vmem %s5, %s1908
        $region64: #{supcg_forward.5} parent=59 // pred_fallthru
          _
      $region60: #{supcg_forward.5} parent=5 // pred_fallthru
        _
    $region6: #{supcg_forward.5} parent=1 // loop_footer
      %s18 = sadd.s32 1, %s14
    $region7: #{supcg_forward.5} parent=1 // loop_footer_branch
      %13 = sbr.rel target = $region3
    $region8: #{supcg_forward.5} parent=1 // loop_exit
      _
    %1910 = vsyncpa [#allocation4], 1
    %s1911 = scalar_lea.sflag [#allocation4], 1
    %1912 = vsyncpa %s1911, 1

</llo_original>
